<compile_context>
chip_gen: v6e
topology: v6e:2x2x1
jax: 0.10.0
libtpu: 0.0.40
codegen_flags: <defaults>
</compile_context>

<pallas_src>
import numpy as np
import jax
import jax.numpy as jnp
from jax.experimental import pallas as pl
from jax.experimental.pallas import tpu as pltpu

# ---------------- static configuration (mirrors TransformerDownsampleBlock1D) --------
B       = 2                     # batch
N       = 16                    # sequence length (divisible by downsample_ratio)
C_IN    = 32                    # in_channels
D       = 128                   # embed_dim
DEPTH   = 2                     # depth
HEADS   = 2                     # heads
DH      = D // HEADS            # dim_head = 64
FF_MULT = 2
INNER   = D * FF_MULT           # 256
R       = 2                     # downsample_ratio
K_WIN   = 8                     # local_attn_window_size (NATTEN-1D kernel size)
ROT_P   = max(DH // 2, 32)      # RotaryEmbedding(dim = max(dim_head//2, 32))
ROT_DIM = 2 * (ROT_P // 2)      # rotated width per head (= 32)
HALF    = ROT_DIM // 2          # 16
PASS_H  = (DH - ROT_DIM) // 2   # 16  (half of the per-head pass-through band)
LN_EPS  = 1e-5                  # F.layer_norm default eps

M  = B * N                      # 32  tokens across the folded batch
MO = M // R                     # 16  output rows after downsample

assert N % R == 0 and D % 2 == 0 and (DH - ROT_DIM) % 2 == 0


# ------------------------------- in-kernel helper ------------------------------------
def _layer_norm(x, gamma):
    mu = jnp.mean(x, axis=-1, keepdims=True)
    xc = x - mu
    var = jnp.mean(xc * xc, axis=-1, keepdims=True)
    return xc * jax.lax.rsqrt(var + LN_EPS) * gamma


# ----------------------------------- fused kernel ------------------------------------
def fused_block_kernel(x_ref, w_in_ref, cos_q_ref, sin_q_ref, vmask_ref, bias_ref,
                       sel_ref, g_attn_ref, w_qkv_ref, w_out_ref,
                       g_ff_ref, w_ff1_ref, b_ff1_ref, w_ff2_ref,
                       w_down_ref, o_ref):
    bf16 = jnp.bfloat16

    # block-level project_in: (M, C_IN) @ (C_IN, D), bf16 operands, f32 accumulation
    h = jnp.dot(x_ref[...].astype(bf16), w_in_ref[...],
                preferred_element_type=jnp.float32)                       # (M, D) f32

    # per-head masked RoPE tables for q; full tables for k are their sum (masks
    # partition the 128 lanes).  All tables already carry 1/0 in pass-through lanes
    # and the rotate_half sign in the sin table.
    cos_q = [cos_q_ref[i] for i in range(HEADS)]
    sin_q = [sin_q_ref[i] for i in range(HEADS)]
    cos_k = cos_q[0]
    sin_k = sin_q[0]
    for i in range(1, HEADS):
        cos_k = cos_k + cos_q[i]
        sin_k = sin_k + sin_q[i]

    bias = bias_ref[...]          # (M, M) additive mask: 0 allowed / -1e30 masked

    for layer in range(DEPTH):
        # ---------------- local (neighborhood) attention block ----------------
        resid = h
        hn = _layer_norm(h, g_attn_ref[layer])
        qkv = jnp.dot(hn.astype(bf16), w_qkv_ref[layer],
                      preferred_element_type=jnp.float32)                 # (M, 3D) f32

        # 128-lane-aligned slices -> no relayout
        q = qkv[:, :D]
        k = qkv[:, D:2 * D]
        v = qkv[:, 2 * D:]

        # full-width rotate_half: the host-side interleaved per-head column
        # permutation makes it a single lane roll by D//2 for BOTH heads at once.
        rq = pltpu.roll(q, shift=D // 2, axis=1)
        rk = pltpu.roll(k, shift=D // 2, axis=1)
        kr = k * cos_k + rk * sin_k                                       # roped k

        pv = None
        for i in range(HEADS):
            # head-i roped AND head-masked q (other head's lanes are zeroed, so the
            # full-width contraction below yields exactly the per-head score).
            qm = q * cos_q[i] + rq * sin_q[i]
            s = jax.lax.dot_general(qm, kr, (((1,), (1,)), ((), ())),
                                    preferred_element_type=jnp.float32) + bias  # (M, M)
            mx = jnp.max(s, axis=-1, keepdims=True)
            p = jnp.exp(s - mx)
            p = p * pl.reciprocal(jnp.sum(p, axis=-1, keepdims=True), approx=True)
            o_h = jnp.dot(p, v, preferred_element_type=jnp.float32) * vmask_ref[i]
            pv = o_h if pv is None else pv + o_h                          # (M, D)

        h = jnp.dot(pv.astype(bf16), w_out_ref[layer],
                    preferred_element_type=jnp.float32) + resid

        # ---------------- SiLU-gated GLU feed-forward block ----------------
        resid = h
        hn = _layer_norm(h, g_ff_ref[layer])
        y = jnp.dot(hn.astype(bf16), w_ff1_ref[layer],
                    preferred_element_type=jnp.float32) + b_ff1_ref[layer]
        a, gate = y[:, :INNER], y[:, INNER:]
        hidden = a * (gate * jax.nn.sigmoid(gate))
        h = jnp.dot(hidden.astype(bf16), w_ff2_ref[layer],
                    preferred_element_type=jnp.float32) + resid

    # ------ fused 'b (n r) c -> b n (c r)' + project_down, all in vregs ------
    out = None
    for r in range(R):
        h_r = jnp.dot(sel_ref[r], h, preferred_element_type=jnp.float32)  # (MO, D)
        part = jnp.dot(h_r.astype(bf16), w_down_ref[r],
                       preferred_element_type=jnp.float32)
        out = part if out is None else out + part
    o_ref[...] = out


# ----------------------------------- wrapper ------------------------------------------
def transformer_downsample_block_1d(x, kp):
    cost = pl.CostEstimate(flops=25_000_000, transcendentals=21_000,
                           bytes_accessed=825_000)
    out = pl.pallas_call(
        fused_block_kernel,
        out_shape=jax.ShapeDtypeStruct((MO, D), jnp.float32),
        cost_estimate=cost,
    )(x.reshape(M, C_IN), kp["w_in_t"], kp["cos_q"], kp["sin_q"], kp["vmask"],
      kp["bias"], kp["sel"], kp["g_attn"], kp["w_qkv_t"], kp["w_out_t"],
      kp["g_ff"], kp["w_ff1_t"], kp["b_ff1"], kp["w_ff2_t"], kp["w_down_t"])
    return out.reshape(B, N // R, D)


# ------------------------- deterministic parameter construction -----------------------
def make_params(key):
    ks = jax.random.split(key, 7)

    def nrm(k, shape, fan_in):
        return jax.random.normal(k, shape, dtype=jnp.float32) * (fan_in ** -0.5)

    return {  # torch (O, K) layouts, exactly the module's parameter shapes
        "w_in":   nrm(ks[0], (D, C_IN), C_IN),                 # project_in (no bias)
        "g_attn": jnp.ones((DEPTH, 1, D), jnp.float32),        # LayerNorm gamma (beta=0)
        "g_ff":   jnp.ones((DEPTH, 1, D), jnp.float32),
        "w_qkv":  nrm(ks[1], (DEPTH, 3 * D, D), D),            # Attention.to_qkv (no bias)
        "w_out":  nrm(ks[2], (DEPTH, D, D), D),                # Attention.to_out (no bias)
        "w_ff1":  nrm(ks[3], (DEPTH, 2 * INNER, D), D),        # GLU proj weight
        "b_ff1":  nrm(ks[4], (DEPTH, 1, 2 * INNER), D),        # GLU proj bias
        "w_ff2":  nrm(ks[5], (DEPTH, D, INNER), INNER),        # FF out proj (no bias)
        "w_down": nrm(ks[6], (D, D * R), D * R),               # project_down (no bias)
    }


def rotary_base(seq_len):
    inv_freq = 1.0 / (10000.0 ** (np.arange(0, ROT_P, 2, dtype=np.float32) / ROT_P))
    t = np.arange(seq_len, dtype=np.float32)
    freqs = np.einsum("i,j->ij", t, inv_freq)                  # (N, HALF)
    return np.cos(freqs).astype(np.float32), np.sin(freqs).astype(np.float32)


def prepare_kernel_params(p):
    """Host-side re-layout (+ bf16 cast of matmul weights) for the fused kernel."""
    pn = {k: np.asarray(v, np.float32) for k, v in p.items()}
    bf16 = jnp.bfloat16

    # interleaved per-head q/k column permutation so that rotate_half for BOTH heads
    # is a single full-width roll by D//2:
    #   new layout = [ h0:(x1|pass_a) | h1:(x1|pass_a) || h0:(x2|pass_b) | h1:(x2|pass_b) ]
    first  = np.concatenate([np.arange(0, HALF), np.arange(ROT_DIM, ROT_DIM + PASS_H)])
    second = np.concatenate([np.arange(HALF, ROT_DIM), np.arange(ROT_DIM + PASS_H, DH)])
    perm = np.concatenate([h * DH + first for h in range(HEADS)] +
                          [h * DH + second for h in range(HEADS)])          # (D,)

    w_qkv_t = np.empty((DEPTH, D, 3 * D), np.float32)
    for layer in range(DEPTH):
        w = pn["w_qkv"][layer]                                 # (3D, D) torch layout
        wq, wk, wv = w[:D][perm], w[D:2 * D][perm], w[2 * D:]  # shared q/k permutation
        w_qkv_t[layer] = np.concatenate([wq, wk, wv], axis=0).T   # (D, 3D) = (K, O)

    # RoPE tables in the interleaved layout; 1/0 in pass-through lanes, sign in sin.
    cos16, sin16 = rotary_base(N)                              # (N, HALF)
    ones = np.ones((N, PASS_H), np.float32)
    zeros = np.zeros((N, PASS_H), np.float32)
    blk_cos  = np.concatenate([cos16, ones], axis=1)           # (N, DH//2)
    blk_nsin = np.concatenate([-sin16, zeros], axis=1)
    blk_psin = np.concatenate([sin16, zeros], axis=1)
    cos_full = np.concatenate([blk_cos] * HEADS + [blk_cos] * HEADS, axis=1)   # (N, D)
    sin_full = np.concatenate([blk_nsin] * HEADS + [blk_psin] * HEADS, axis=1)

    head_mask = np.zeros((HEADS, D), np.float32)               # q/k interleaved layout
    for h in range(HEADS):
        head_mask[h, h * (DH // 2):(h + 1) * (DH // 2)] = 1.0
        head_mask[h, D // 2 + h * (DH // 2): D // 2 + (h + 1) * (DH // 2)] = 1.0

    n_of_row = np.arange(M) % N                                # folded-batch row -> n
    cos_q = np.stack([cos_full[n_of_row] * head_mask[h] for h in range(HEADS)])
    sin_q = np.stack([sin_full[n_of_row] * head_mask[h] for h in range(HEADS)])

    vmask = np.zeros((HEADS, 1, D), np.float32)                # v / to_out natural layout
    for h in range(HEADS):
        vmask[h, 0, h * DH:(h + 1) * DH] = 1.0

    # additive NATTEN neighborhood + batch block-diagonal mask bias (M, M)
    n_idx = np.arange(N)
    start = np.clip(n_idx - (K_WIN - 1) // 2, 0, N - K_WIN)
    nbhd = (n_idx[None, :] >= start[:, None]) & (n_idx[None, :] < start[:, None] + K_WIN)
    b_of = np.arange(M) // N
    allowed = (b_of[:, None] == b_of[None, :]) & nbhd[n_of_row[:, None], n_of_row[None, :]]
    bias = np.where(allowed, 0.0, -1e30).astype(np.float32)

    # downsample rearrange folded into matmuls: out = sum_r (sel_r @ h) @ w_down_r
    sel = np.zeros((R, MO, M), np.float32)
    for r in range(R):
        sel[r, np.arange(MO), np.arange(MO) * R + r] = 1.0
    w_down_t = np.stack([pn["w_down"][:, r::R].T for r in range(R)], axis=0)  # (R, D, D)

    return {
        "w_in_t":   jnp.asarray(pn["w_in"].T, bf16),
        "cos_q":    jnp.asarray(cos_q),
        "sin_q":    jnp.asarray(sin_q),
        "vmask":    jnp.asarray(vmask),
        "bias":     jnp.asarray(bias),
        "sel":      jnp.asarray(sel),
        "g_attn":   jnp.asarray(pn["g_attn"]),
        "g_ff":     jnp.asarray(pn["g_ff"]),
        "w_qkv_t":  jnp.asarray(w_qkv_t, bf16),
        "w_out_t":  jnp.asarray(np.transpose(pn["w_out"], (0, 2, 1)), bf16),
        "w_ff1_t":  jnp.asarray(np.transpose(pn["w_ff1"], (0, 2, 1)), bf16),
        "b_ff1":    jnp.asarray(pn["b_ff1"]),
        "w_ff2_t":  jnp.asarray(np.transpose(pn["w_ff2"], (0, 2, 1)), bf16),
        "w_down_t": jnp.asarray(w_down_t, bf16),
    }


# ------------------------------- numpy reference --------------------------------------
def reference_forward(x, p):
    cos16, sin16 = rotary_base(N)
    cos = np.concatenate([cos16, cos16], axis=-1).astype(np.float64)   # (N, ROT_DIM)
    sin = np.concatenate([sin16, sin16], axis=-1).astype(np.float64)

    def ln(v, g):
        mu = v.mean(-1, keepdims=True)
        var = ((v - mu) ** 2).mean(-1, keepdims=True)
        return (v - mu) / np.sqrt(var + LN_EPS) * g

    def rope(t):
        tr, tp = t[..., :ROT_DIM], t[..., ROT_DIM:]
        x1, x2 = tr[..., :HALF], tr[..., HALF:]
        rot = np.concatenate([-x2, x1], -1)
        return np.concatenate([tr * cos + rot * sin, tp], -1)

    i = np.arange(N)[:, None]
    j = np.arange(N)[None, :]
    start = np.clip(i - (K_WIN - 1) // 2, 0, N - K_WIN)
    nbhd = (j >= start) & (j < start + K_WIN)

    h = x @ p["w_in"].T
    for l in range(DEPTH):
        resid = h
        hn = ln(h, p["g_attn"][l])
        qkv = hn @ p["w_qkv"][l].T
        q, k, v = qkv[..., :D], qkv[..., D:2 * D], qkv[..., 2 * D:]
        outs = []
        for hd in range(HEADS):
            sl = slice(hd * DH, (hd + 1) * DH)
            qh, kh, vh = rope(q[..., sl]), rope(k[..., sl]), v[..., sl]
            s = np.einsum("bnd,bmd->bnm", qh, kh)
            s = np.where(nbhd, s, -1e30)
            s = s - s.max(-1, keepdims=True)
            pr = np.exp(s)
            pr = pr / pr.sum(-1, keepdims=True)
            outs.append(np.einsum("bnm,bmd->bnd", pr, vh))
        attn = np.concatenate(outs, -1)
        h = attn @ p["w_out"][l].T + resid

        resid = h
        hn = ln(h, p["g_ff"][l])
        y = hn @ p["w_ff1"][l].T + p["b_ff1"][l]
        a, g = y[..., :INNER], y[..., INNER:]
        hidden = a * (g / (1.0 + np.exp(-g)))
        h = hidden @ p["w_ff2"][l].T + resid

    x_ds = h.reshape(B, N // R, R, D).transpose(0, 1, 3, 2).reshape(B, N // R, D * R)
    return x_ds @ p["w_down"].T


# ------------------------------------- main --------------------------------------------
if __name__ == "__main__":
    key = jax.random.PRNGKey(0)
    kx, kparam = jax.random.split(key)
    x = jax.random.normal(kx, (B, N, C_IN), dtype=jnp.float32)
    params = make_params(kparam)
    kparams = prepare_kernel_params(params)

    fwd = jax.jit(transformer_downsample_block_1d)
    out = jax.block_until_ready(fwd(x, kparams))
    assert out.shape == (B, N // R, D)

    # The kernel's weight matmuls use bf16 operands (f32 accumulation); the reference
    # consumes the SAME bf16-rounded weights (activations stay f64 there), so the check
    # isolates structural/semantic bugs (O(1) errors) from the deliberate precision
    # choice.  Tolerance sized for the remaining in-kernel bf16 activation casts and
    # the approximate EUP reciprocal in the softmax normalization.
    def round_bf16(a):
        return np.asarray(jnp.asarray(a, jnp.bfloat16).astype(jnp.float32), np.float64)

    weight_keys = {"w_in", "w_qkv", "w_out", "w_ff1", "w_ff2", "w_down"}
    ref_params = {k: (round_bf16(v) if k in weight_keys else np.asarray(v, np.float64))
                  for k, v in params.items()}

    ref = reference_forward(np.asarray(x, np.float64), ref_params)
    np.testing.assert_allclose(np.asarray(out, np.float64), ref, rtol=5e-2, atol=1e-1)
    print("KERNEL_OK")
</pallas_src>

<mosaic_0001>
module attributes {stable_mosaic.version = 11 : i64} {
  func.func @fused_block_kernel(%arg0: memref<32x32xf32, #tpu.memory_space<vmem>>, %arg1: memref<32x128xbf16, #tpu.memory_space<vmem>>, %arg2: memref<2x32x128xf32, #tpu.memory_space<vmem>>, %arg3: memref<2x32x128xf32, #tpu.memory_space<vmem>>, %arg4: memref<2x1x128xf32, #tpu.memory_space<vmem>>, %arg5: memref<32x32xf32, #tpu.memory_space<vmem>>, %arg6: memref<2x16x32xf32, #tpu.memory_space<vmem>>, %arg7: memref<2x1x128xf32, #tpu.memory_space<vmem>>, %arg8: memref<2x128x384xbf16, #tpu.memory_space<vmem>>, %arg9: memref<2x128x128xbf16, #tpu.memory_space<vmem>>, %arg10: memref<2x1x128xf32, #tpu.memory_space<vmem>>, %arg11: memref<2x128x512xbf16, #tpu.memory_space<vmem>>, %arg12: memref<2x1x512xf32, #tpu.memory_space<vmem>>, %arg13: memref<2x256x128xbf16, #tpu.memory_space<vmem>>, %arg14: memref<2x128x128xbf16, #tpu.memory_space<vmem>>, %arg15: memref<16x128xf32, #tpu.memory_space<vmem>>) attributes {dimension_semantics = [], scalar_prefetch = 0 : i64, scratch_operands = 0 : i64, tpu.core_type = #tpu.core_type<tc>} {
    %c0 = arith.constant 0 : index
    %c0_0 = arith.constant 0 : index
    %0 = vector.load %arg0[%c0, %c0_0] : memref<32x32xf32, #tpu.memory_space<vmem>>, vector<32x32xf32>
    %1 = arith.truncf %0 : vector<32x32xf32> to vector<32x32xbf16>
    %c0_1 = arith.constant 0 : index
    %c0_2 = arith.constant 0 : index
    %2 = vector.load %arg1[%c0_1, %c0_2] : memref<32x128xbf16, #tpu.memory_space<vmem>>, vector<32x128xbf16>
    %cst = arith.constant dense<0.000000e+00> : vector<32x128xf32>
    %3 = tpu.matmul %1, %2, %cst {dimension_numbers = #tpu.dot_dimension_numbers<[1], [0], [0], [1], [0, 0, 1, 1], [], []>} : vector<32x32xbf16>, vector<32x128xbf16>, vector<32x128xf32> -> vector<32x128xf32>
    %c0_3 = arith.constant 0 : index
    %c0_4 = arith.constant 0 : index
    %c0_5 = arith.constant 0 : index
    %4 = vector.load %arg2[%c0_3, %c0_4, %c0_5] : memref<2x32x128xf32, #tpu.memory_space<vmem>>, vector<1x32x128xf32>
    %5 = vector.shape_cast %4 : vector<1x32x128xf32> to vector<32x128xf32>
    %c1 = arith.constant 1 : index
    %c0_6 = arith.constant 0 : index
    %c0_7 = arith.constant 0 : index
    %6 = vector.load %arg2[%c1, %c0_6, %c0_7] : memref<2x32x128xf32, #tpu.memory_space<vmem>>, vector<1x32x128xf32>
    %7 = vector.shape_cast %6 : vector<1x32x128xf32> to vector<32x128xf32>
    %c0_8 = arith.constant 0 : index
    %c0_9 = arith.constant 0 : index
    %c0_10 = arith.constant 0 : index
    %8 = vector.load %arg3[%c0_8, %c0_9, %c0_10] : memref<2x32x128xf32, #tpu.memory_space<vmem>>, vector<1x32x128xf32>
    %9 = vector.shape_cast %8 : vector<1x32x128xf32> to vector<32x128xf32>
    %c1_11 = arith.constant 1 : index
    %c0_12 = arith.constant 0 : index
    %c0_13 = arith.constant 0 : index
    %10 = vector.load %arg3[%c1_11, %c0_12, %c0_13] : memref<2x32x128xf32, #tpu.memory_space<vmem>>, vector<1x32x128xf32>
    %11 = vector.shape_cast %10 : vector<1x32x128xf32> to vector<32x128xf32>
    %12 = arith.addf %5, %7 : vector<32x128xf32>
    %13 = arith.addf %9, %11 : vector<32x128xf32>
    %c0_14 = arith.constant 0 : index
    %c0_15 = arith.constant 0 : index
    %14 = vector.load %arg5[%c0_14, %c0_15] : memref<32x32xf32, #tpu.memory_space<vmem>>, vector<32x32xf32>
    %c0_16 = arith.constant 0 : index
    %c0_17 = arith.constant 0 : index
    %c0_18 = arith.constant 0 : index
    %15 = vector.load %arg7[%c0_16, %c0_17, %c0_18] : memref<2x1x128xf32, #tpu.memory_space<vmem>>, vector<1x1x128xf32>
    %16 = vector.shape_cast %15 : vector<1x1x128xf32> to vector<1x128xf32>
    %cst_19 = arith.constant dense<0.000000e+00> : vector<32xf32>
    %17 = vector.multi_reduction <add>, %3, %cst_19 [1] : vector<32x128xf32> to vector<32xf32>
    %18 = vector.shape_cast %17 : vector<32xf32> to vector<32x1xf32>
    %cst_20 = arith.constant 1.280000e+02 : f32
    %19 = vector.broadcast %cst_20 : f32 to vector<32x1xf32>
    %20 = arith.divf %18, %19 : vector<32x1xf32>
    %21 = vector.broadcast %20 : vector<32x1xf32> to vector<32x128xf32>
    %22 = arith.subf %3, %21 : vector<32x128xf32>
    %23 = arith.mulf %22, %22 : vector<32x128xf32>
    %cst_21 = arith.constant dense<0.000000e+00> : vector<32xf32>
    %24 = vector.multi_reduction <add>, %23, %cst_21 [1] : vector<32x128xf32> to vector<32xf32>
    %25 = vector.shape_cast %24 : vector<32xf32> to vector<32x1xf32>
    %cst_22 = arith.constant 1.280000e+02 : f32
    %26 = vector.broadcast %cst_22 : f32 to vector<32x1xf32>
    %27 = arith.divf %25, %26 : vector<32x1xf32>
    %cst_23 = arith.constant 9.99999974E-6 : f32
    %28 = vector.broadcast %cst_23 : f32 to vector<32x1xf32>
    %29 = arith.addf %27, %28 : vector<32x1xf32>
    %30 = math.rsqrt %29 : vector<32x1xf32>
    %31 = vector.broadcast %30 : vector<32x1xf32> to vector<32x128xf32>
    %32 = arith.mulf %22, %31 : vector<32x128xf32>
    %33 = vector.broadcast %16 : vector<1x128xf32> to vector<32x128xf32>
    %34 = arith.mulf %32, %33 : vector<32x128xf32>
    %35 = arith.truncf %34 : vector<32x128xf32> to vector<32x128xbf16>
    %c0_24 = arith.constant 0 : index
    %c0_25 = arith.constant 0 : index
    %c0_26 = arith.constant 0 : index
    %36 = vector.load %arg8[%c0_24, %c0_25, %c0_26] : memref<2x128x384xbf16, #tpu.memory_space<vmem>>, vector<1x128x384xbf16>
    %37 = vector.shape_cast %36 : vector<1x128x384xbf16> to vector<128x384xbf16>
    %cst_27 = arith.constant dense<0.000000e+00> : vector<32x384xf32>
    %38 = tpu.matmul %35, %37, %cst_27 {dimension_numbers = #tpu.dot_dimension_numbers<[1], [0], [0], [1], [0, 0, 1, 1], [], []>} : vector<32x128xbf16>, vector<128x384xbf16>, vector<32x384xf32> -> vector<32x384xf32>
    %39 = vector.extract_strided_slice %38 {offsets = [0, 0], sizes = [32, 128], strides = [1, 1]} : vector<32x384xf32> to vector<32x128xf32>
    %40 = vector.extract_strided_slice %38 {offsets = [0, 128], sizes = [32, 128], strides = [1, 1]} : vector<32x384xf32> to vector<32x128xf32>
    %41 = vector.extract_strided_slice %38 {offsets = [0, 256], sizes = [32, 128], strides = [1, 1]} : vector<32x384xf32> to vector<32x128xf32>
    %c64_i32 = arith.constant 64 : i32
    %42 = tpu.dynamic_rotate %39 by %c64_i32 dim 1 : vector<32x128xf32>, i32 -> vector<32x128xf32>
    %c64_i32_28 = arith.constant 64 : i32
    %43 = tpu.dynamic_rotate %40 by %c64_i32_28 dim 1 : vector<32x128xf32>, i32 -> vector<32x128xf32>
    %44 = arith.mulf %40, %12 : vector<32x128xf32>
    %45 = arith.mulf %43, %13 : vector<32x128xf32>
    %46 = arith.addf %44, %45 : vector<32x128xf32>
    %47 = arith.mulf %39, %5 : vector<32x128xf32>
    %48 = arith.mulf %42, %9 : vector<32x128xf32>
    %49 = arith.addf %47, %48 : vector<32x128xf32>
    %cst_29 = arith.constant dense<0.000000e+00> : vector<32x32xf32>
    %50 = tpu.matmul %49, %46, %cst_29 {dimension_numbers = #tpu.dot_dimension_numbers<[1], [1], [0], [0], [0, 0, 1, 0], [], []>} : vector<32x128xf32>, vector<32x128xf32>, vector<32x32xf32> -> vector<32x32xf32>
    %51 = arith.addf %50, %14 : vector<32x32xf32>
    %cst_30 = arith.constant dense<0xFF800000> : vector<32xf32>
    %52 = vector.multi_reduction <maximumf>, %51, %cst_30 [1] : vector<32x32xf32> to vector<32xf32>
    %53 = vector.shape_cast %52 : vector<32xf32> to vector<32x1xf32>
    %54 = vector.broadcast %53 : vector<32x1xf32> to vector<32x32xf32>
    %55 = arith.subf %51, %54 : vector<32x32xf32>
    %56 = math.exp %55 : vector<32x32xf32>
    %cst_31 = arith.constant dense<0.000000e+00> : vector<32xf32>
    %57 = vector.multi_reduction <add>, %56, %cst_31 [1] : vector<32x32xf32> to vector<32xf32>
    %58 = vector.shape_cast %57 : vector<32xf32> to vector<32x1xf32>
    %59 = tpu.reciprocal %58 {approx = true} : vector<32x1xf32> -> vector<32x1xf32>
    %60 = vector.broadcast %59 : vector<32x1xf32> to vector<32x32xf32>
    %61 = arith.mulf %56, %60 : vector<32x32xf32>
    %cst_32 = arith.constant dense<0.000000e+00> : vector<32x128xf32>
    %62 = tpu.matmul %61, %41, %cst_32 {dimension_numbers = #tpu.dot_dimension_numbers<[1], [0], [0], [1], [0, 0, 1, 1], [], []>} : vector<32x32xf32>, vector<32x128xf32>, vector<32x128xf32> -> vector<32x128xf32>
    %c0_33 = arith.constant 0 : index
    %c0_34 = arith.constant 0 : index
    %c0_35 = arith.constant 0 : index
    %63 = vector.load %arg4[%c0_33, %c0_34, %c0_35] : memref<2x1x128xf32, #tpu.memory_space<vmem>>, vector<1x1x128xf32>
    %64 = vector.shape_cast %63 : vector<1x1x128xf32> to vector<1x128xf32>
    %65 = vector.broadcast %64 : vector<1x128xf32> to vector<32x128xf32>
    %66 = arith.mulf %62, %65 : vector<32x128xf32>
    %67 = arith.mulf %39, %7 : vector<32x128xf32>
    %68 = arith.mulf %42, %11 : vector<32x128xf32>
    %69 = arith.addf %67, %68 : vector<32x128xf32>
    %cst_36 = arith.constant dense<0.000000e+00> : vector<32x32xf32>
    %70 = tpu.matmul %69, %46, %cst_36 {dimension_numbers = #tpu.dot_dimension_numbers<[1], [1], [0], [0], [0, 0, 1, 0], [], []>} : vector<32x128xf32>, vector<32x128xf32>, vector<32x32xf32> -> vector<32x32xf32>
    %71 = arith.addf %70, %14 : vector<32x32xf32>
    %cst_37 = arith.constant dense<0xFF800000> : vector<32xf32>
    %72 = vector.multi_reduction <maximumf>, %71, %cst_37 [1] : vector<32x32xf32> to vector<32xf32>
    %73 = vector.shape_cast %72 : vector<32xf32> to vector<32x1xf32>
    %74 = vector.broadcast %73 : vector<32x1xf32> to vector<32x32xf32>
    %75 = arith.subf %71, %74 : vector<32x32xf32>
    %76 = math.exp %75 : vector<32x32xf32>
    %cst_38 = arith.constant dense<0.000000e+00> : vector<32xf32>
    %77 = vector.multi_reduction <add>, %76, %cst_38 [1] : vector<32x32xf32> to vector<32xf32>
    %78 = vector.shape_cast %77 : vector<32xf32> to vector<32x1xf32>
    %79 = tpu.reciprocal %78 {approx = true} : vector<32x1xf32> -> vector<32x1xf32>
    %80 = vector.broadcast %79 : vector<32x1xf32> to vector<32x32xf32>
    %81 = arith.mulf %76, %80 : vector<32x32xf32>
    %cst_39 = arith.constant dense<0.000000e+00> : vector<32x128xf32>
    %82 = tpu.matmul %81, %41, %cst_39 {dimension_numbers = #tpu.dot_dimension_numbers<[1], [0], [0], [1], [0, 0, 1, 1], [], []>} : vector<32x32xf32>, vector<32x128xf32>, vector<32x128xf32> -> vector<32x128xf32>
    %c1_40 = arith.constant 1 : index
    %c0_41 = arith.constant 0 : index
    %c0_42 = arith.constant 0 : index
    %83 = vector.load %arg4[%c1_40, %c0_41, %c0_42] : memref<2x1x128xf32, #tpu.memory_space<vmem>>, vector<1x1x128xf32>
    %84 = vector.shape_cast %83 : vector<1x1x128xf32> to vector<1x128xf32>
    %85 = vector.broadcast %84 : vector<1x128xf32> to vector<32x128xf32>
    %86 = arith.mulf %82, %85 : vector<32x128xf32>
    %87 = arith.addf %66, %86 : vector<32x128xf32>
    %88 = arith.truncf %87 : vector<32x128xf32> to vector<32x128xbf16>
    %c0_43 = arith.constant 0 : index
    %c0_44 = arith.constant 0 : index
    %c0_45 = arith.constant 0 : index
    %89 = vector.load %arg9[%c0_43, %c0_44, %c0_45] : memref<2x128x128xbf16, #tpu.memory_space<vmem>>, vector<1x128x128xbf16>
    %90 = vector.shape_cast %89 : vector<1x128x128xbf16> to vector<128x128xbf16>
    %cst_46 = arith.constant dense<0.000000e+00> : vector<32x128xf32>
    %91 = tpu.matmul %88, %90, %cst_46 {dimension_numbers = #tpu.dot_dimension_numbers<[1], [0], [0], [1], [0, 0, 1, 1], [], []>} : vector<32x128xbf16>, vector<128x128xbf16>, vector<32x128xf32> -> vector<32x128xf32>
    %92 = arith.addf %91, %3 : vector<32x128xf32>
    %c0_47 = arith.constant 0 : index
    %c0_48 = arith.constant 0 : index
    %c0_49 = arith.constant 0 : index
    %93 = vector.load %arg10[%c0_47, %c0_48, %c0_49] : memref<2x1x128xf32, #tpu.memory_space<vmem>>, vector<1x1x128xf32>
    %94 = vector.shape_cast %93 : vector<1x1x128xf32> to vector<1x128xf32>
    %cst_50 = arith.constant dense<0.000000e+00> : vector<32xf32>
    %95 = vector.multi_reduction <add>, %92, %cst_50 [1] : vector<32x128xf32> to vector<32xf32>
    %96 = vector.shape_cast %95 : vector<32xf32> to vector<32x1xf32>
    %cst_51 = arith.constant 1.280000e+02 : f32
    %97 = vector.broadcast %cst_51 : f32 to vector<32x1xf32>
    %98 = arith.divf %96, %97 : vector<32x1xf32>
    %99 = vector.broadcast %98 : vector<32x1xf32> to vector<32x128xf32>
    %100 = arith.subf %92, %99 : vector<32x128xf32>
    %101 = arith.mulf %100, %100 : vector<32x128xf32>
    %cst_52 = arith.constant dense<0.000000e+00> : vector<32xf32>
    %102 = vector.multi_reduction <add>, %101, %cst_52 [1] : vector<32x128xf32> to vector<32xf32>
    %103 = vector.shape_cast %102 : vector<32xf32> to vector<32x1xf32>
    %cst_53 = arith.constant 1.280000e+02 : f32
    %104 = vector.broadcast %cst_53 : f32 to vector<32x1xf32>
    %105 = arith.divf %103, %104 : vector<32x1xf32>
    %cst_54 = arith.constant 9.99999974E-6 : f32
    %106 = vector.broadcast %cst_54 : f32 to vector<32x1xf32>
    %107 = arith.addf %105, %106 : vector<32x1xf32>
    %108 = math.rsqrt %107 : vector<32x1xf32>
    %109 = vector.broadcast %108 : vector<32x1xf32> to vector<32x128xf32>
    %110 = arith.mulf %100, %109 : vector<32x128xf32>
    %111 = vector.broadcast %94 : vector<1x128xf32> to vector<32x128xf32>
    %112 = arith.mulf %110, %111 : vector<32x128xf32>
    %113 = arith.truncf %112 : vector<32x128xf32> to vector<32x128xbf16>
    %c0_55 = arith.constant 0 : index
    %c0_56 = arith.constant 0 : index
    %c0_57 = arith.constant 0 : index
    %114 = vector.load %arg11[%c0_55, %c0_56, %c0_57] : memref<2x128x512xbf16, #tpu.memory_space<vmem>>, vector<1x128x512xbf16>
    %115 = vector.shape_cast %114 : vector<1x128x512xbf16> to vector<128x512xbf16>
    %cst_58 = arith.constant dense<0.000000e+00> : vector<32x512xf32>
    %116 = tpu.matmul %113, %115, %cst_58 {dimension_numbers = #tpu.dot_dimension_numbers<[1], [0], [0], [1], [0, 0, 1, 1], [], []>} : vector<32x128xbf16>, vector<128x512xbf16>, vector<32x512xf32> -> vector<32x512xf32>
    %c0_59 = arith.constant 0 : index
    %c0_60 = arith.constant 0 : index
    %c0_61 = arith.constant 0 : index
    %117 = vector.load %arg12[%c0_59, %c0_60, %c0_61] : memref<2x1x512xf32, #tpu.memory_space<vmem>>, vector<1x1x512xf32>
    %118 = vector.shape_cast %117 : vector<1x1x512xf32> to vector<1x512xf32>
    %119 = vector.broadcast %118 : vector<1x512xf32> to vector<32x512xf32>
    %120 = arith.addf %116, %119 : vector<32x512xf32>
    %121 = vector.extract_strided_slice %120 {offsets = [0, 0], sizes = [32, 256], strides = [1, 1]} : vector<32x512xf32> to vector<32x256xf32>
    %122 = vector.extract_strided_slice %120 {offsets = [0, 256], sizes = [32, 256], strides = [1, 1]} : vector<32x512xf32> to vector<32x256xf32>
    %123 = arith.negf %122 : vector<32x256xf32>
    %124 = math.exp %123 : vector<32x256xf32>
    %cst_62 = arith.constant 1.000000e+00 : f32
    %125 = vector.broadcast %cst_62 : f32 to vector<32x256xf32>
    %126 = arith.addf %125, %124 : vector<32x256xf32>
    %127 = arith.divf %125, %126 : vector<32x256xf32>
    %128 = arith.mulf %122, %127 : vector<32x256xf32>
    %129 = arith.mulf %121, %128 : vector<32x256xf32>
    %130 = arith.truncf %129 : vector<32x256xf32> to vector<32x256xbf16>
    %c0_63 = arith.constant 0 : index
    %c0_64 = arith.constant 0 : index
    %c0_65 = arith.constant 0 : index
    %131 = vector.load %arg13[%c0_63, %c0_64, %c0_65] : memref<2x256x128xbf16, #tpu.memory_space<vmem>>, vector<1x256x128xbf16>
    %132 = vector.shape_cast %131 : vector<1x256x128xbf16> to vector<256x128xbf16>
    %cst_66 = arith.constant dense<0.000000e+00> : vector<32x128xf32>
    %133 = tpu.matmul %130, %132, %cst_66 {dimension_numbers = #tpu.dot_dimension_numbers<[1], [0], [0], [1], [0, 0, 1, 1], [], []>} : vector<32x256xbf16>, vector<256x128xbf16>, vector<32x128xf32> -> vector<32x128xf32>
    %134 = arith.addf %133, %92 : vector<32x128xf32>
    %c1_67 = arith.constant 1 : index
    %c0_68 = arith.constant 0 : index
    %c0_69 = arith.constant 0 : index
    %135 = vector.load %arg7[%c1_67, %c0_68, %c0_69] : memref<2x1x128xf32, #tpu.memory_space<vmem>>, vector<1x1x128xf32>
    %136 = vector.shape_cast %135 : vector<1x1x128xf32> to vector<1x128xf32>
    %cst_70 = arith.constant dense<0.000000e+00> : vector<32xf32>
    %137 = vector.multi_reduction <add>, %134, %cst_70 [1] : vector<32x128xf32> to vector<32xf32>
    %138 = vector.shape_cast %137 : vector<32xf32> to vector<32x1xf32>
    %cst_71 = arith.constant 1.280000e+02 : f32
    %139 = vector.broadcast %cst_71 : f32 to vector<32x1xf32>
    %140 = arith.divf %138, %139 : vector<32x1xf32>
    %141 = vector.broadcast %140 : vector<32x1xf32> to vector<32x128xf32>
    %142 = arith.subf %134, %141 : vector<32x128xf32>
    %143 = arith.mulf %142, %142 : vector<32x128xf32>
    %cst_72 = arith.constant dense<0.000000e+00> : vector<32xf32>
    %144 = vector.multi_reduction <add>, %143, %cst_72 [1] : vector<32x128xf32> to vector<32xf32>
    %145 = vector.shape_cast %144 : vector<32xf32> to vector<32x1xf32>
    %cst_73 = arith.constant 1.280000e+02 : f32
    %146 = vector.broadcast %cst_73 : f32 to vector<32x1xf32>
    %147 = arith.divf %145, %146 : vector<32x1xf32>
    %cst_74 = arith.constant 9.99999974E-6 : f32
    %148 = vector.broadcast %cst_74 : f32 to vector<32x1xf32>
    %149 = arith.addf %147, %148 : vector<32x1xf32>
    %150 = math.rsqrt %149 : vector<32x1xf32>
    %151 = vector.broadcast %150 : vector<32x1xf32> to vector<32x128xf32>
    %152 = arith.mulf %142, %151 : vector<32x128xf32>
    %153 = vector.broadcast %136 : vector<1x128xf32> to vector<32x128xf32>
    %154 = arith.mulf %152, %153 : vector<32x128xf32>
    %155 = arith.truncf %154 : vector<32x128xf32> to vector<32x128xbf16>
    %c1_75 = arith.constant 1 : index
    %c0_76 = arith.constant 0 : index
    %c0_77 = arith.constant 0 : index
    %156 = vector.load %arg8[%c1_75, %c0_76, %c0_77] : memref<2x128x384xbf16, #tpu.memory_space<vmem>>, vector<1x128x384xbf16>
    %157 = vector.shape_cast %156 : vector<1x128x384xbf16> to vector<128x384xbf16>
    %cst_78 = arith.constant dense<0.000000e+00> : vector<32x384xf32>
    %158 = tpu.matmul %155, %157, %cst_78 {dimension_numbers = #tpu.dot_dimension_numbers<[1], [0], [0], [1], [0, 0, 1, 1], [], []>} : vector<32x128xbf16>, vector<128x384xbf16>, vector<32x384xf32> -> vector<32x384xf32>
    %159 = vector.extract_strided_slice %158 {offsets = [0, 0], sizes = [32, 128], strides = [1, 1]} : vector<32x384xf32> to vector<32x128xf32>
    %160 = vector.extract_strided_slice %158 {offsets = [0, 128], sizes = [32, 128], strides = [1, 1]} : vector<32x384xf32> to vector<32x128xf32>
    %161 = vector.extract_strided_slice %158 {offsets = [0, 256], sizes = [32, 128], strides = [1, 1]} : vector<32x384xf32> to vector<32x128xf32>
    %c64_i32_79 = arith.constant 64 : i32
    %162 = tpu.dynamic_rotate %159 by %c64_i32_79 dim 1 : vector<32x128xf32>, i32 -> vector<32x128xf32>
    %c64_i32_80 = arith.constant 64 : i32
    %163 = tpu.dynamic_rotate %160 by %c64_i32_80 dim 1 : vector<32x128xf32>, i32 -> vector<32x128xf32>
    %164 = arith.mulf %160, %12 : vector<32x128xf32>
    %165 = arith.mulf %163, %13 : vector<32x128xf32>
    %166 = arith.addf %164, %165 : vector<32x128xf32>
    %167 = arith.mulf %159, %5 : vector<32x128xf32>
    %168 = arith.mulf %162, %9 : vector<32x128xf32>
    %169 = arith.addf %167, %168 : vector<32x128xf32>
    %cst_81 = arith.constant dense<0.000000e+00> : vector<32x32xf32>
    %170 = tpu.matmul %169, %166, %cst_81 {dimension_numbers = #tpu.dot_dimension_numbers<[1], [1], [0], [0], [0, 0, 1, 0], [], []>} : vector<32x128xf32>, vector<32x128xf32>, vector<32x32xf32> -> vector<32x32xf32>
    %171 = arith.addf %170, %14 : vector<32x32xf32>
    %cst_82 = arith.constant dense<0xFF800000> : vector<32xf32>
    %172 = vector.multi_reduction <maximumf>, %171, %cst_82 [1] : vector<32x32xf32> to vector<32xf32>
    %173 = vector.shape_cast %172 : vector<32xf32> to vector<32x1xf32>
    %174 = vector.broadcast %173 : vector<32x1xf32> to vector<32x32xf32>
    %175 = arith.subf %171, %174 : vector<32x32xf32>
    %176 = math.exp %175 : vector<32x32xf32>
    %cst_83 = arith.constant dense<0.000000e+00> : vector<32xf32>
    %177 = vector.multi_reduction <add>, %176, %cst_83 [1] : vector<32x32xf32> to vector<32xf32>
    %178 = vector.shape_cast %177 : vector<32xf32> to vector<32x1xf32>
    %179 = tpu.reciprocal %178 {approx = true} : vector<32x1xf32> -> vector<32x1xf32>
    %180 = vector.broadcast %179 : vector<32x1xf32> to vector<32x32xf32>
    %181 = arith.mulf %176, %180 : vector<32x32xf32>
    %cst_84 = arith.constant dense<0.000000e+00> : vector<32x128xf32>
    %182 = tpu.matmul %181, %161, %cst_84 {dimension_numbers = #tpu.dot_dimension_numbers<[1], [0], [0], [1], [0, 0, 1, 1], [], []>} : vector<32x32xf32>, vector<32x128xf32>, vector<32x128xf32> -> vector<32x128xf32>
    %c0_85 = arith.constant 0 : index
    %c0_86 = arith.constant 0 : index
    %c0_87 = arith.constant 0 : index
    %183 = vector.load %arg4[%c0_85, %c0_86, %c0_87] : memref<2x1x128xf32, #tpu.memory_space<vmem>>, vector<1x1x128xf32>
    %184 = vector.shape_cast %183 : vector<1x1x128xf32> to vector<1x128xf32>
    %185 = vector.broadcast %184 : vector<1x128xf32> to vector<32x128xf32>
    %186 = arith.mulf %182, %185 : vector<32x128xf32>
    %187 = arith.mulf %159, %7 : vector<32x128xf32>
    %188 = arith.mulf %162, %11 : vector<32x128xf32>
    %189 = arith.addf %187, %188 : vector<32x128xf32>
    %cst_88 = arith.constant dense<0.000000e+00> : vector<32x32xf32>
    %190 = tpu.matmul %189, %166, %cst_88 {dimension_numbers = #tpu.dot_dimension_numbers<[1], [1], [0], [0], [0, 0, 1, 0], [], []>} : vector<32x128xf32>, vector<32x128xf32>, vector<32x32xf32> -> vector<32x32xf32>
    %191 = arith.addf %190, %14 : vector<32x32xf32>
    %cst_89 = arith.constant dense<0xFF800000> : vector<32xf32>
    %192 = vector.multi_reduction <maximumf>, %191, %cst_89 [1] : vector<32x32xf32> to vector<32xf32>
    %193 = vector.shape_cast %192 : vector<32xf32> to vector<32x1xf32>
    %194 = vector.broadcast %193 : vector<32x1xf32> to vector<32x32xf32>
    %195 = arith.subf %191, %194 : vector<32x32xf32>
    %196 = math.exp %195 : vector<32x32xf32>
    %cst_90 = arith.constant dense<0.000000e+00> : vector<32xf32>
    %197 = vector.multi_reduction <add>, %196, %cst_90 [1] : vector<32x32xf32> to vector<32xf32>
    %198 = vector.shape_cast %197 : vector<32xf32> to vector<32x1xf32>
    %199 = tpu.reciprocal %198 {approx = true} : vector<32x1xf32> -> vector<32x1xf32>
    %200 = vector.broadcast %199 : vector<32x1xf32> to vector<32x32xf32>
    %201 = arith.mulf %196, %200 : vector<32x32xf32>
    %cst_91 = arith.constant dense<0.000000e+00> : vector<32x128xf32>
    %202 = tpu.matmul %201, %161, %cst_91 {dimension_numbers = #tpu.dot_dimension_numbers<[1], [0], [0], [1], [0, 0, 1, 1], [], []>} : vector<32x32xf32>, vector<32x128xf32>, vector<32x128xf32> -> vector<32x128xf32>
    %c1_92 = arith.constant 1 : index
    %c0_93 = arith.constant 0 : index
    %c0_94 = arith.constant 0 : index
    %203 = vector.load %arg4[%c1_92, %c0_93, %c0_94] : memref<2x1x128xf32, #tpu.memory_space<vmem>>, vector<1x1x128xf32>
    %204 = vector.shape_cast %203 : vector<1x1x128xf32> to vector<1x128xf32>
    %205 = vector.broadcast %204 : vector<1x128xf32> to vector<32x128xf32>
    %206 = arith.mulf %202, %205 : vector<32x128xf32>
    %207 = arith.addf %186, %206 : vector<32x128xf32>
    %208 = arith.truncf %207 : vector<32x128xf32> to vector<32x128xbf16>
    %c1_95 = arith.constant 1 : index
    %c0_96 = arith.constant 0 : index
    %c0_97 = arith.constant 0 : index
    %209 = vector.load %arg9[%c1_95, %c0_96, %c0_97] : memref<2x128x128xbf16, #tpu.memory_space<vmem>>, vector<1x128x128xbf16>
    %210 = vector.shape_cast %209 : vector<1x128x128xbf16> to vector<128x128xbf16>
    %cst_98 = arith.constant dense<0.000000e+00> : vector<32x128xf32>
    %211 = tpu.matmul %208, %210, %cst_98 {dimension_numbers = #tpu.dot_dimension_numbers<[1], [0], [0], [1], [0, 0, 1, 1], [], []>} : vector<32x128xbf16>, vector<128x128xbf16>, vector<32x128xf32> -> vector<32x128xf32>
    %212 = arith.addf %211, %134 : vector<32x128xf32>
    %c1_99 = arith.constant 1 : index
    %c0_100 = arith.constant 0 : index
    %c0_101 = arith.constant 0 : index
    %213 = vector.load %arg10[%c1_99, %c0_100, %c0_101] : memref<2x1x128xf32, #tpu.memory_space<vmem>>, vector<1x1x128xf32>
    %214 = vector.shape_cast %213 : vector<1x1x128xf32> to vector<1x128xf32>
    %cst_102 = arith.constant dense<0.000000e+00> : vector<32xf32>
    %215 = vector.multi_reduction <add>, %212, %cst_102 [1] : vector<32x128xf32> to vector<32xf32>
    %216 = vector.shape_cast %215 : vector<32xf32> to vector<32x1xf32>
    %cst_103 = arith.constant 1.280000e+02 : f32
    %217 = vector.broadcast %cst_103 : f32 to vector<32x1xf32>
    %218 = arith.divf %216, %217 : vector<32x1xf32>
    %219 = vector.broadcast %218 : vector<32x1xf32> to vector<32x128xf32>
    %220 = arith.subf %212, %219 : vector<32x128xf32>
    %221 = arith.mulf %220, %220 : vector<32x128xf32>
    %cst_104 = arith.constant dense<0.000000e+00> : vector<32xf32>
    %222 = vector.multi_reduction <add>, %221, %cst_104 [1] : vector<32x128xf32> to vector<32xf32>
    %223 = vector.shape_cast %222 : vector<32xf32> to vector<32x1xf32>
    %cst_105 = arith.constant 1.280000e+02 : f32
    %224 = vector.broadcast %cst_105 : f32 to vector<32x1xf32>
    %225 = arith.divf %223, %224 : vector<32x1xf32>
    %cst_106 = arith.constant 9.99999974E-6 : f32
    %226 = vector.broadcast %cst_106 : f32 to vector<32x1xf32>
    %227 = arith.addf %225, %226 : vector<32x1xf32>
    %228 = math.rsqrt %227 : vector<32x1xf32>
    %229 = vector.broadcast %228 : vector<32x1xf32> to vector<32x128xf32>
    %230 = arith.mulf %220, %229 : vector<32x128xf32>
    %231 = vector.broadcast %214 : vector<1x128xf32> to vector<32x128xf32>
    %232 = arith.mulf %230, %231 : vector<32x128xf32>
    %233 = arith.truncf %232 : vector<32x128xf32> to vector<32x128xbf16>
    %c1_107 = arith.constant 1 : index
    %c0_108 = arith.constant 0 : index
    %c0_109 = arith.constant 0 : index
    %234 = vector.load %arg11[%c1_107, %c0_108, %c0_109] : memref<2x128x512xbf16, #tpu.memory_space<vmem>>, vector<1x128x512xbf16>
    %235 = vector.shape_cast %234 : vector<1x128x512xbf16> to vector<128x512xbf16>
    %cst_110 = arith.constant dense<0.000000e+00> : vector<32x512xf32>
    %236 = tpu.matmul %233, %235, %cst_110 {dimension_numbers = #tpu.dot_dimension_numbers<[1], [0], [0], [1], [0, 0, 1, 1], [], []>} : vector<32x128xbf16>, vector<128x512xbf16>, vector<32x512xf32> -> vector<32x512xf32>
    %c1_111 = arith.constant 1 : index
    %c0_112 = arith.constant 0 : index
    %c0_113 = arith.constant 0 : index
    %237 = vector.load %arg12[%c1_111, %c0_112, %c0_113] : memref<2x1x512xf32, #tpu.memory_space<vmem>>, vector<1x1x512xf32>
    %238 = vector.shape_cast %237 : vector<1x1x512xf32> to vector<1x512xf32>
    %239 = vector.broadcast %238 : vector<1x512xf32> to vector<32x512xf32>
    %240 = arith.addf %236, %239 : vector<32x512xf32>
    %241 = vector.extract_strided_slice %240 {offsets = [0, 0], sizes = [32, 256], strides = [1, 1]} : vector<32x512xf32> to vector<32x256xf32>
    %242 = vector.extract_strided_slice %240 {offsets = [0, 256], sizes = [32, 256], strides = [1, 1]} : vector<32x512xf32> to vector<32x256xf32>
    %243 = arith.negf %242 : vector<32x256xf32>
    %244 = math.exp %243 : vector<32x256xf32>
    %cst_114 = arith.constant 1.000000e+00 : f32
    %245 = vector.broadcast %cst_114 : f32 to vector<32x256xf32>
    %246 = arith.addf %245, %244 : vector<32x256xf32>
    %247 = arith.divf %245, %246 : vector<32x256xf32>
    %248 = arith.mulf %242, %247 : vector<32x256xf32>
    %249 = arith.mulf %241, %248 : vector<32x256xf32>
    %250 = arith.truncf %249 : vector<32x256xf32> to vector<32x256xbf16>
    %c1_115 = arith.constant 1 : index
    %c0_116 = arith.constant 0 : index
    %c0_117 = arith.constant 0 : index
    %251 = vector.load %arg13[%c1_115, %c0_116, %c0_117] : memref<2x256x128xbf16, #tpu.memory_space<vmem>>, vector<1x256x128xbf16>
    %252 = vector.shape_cast %251 : vector<1x256x128xbf16> to vector<256x128xbf16>
    %cst_118 = arith.constant dense<0.000000e+00> : vector<32x128xf32>
    %253 = tpu.matmul %250, %252, %cst_118 {dimension_numbers = #tpu.dot_dimension_numbers<[1], [0], [0], [1], [0, 0, 1, 1], [], []>} : vector<32x256xbf16>, vector<256x128xbf16>, vector<32x128xf32> -> vector<32x128xf32>
    %254 = arith.addf %253, %212 : vector<32x128xf32>
    %c0_119 = arith.constant 0 : index
    %c0_120 = arith.constant 0 : index
    %c0_121 = arith.constant 0 : index
    %255 = vector.load %arg6[%c0_119, %c0_120, %c0_121] : memref<2x16x32xf32, #tpu.memory_space<vmem>>, vector<1x16x32xf32>
    %256 = vector.shape_cast %255 : vector<1x16x32xf32> to vector<16x32xf32>
    %cst_122 = arith.constant dense<0.000000e+00> : vector<16x128xf32>
    %257 = tpu.matmul %256, %254, %cst_122 {dimension_numbers = #tpu.dot_dimension_numbers<[1], [0], [0], [1], [0, 0, 1, 1], [], []>} : vector<16x32xf32>, vector<32x128xf32>, vector<16x128xf32> -> vector<16x128xf32>
    %258 = arith.truncf %257 : vector<16x128xf32> to vector<16x128xbf16>
    %c0_123 = arith.constant 0 : index
    %c0_124 = arith.constant 0 : index
    %c0_125 = arith.constant 0 : index
    %259 = vector.load %arg14[%c0_123, %c0_124, %c0_125] : memref<2x128x128xbf16, #tpu.memory_space<vmem>>, vector<1x128x128xbf16>
    %260 = vector.shape_cast %259 : vector<1x128x128xbf16> to vector<128x128xbf16>
    %cst_126 = arith.constant dense<0.000000e+00> : vector<16x128xf32>
    %261 = tpu.matmul %258, %260, %cst_126 {dimension_numbers = #tpu.dot_dimension_numbers<[1], [0], [0], [1], [0, 0, 1, 1], [], []>} : vector<16x128xbf16>, vector<128x128xbf16>, vector<16x128xf32> -> vector<16x128xf32>
    %c1_127 = arith.constant 1 : index
    %c0_128 = arith.constant 0 : index
    %c0_129 = arith.constant 0 : index
    %262 = vector.load %arg6[%c1_127, %c0_128, %c0_129] : memref<2x16x32xf32, #tpu.memory_space<vmem>>, vector<1x16x32xf32>
    %263 = vector.shape_cast %262 : vector<1x16x32xf32> to vector<16x32xf32>
    %cst_130 = arith.constant dense<0.000000e+00> : vector<16x128xf32>
    %264 = tpu.matmul %263, %254, %cst_130 {dimension_numbers = #tpu.dot_dimension_numbers<[1], [0], [0], [1], [0, 0, 1, 1], [], []>} : vector<16x32xf32>, vector<32x128xf32>, vector<16x128xf32> -> vector<16x128xf32>
    %265 = arith.truncf %264 : vector<16x128xf32> to vector<16x128xbf16>
    %c1_131 = arith.constant 1 : index
    %c0_132 = arith.constant 0 : index
    %c0_133 = arith.constant 0 : index
    %266 = vector.load %arg14[%c1_131, %c0_132, %c0_133] : memref<2x128x128xbf16, #tpu.memory_space<vmem>>, vector<1x128x128xbf16>
    %267 = vector.shape_cast %266 : vector<1x128x128xbf16> to vector<128x128xbf16>
    %cst_134 = arith.constant dense<0.000000e+00> : vector<16x128xf32>
    %268 = tpu.matmul %265, %267, %cst_134 {dimension_numbers = #tpu.dot_dimension_numbers<[1], [0], [0], [1], [0, 0, 1, 1], [], []>} : vector<16x128xbf16>, vector<128x128xbf16>, vector<16x128xf32> -> vector<16x128xf32>
    %269 = arith.addf %261, %268 : vector<16x128xf32>
    %c0_135 = arith.constant 0 : index
    %c0_136 = arith.constant 0 : index
    %270 = vector.load %arg15[%c0_135, %c0_136] : memref<16x128xf32, #tpu.memory_space<vmem>>, vector<16x128xf32>
    tpu.vector_store %arg15[%c0_135, %c0_136], %269 {strides = array<i32>} : memref<16x128xf32, #tpu.memory_space<vmem>>, vector<16x128xf32>,
    return
  }
}

</mosaic_0001>

<llo_original>
// kernel: transformer_downsample_block_1d.1
$region0: #{transformer_downsample_block_1d.1}
  #allocation0 [shape = 'u32[]', space=smem, size = 0x4, offset = 0x4, fixed_abs, tag = 'smem constant byte address 0x4 - core index']
  #allocation1 [shape = 'u32[144,128]{1,0:T(1,128)}', space=vmem, size = 0x12000, scoped, tag = 'internal scratch']
  %s0 = inlined_call_operand.hbm [shape: f32[32,32], index: 0, kind: input, shape index: {}]
  %s1 = inlined_call_operand.vmem [shape: bf16[32,128], index: 1, kind: input, shape index: {}]
  %s2 = inlined_call_operand.hbm [shape: f32[2,32,128], index: 2, kind: input, shape index: {}]
  %s3 = inlined_call_operand.hbm [shape: f32[2,32,128], index: 3, kind: input, shape index: {}]
  %s4 = inlined_call_operand.vmem [shape: f32[2,1,128], index: 4, kind: input, shape index: {}]
  %s5 = inlined_call_operand.hbm [shape: f32[32,32], index: 5, kind: input, shape index: {}]
  %s6 = inlined_call_operand.hbm [shape: f32[2,16,32], index: 6, kind: input, shape index: {}]
  %s7 = inlined_call_operand.vmem [shape: f32[2,1,128], index: 7, kind: input, shape index: {}]
  %s8 = inlined_call_operand.hbm [shape: bf16[2,128,384], index: 8, kind: input, shape index: {}]
  %s9 = inlined_call_operand.hbm [shape: bf16[2,128,128], index: 9, kind: input, shape index: {}]
  %s10 = inlined_call_operand.vmem [shape: f32[2,1,128], index: 10, kind: input, shape index: {}]
  %s11 = inlined_call_operand.hbm [shape: bf16[2,128,512], index: 11, kind: input, shape index: {}]
  %s12 = inlined_call_operand.hbm [shape: f32[2,1,512], index: 12, kind: input, shape index: {}]
  %s13 = inlined_call_operand.hbm [shape: bf16[2,256,128], index: 13, kind: input, shape index: {}]
  %s14 = inlined_call_operand.hbm [shape: bf16[2,128,128], index: 14, kind: input, shape index: {}]
  %s15 = inlined_call_operand.hbm [shape: f32[16,128], index: 15, kind: output, shape index: {}]
  %s16 = sld [smem:[#allocation0]]
  $region114: #{transformer_downsample_block_1d.1} parent=0
    _
  %s18 = ssub.s32 1, %s16
  %s19 = scalar_select 0, %s18, %s16
  $region1: #{transformer_downsample_block_1d.1} parent=0
    #allocation2 [shape = 'u8[16384]{0}', space=vmem, size = 0x4000, scoped, tag = 'input window, operand 0, single buffered']
    #allocation3 [shape = 's32[1]{0}', space=sflag, size = 0x4, scoped, tag = 'scoped memory for transformer_downsample_block_1d.1']
    #allocation4 [shape = 's32[1]{0}', space=sflag, size = 0x4, scoped, tag = 'scoped memory for transformer_downsample_block_1d.1']
    #allocation5 [shape = 'u8[32768]{0}', space=vmem, size = 0x8000, scoped, tag = 'input window, operand 2, single buffered']
    #allocation6 [shape = 's32[1]{0}', space=sflag, size = 0x4, scoped, tag = 'scoped memory for transformer_downsample_block_1d.1']
    #allocation7 [shape = 'u8[32768]{0}', space=vmem, size = 0x8000, scoped, tag = 'input window, operand 3, single buffered']
    #allocation8 [shape = 'u8[16384]{0}', space=vmem, size = 0x4000, scoped, tag = 'input window, operand 5, single buffered']
    #allocation9 [shape = 's32[1]{0}', space=sflag, size = 0x4, scoped, tag = 'scoped memory for transformer_downsample_block_1d.1']
    #allocation10 [shape = 'u8[16384]{0}', space=vmem, size = 0x4000, scoped, tag = 'input window, operand 6, single buffered']
    #allocation11 [shape = 'u8[196608]{0}', space=vmem, size = 0x30000, scoped, tag = 'input window, operand 8, single buffered']
    #allocation12 [shape = 's32[1]{0}', space=sflag, size = 0x4, scoped, tag = 'scoped memory for transformer_downsample_block_1d.1']
    #allocation13 [shape = 'u8[65536]{0}', space=vmem, size = 0x10000, scoped, tag = 'input window, operand 9, single buffered']
    #allocation14 [shape = 'u8[262144]{0}', space=vmem, size = 0x40000, scoped, tag = 'input window, operand 11, single buffered']
    #allocation15 [shape = 's32[1]{0}', space=sflag, size = 0x4, scoped, tag = 'scoped memory for transformer_downsample_block_1d.1']
    #allocation16 [shape = 'u8[4096]{0}', space=vmem, size = 0x1000, scoped, tag = 'input window, operand 12, single buffered']
    #allocation17 [shape = 'u8[131072]{0}', space=vmem, size = 0x20000, scoped, tag = 'input window, operand 13, single buffered']
    #allocation18 [shape = 's32[1]{0}', space=sflag, size = 0x4, scoped, tag = 'scoped memory for transformer_downsample_block_1d.1']
    #allocation19 [shape = 'u8[65536]{0}', space=vmem, size = 0x10000, scoped, tag = 'input window, operand 14, single buffered']
    #allocation20 [shape = 'u8[8192]{0}', space=vmem, size = 0x2000, scoped, tag = 'output window, operand 0, single buffered']
    %20 = vsyncpa [#allocation3], 0
    %21 = vsyncpa [#allocation6], 0
    %22 = vsyncpa [#allocation9], 0
    %23 = vsyncpa [#allocation12], 0
    %24 = vsyncpa [#allocation15], 0
    %25 = vsyncpa [#allocation18], 0
    %26 = vsyncpa [#allocation4], 0
    // Predicated region
    $region2: #{transformer_downsample_block_1d.1} parent=1 // pred_check
      _
    $region3: #{transformer_downsample_block_1d.1} parent=1 // pred_check_branch
      %28 = sbr.rel (0) target = $region5
    $region4: #{transformer_downsample_block_1d.1} parent=1 // pred_region
      %s30 = ssub.s32 512, 512
      %31 = vsyncadd [#allocation3], %s30
      %s32 = sshll.u32 [#allocation2], 4
      %s33 = int_to_ptr.vmem [resolvable:$true] %s32
      %38 = dma.hbm_to_vmem [thread:$0]  %s0, 512, %s33, [#allocation3], 128, 128, 8
    $region5: #{transformer_downsample_block_1d.1} parent=1 // pred_fallthru
      _
    // Predicated region
    $region6: #{transformer_downsample_block_1d.1} parent=1 // pred_check
      _
    $region7: #{transformer_downsample_block_1d.1} parent=1 // pred_check_branch
      %40 = sbr.rel (0) target = $region9
    $region8: #{transformer_downsample_block_1d.1} parent=1 // pred_region
      _
    $region9: #{transformer_downsample_block_1d.1} parent=1 // pred_fallthru
      _
    // Predicated region
    $region10: #{transformer_downsample_block_1d.1} parent=1 // pred_check
      _
    $region11: #{transformer_downsample_block_1d.1} parent=1 // pred_check_branch
      %42 = sbr.rel (0) target = $region13
    $region12: #{transformer_downsample_block_1d.1} parent=1 // pred_region
      %s44 = ssub.s32 1024, 1024
      %45 = vsyncadd [#allocation6], %s44
      %s46 = sshll.u32 [#allocation5], 4
      %s47 = int_to_ptr.vmem [resolvable:$true] %s46
      %52 = dma.hbm_to_vmem [thread:$0]  %s2, 1024, %s47, [#allocation6], 128, 128, 8
    $region13: #{transformer_downsample_block_1d.1} parent=1 // pred_fallthru
      _
    // Predicated region
    $region14: #{transformer_downsample_block_1d.1} parent=1 // pred_check
      _
    $region15: #{transformer_downsample_block_1d.1} parent=1 // pred_check_branch
      %54 = sbr.rel (0) target = $region17
    $region16: #{transformer_downsample_block_1d.1} parent=1 // pred_region
      %s56 = ssub.s32 1024, 1024
      %57 = vsyncadd [#allocation6], %s56
      %s58 = sshll.u32 [#allocation7], 4
      %s59 = int_to_ptr.vmem [resolvable:$true] %s58
      %64 = dma.hbm_to_vmem [thread:$0]  %s3, 1024, %s59, [#allocation6], 128, 128, 8
    $region17: #{transformer_downsample_block_1d.1} parent=1 // pred_fallthru
      _
    // Predicated region
    $region18: #{transformer_downsample_block_1d.1} parent=1 // pred_check
      _
    $region19: #{transformer_downsample_block_1d.1} parent=1 // pred_check_branch
      %66 = sbr.rel (0) target = $region21
    $region20: #{transformer_downsample_block_1d.1} parent=1 // pred_region
      _
    $region21: #{transformer_downsample_block_1d.1} parent=1 // pred_fallthru
      _
    // Predicated region
    $region22: #{transformer_downsample_block_1d.1} parent=1 // pred_check
      _
    $region23: #{transformer_downsample_block_1d.1} parent=1 // pred_check_branch
      %68 = sbr.rel (0) target = $region25
    $region24: #{transformer_downsample_block_1d.1} parent=1 // pred_region
      %s70 = ssub.s32 512, 512
      %71 = vsyncadd [#allocation9], %s70
      %s72 = sshll.u32 [#allocation8], 4
      %s73 = int_to_ptr.vmem [resolvable:$true] %s72
      %78 = dma.hbm_to_vmem [thread:$0]  %s5, 512, %s73, [#allocation9], 128, 128, 8
    $region25: #{transformer_downsample_block_1d.1} parent=1 // pred_fallthru
      _
    // Predicated region
    $region26: #{transformer_downsample_block_1d.1} parent=1 // pred_check
      _
    $region27: #{transformer_downsample_block_1d.1} parent=1 // pred_check_branch
      %80 = sbr.rel (0) target = $region29
    $region28: #{transformer_downsample_block_1d.1} parent=1 // pred_region
      %s82 = ssub.s32 512, 512
      %83 = vsyncadd [#allocation9], %s82
      %s84 = sshll.u32 [#allocation10], 4
      %s85 = int_to_ptr.vmem [resolvable:$true] %s84
      %90 = dma.hbm_to_vmem [thread:$0]  %s6, 512, %s85, [#allocation9], 128, 128, 8
    $region29: #{transformer_downsample_block_1d.1} parent=1 // pred_fallthru
      _
    // Predicated region
    $region30: #{transformer_downsample_block_1d.1} parent=1 // pred_check
      _
    $region31: #{transformer_downsample_block_1d.1} parent=1 // pred_check_branch
      %92 = sbr.rel (0) target = $region33
    $region32: #{transformer_downsample_block_1d.1} parent=1 // pred_region
      _
    $region33: #{transformer_downsample_block_1d.1} parent=1 // pred_fallthru
      _
    // Predicated region
    $region34: #{transformer_downsample_block_1d.1} parent=1 // pred_check
      _
    $region35: #{transformer_downsample_block_1d.1} parent=1 // pred_check_branch
      %94 = sbr.rel (0) target = $region37
    $region36: #{transformer_downsample_block_1d.1} parent=1 // pred_region
      %s96 = ssub.s32 6144, 6144
      %97 = vsyncadd [#allocation12], %s96
      %s98 = sshll.u32 [#allocation11], 4
      %s99 = int_to_ptr.vmem [resolvable:$true] %s98
      %104 = dma.hbm_to_vmem [thread:$0]  %s8, 6144, %s99, [#allocation12], 192, 192, 12
    $region37: #{transformer_downsample_block_1d.1} parent=1 // pred_fallthru
      _
    // Predicated region
    $region38: #{transformer_downsample_block_1d.1} parent=1 // pred_check
      _
    $region39: #{transformer_downsample_block_1d.1} parent=1 // pred_check_branch
      %106 = sbr.rel (0) target = $region41
    $region40: #{transformer_downsample_block_1d.1} parent=1 // pred_region
      %s108 = ssub.s32 2048, 2048
      %109 = vsyncadd [#allocation12], %s108
      %s110 = sshll.u32 [#allocation13], 4
      %s111 = int_to_ptr.vmem [resolvable:$true] %s110
      %116 = dma.hbm_to_vmem [thread:$0]  %s9, 2048, %s111, [#allocation12], 64, 64, 4
    $region41: #{transformer_downsample_block_1d.1} parent=1 // pred_fallthru
      _
    // Predicated region
    $region42: #{transformer_downsample_block_1d.1} parent=1 // pred_check
      _
    $region43: #{transformer_downsample_block_1d.1} parent=1 // pred_check_branch
      %118 = sbr.rel (0) target = $region45
    $region44: #{transformer_downsample_block_1d.1} parent=1 // pred_region
      _
    $region45: #{transformer_downsample_block_1d.1} parent=1 // pred_fallthru
      _
    // Predicated region
    $region46: #{transformer_downsample_block_1d.1} parent=1 // pred_check
      _
    $region47: #{transformer_downsample_block_1d.1} parent=1 // pred_check_branch
      %120 = sbr.rel (0) target = $region49
    $region48: #{transformer_downsample_block_1d.1} parent=1 // pred_region
      %s122 = ssub.s32 8192, 8192
      %123 = vsyncadd [#allocation15], %s122
      %s124 = sshll.u32 [#allocation14], 4
      %s125 = int_to_ptr.vmem [resolvable:$true] %s124
      %130 = dma.hbm_to_vmem [thread:$0]  %s11, 8192, %s125, [#allocation15], 256, 256, 16
    $region49: #{transformer_downsample_block_1d.1} parent=1 // pred_fallthru
      _
    // Predicated region
    $region50: #{transformer_downsample_block_1d.1} parent=1 // pred_check
      _
    $region51: #{transformer_downsample_block_1d.1} parent=1 // pred_check_branch
      %132 = sbr.rel (0) target = $region53
    $region52: #{transformer_downsample_block_1d.1} parent=1 // pred_region
      %s134 = ssub.s32 128, 128
      %135 = vsyncadd [#allocation15], %s134
      %s136 = sshll.u32 [#allocation16], 4
      %s137 = int_to_ptr.vmem [resolvable:$true] %s136
      %142 = dma.hbm_to_vmem [thread:$0]  %s12, 128, %s137, [#allocation15], 64, 64, 4
    $region53: #{transformer_downsample_block_1d.1} parent=1 // pred_fallthru
      _
    // Predicated region
    $region54: #{transformer_downsample_block_1d.1} parent=1 // pred_check
      _
    $region55: #{transformer_downsample_block_1d.1} parent=1 // pred_check_branch
      %144 = sbr.rel (0) target = $region57
    $region56: #{transformer_downsample_block_1d.1} parent=1 // pred_region
      %s146 = ssub.s32 4096, 4096
      %147 = vsyncadd [#allocation18], %s146
      %s148 = sshll.u32 [#allocation17], 4
      %s149 = int_to_ptr.vmem [resolvable:$true] %s148
      %154 = dma.hbm_to_vmem [thread:$0]  %s13, 4096, %s149, [#allocation18], 64, 64, 4
    $region57: #{transformer_downsample_block_1d.1} parent=1 // pred_fallthru
      _
    // Predicated region
    $region58: #{transformer_downsample_block_1d.1} parent=1 // pred_check
      _
    $region59: #{transformer_downsample_block_1d.1} parent=1 // pred_check_branch
      %156 = sbr.rel (0) target = $region61
    $region60: #{transformer_downsample_block_1d.1} parent=1 // pred_region
      %s158 = ssub.s32 2048, 2048
      %159 = vsyncadd [#allocation18], %s158
      %s160 = sshll.u32 [#allocation19], 4
      %s161 = int_to_ptr.vmem [resolvable:$true] %s160
      %166 = dma.hbm_to_vmem [thread:$0]  %s14, 2048, %s161, [#allocation18], 64, 64, 4
    $region61: #{transformer_downsample_block_1d.1} parent=1 // pred_fallthru
      _
    // Predicated region
    $region62: #{transformer_downsample_block_1d.1} parent=1 // pred_check
      _
    $region63: #{transformer_downsample_block_1d.1} parent=1 // pred_check_branch
      %168 = sbr.rel (0) target = $region65
    $region64: #{transformer_downsample_block_1d.1} parent=1 // pred_region
      %169 = dma.done [#allocation3], 512
    $region65: #{transformer_downsample_block_1d.1} parent=1 // pred_fallthru
      _
    // Predicated region
    $region66: #{transformer_downsample_block_1d.1} parent=1 // pred_check
      _
    $region67: #{transformer_downsample_block_1d.1} parent=1 // pred_check_branch
      %171 = sbr.rel (0) target = $region69
    $region68: #{transformer_downsample_block_1d.1} parent=1 // pred_region
      %172 = dma.done [#allocation6], 1024
    $region69: #{transformer_downsample_block_1d.1} parent=1 // pred_fallthru
      _
    // Predicated region
    $region70: #{transformer_downsample_block_1d.1} parent=1 // pred_check
      _
    $region71: #{transformer_downsample_block_1d.1} parent=1 // pred_check_branch
      %174 = sbr.rel (0) target = $region73
    $region72: #{transformer_downsample_block_1d.1} parent=1 // pred_region
      %175 = dma.done [#allocation6], 1024
    $region73: #{transformer_downsample_block_1d.1} parent=1 // pred_fallthru
      _
    // Predicated region
    $region74: #{transformer_downsample_block_1d.1} parent=1 // pred_check
      _
    $region75: #{transformer_downsample_block_1d.1} parent=1 // pred_check_branch
      %177 = sbr.rel (0) target = $region77
    $region76: #{transformer_downsample_block_1d.1} parent=1 // pred_region
      %178 = dma.done [#allocation9], 512
    $region77: #{transformer_downsample_block_1d.1} parent=1 // pred_fallthru
      _
    // Predicated region
    $region78: #{transformer_downsample_block_1d.1} parent=1 // pred_check
      _
    $region79: #{transformer_downsample_block_1d.1} parent=1 // pred_check_branch
      %180 = sbr.rel (0) target = $region81
    $region80: #{transformer_downsample_block_1d.1} parent=1 // pred_region
      %181 = dma.done [#allocation9], 512
    $region81: #{transformer_downsample_block_1d.1} parent=1 // pred_fallthru
      _
    // Predicated region
    $region82: #{transformer_downsample_block_1d.1} parent=1 // pred_check
      _
    $region83: #{transformer_downsample_block_1d.1} parent=1 // pred_check_branch
      %183 = sbr.rel (0) target = $region85
    $region84: #{transformer_downsample_block_1d.1} parent=1 // pred_region
      %184 = dma.done [#allocation12], 6144
    $region85: #{transformer_downsample_block_1d.1} parent=1 // pred_fallthru
      _
    // Predicated region
    $region86: #{transformer_downsample_block_1d.1} parent=1 // pred_check
      _
    $region87: #{transformer_downsample_block_1d.1} parent=1 // pred_check_branch
      %186 = sbr.rel (0) target = $region89
    $region88: #{transformer_downsample_block_1d.1} parent=1 // pred_region
      %187 = dma.done [#allocation12], 2048
    $region89: #{transformer_downsample_block_1d.1} parent=1 // pred_fallthru
      _
    // Predicated region
    $region90: #{transformer_downsample_block_1d.1} parent=1 // pred_check
      _
    $region91: #{transformer_downsample_block_1d.1} parent=1 // pred_check_branch
      %189 = sbr.rel (0) target = $region93
    $region92: #{transformer_downsample_block_1d.1} parent=1 // pred_region
      %190 = dma.done [#allocation15], 8192
    $region93: #{transformer_downsample_block_1d.1} parent=1 // pred_fallthru
      _
    // Predicated region
    $region94: #{transformer_downsample_block_1d.1} parent=1 // pred_check
      _
    $region95: #{transformer_downsample_block_1d.1} parent=1 // pred_check_branch
      %192 = sbr.rel (0) target = $region97
    $region96: #{transformer_downsample_block_1d.1} parent=1 // pred_region
      %193 = dma.done [#allocation15], 128
    $region97: #{transformer_downsample_block_1d.1} parent=1 // pred_fallthru
      _
    // Predicated region
    $region98: #{transformer_downsample_block_1d.1} parent=1 // pred_check
      _
    $region99: #{transformer_downsample_block_1d.1} parent=1 // pred_check_branch
      %195 = sbr.rel (0) target = $region101
    $region100: #{transformer_downsample_block_1d.1} parent=1 // pred_region
      %196 = dma.done [#allocation18], 4096
    $region101: #{transformer_downsample_block_1d.1} parent=1 // pred_fallthru
      _
    // Predicated region
    $region102: #{transformer_downsample_block_1d.1} parent=1 // pred_check
      _
    $region103: #{transformer_downsample_block_1d.1} parent=1 // pred_check_branch
      %198 = sbr.rel (0) target = $region105
    $region104: #{transformer_downsample_block_1d.1} parent=1 // pred_region
      %199 = dma.done [#allocation18], 2048
    $region105: #{transformer_downsample_block_1d.1} parent=1 // pred_fallthru
      _
    %v201 = vld [vmem:[#allocation2] sm:$0xff]
    %v202 = vld [vmem:[#allocation2 + $0x8] sm:$0xff]
    %v203 = vld [vmem:[#allocation2 + $0x10] sm:$0xff]
    %v204 = vld [vmem:[#allocation2 + $0x18] sm:$0xff]
    %v205 = vpack.c.bf16 %v202, %v201
    %v206 = vpack.c.bf16 %v204, %v203
    %v207 = vld [vmem:[%s1] sm:$0xf]
    %v208 = vld [vmem:[%s1 + $0x4] sm:$0xf]
    %v209 = vld [vmem:[%s1 + $0x8] sm:$0xf]
    %v210 = vld [vmem:[%s1 + $0xc] sm:$0xf]
    %v215 = vunpack.c.l.b16 %v207
    %v216 = vunpack.c.l.b16 %v208
    %v217 = vunpack.c.l.b16 %v209
    %v218 = vunpack.c.l.b16 %v210
    %v219 = vpack.c.b16 %v216, %v215
    %v220 = vpack.c.b16 %v218, %v217
    %vm223 = vcmask 261120
    %v225 = vsel %vm223, %v205, 0
    %v228 = vsel %vm223, %v206, 0
    %230 = vmatprep.subr.bf16.mxu0 0
    %231 = vmatpush1.bf16.msra.mxu0 0
    %232 = vmatprep.subr.bf16.mxu0 0
    %233 = vmatpush1.bf16.msra.mxu0 0
    %234 = vmatprep.subr.bf16.mxu0 0
    %235 = vmatpush1.bf16.msra.mxu0 0
    %236 = vmatprep.subr.bf16.mxu0 0
    %237 = vmatpush1.bf16.msra.mxu0 0
    %238 = vmatprep.subr.bf16.mxu0 0
    %239 = vmatpush1.bf16.msra.mxu0 0
    %240 = vmatprep.subr.bf16.mxu0 0
    %241 = vmatpush1.bf16.msra.mxu0 0
    %242 = vmatprep.subr.bf16.mxu0 0
    %243 = vmatpush1.bf16.msra.mxu0 %v220
    %244 = vmatprep.subr.bf16.mxu0 0
    %245 = vmatpush1.bf16.msra.mxu0 %v219
    %246 = vmatprep.subr.bf16.mxu0 0
    %247 = vmatpush2.bf16.msra.mxu0 0
    %248 = vmatprep.subr.bf16.mxu0 0
    %249 = vmatpush2.bf16.msra.mxu0 0
    %250 = vmatprep.subr.bf16.mxu0 0
    %251 = vmatpush2.bf16.msra.mxu0 0
    %252 = vmatprep.subr.bf16.mxu0 0
    %253 = vmatpush2.bf16.msra.mxu0 0
    %254 = vmatprep.subr.bf16.mxu0 0
    %255 = vmatpush2.bf16.msra.mxu0 0
    %256 = vmatprep.subr.bf16.mxu0 0
    %257 = vmatpush2.bf16.msra.mxu0 0
    %258 = vmatprep.subr.bf16.mxu0 0
    %259 = vmatpush2.bf16.msra.mxu0 0
    %260 = vmatprep.subr.bf16.mxu0 0
    %261 = vmatpush2.bf16.msra.mxu0 0
    %262 = vmatprep.mubr.bf16.mxu0 0
    %263 = vmatmul.mubr.bf16.gmra.mxu0 %v225
    %v264 = vpop.f32.mrf.mxu0
    %v265 = vadd.f32 0.0, %v264
    %v266 = vpop.f32.mrf.mxu0
    %v267 = vpop.f32.mrf.mxu0
    %v268 = vadd.f32 0.0, %v267
    %v269 = vpop.f32.mrf.mxu0
    %270 = vmatprep.mubr.bf16.mxu0 0
    %271 = vmatmul.mubr.bf16.gmra.mxu0 %v228
    %v272 = vpop.f32.mrf.mxu0
    %v273 = vadd.f32 0.0, %v272
    %v274 = vpop.f32.mrf.mxu0
    %v275 = vpop.f32.mrf.mxu0
    %v276 = vadd.f32 0.0, %v275
    %v277 = vpop.f32.mrf.mxu0
    %278 = vdwg.mxu0
    %v279 = vld [vmem:[#allocation5] sm:$0xff]
    %v280 = vld [vmem:[#allocation5 + $0x8] sm:$0xff]
    %v281 = vld [vmem:[#allocation5 + $0x10] sm:$0xff]
    %v282 = vld [vmem:[#allocation5 + $0x18] sm:$0xff]
    %s283 = scalar_lea.vmem [#allocation5], 32
    %v284 = vld [vmem:[%s283] sm:$0xff]
    %v285 = vld [vmem:[%s283 + $0x8] sm:$0xff]
    %v286 = vld [vmem:[%s283 + $0x10] sm:$0xff]
    %v287 = vld [vmem:[%s283 + $0x18] sm:$0xff]
    %v288 = vld [vmem:[#allocation7] sm:$0xff]
    %v289 = vld [vmem:[#allocation7 + $0x8] sm:$0xff]
    %v290 = vld [vmem:[#allocation7 + $0x10] sm:$0xff]
    %v291 = vld [vmem:[#allocation7 + $0x18] sm:$0xff]
    %s292 = scalar_lea.vmem [#allocation7], 32
    %v293 = vld [vmem:[%s292] sm:$0xff]
    %v294 = vld [vmem:[%s292 + $0x8] sm:$0xff]
    %v295 = vld [vmem:[%s292 + $0x10] sm:$0xff]
    %v296 = vld [vmem:[%s292 + $0x18] sm:$0xff]
    %v297 = vadd.f32 %v279, %v284
    %v298 = vadd.f32 %v280, %v285
    %v299 = vadd.f32 %v281, %v286
    %v300 = vadd.f32 %v282, %v287
    %v301 = vadd.f32 %v288, %v293
    %v302 = vadd.f32 %v289, %v294
    %v303 = vadd.f32 %v290, %v295
    %v304 = vadd.f32 %v291, %v296
    %v305 = vld [vmem:[#allocation8] sm:$0xff]
    %v306 = vld [vmem:[#allocation8 + $0x8] sm:$0xff]
    %v307 = vld [vmem:[#allocation8 + $0x10] sm:$0xff]
    %v308 = vld [vmem:[#allocation8 + $0x18] sm:$0xff]
    %v309 = vld [vmem:[%s7] sm:$0x1]
    %310 = vadd.xlane.f32.xlu0 %v265
    %v311 = vpop.xlane.xlu0 %310
    %312 = vadd.xlane.f32.xlu0 %v268
    %v313 = vpop.xlane.xlu0 %312
    %314 = vadd.xlane.f32.xlu0 %v273
    %v315 = vpop.xlane.xlu0 %314
    %316 = vadd.xlane.f32.xlu0 %v276
    %v317 = vpop.xlane.xlu0 %316
    %v318 = vrcp.pop 128.0
    %v319 = vmul.f32 %v311, %v318
    %v320 = vmul.f32 %v313, %v318
    %v321 = vmul.f32 %v315, %v318
    %v322 = vmul.f32 %v317, %v318
    %v323 = vsub.f32 %v265, %v319
    %v324 = vsub.f32 %v268, %v320
    %v325 = vsub.f32 %v273, %v321
    %v326 = vsub.f32 %v276, %v322
    %v327 = vmul.f32 %v323, %v323
    %v328 = vmul.f32 %v324, %v324
    %v329 = vmul.f32 %v325, %v325
    %v330 = vmul.f32 %v326, %v326
    %331 = vadd.xlane.f32.xlu0 %v327
    %v332 = vpop.xlane.xlu0 %331
    %333 = vadd.xlane.f32.xlu0 %v328
    %v334 = vpop.xlane.xlu0 %333
    %335 = vadd.xlane.f32.xlu0 %v329
    %v336 = vpop.xlane.xlu0 %335
    %337 = vadd.xlane.f32.xlu0 %v330
    %v338 = vpop.xlane.xlu0 %337
    %v339 = vmul.f32 %v332, %v318
    %v340 = vmul.f32 %v334, %v318
    %v341 = vmul.f32 %v336, %v318
    %v342 = vmul.f32 %v338, %v318
    %v343 = vadd.f32 %v339, 1e-05
    %v344 = vadd.f32 %v340, 1e-05
    %v345 = vadd.f32 %v341, 1e-05
    %v346 = vadd.f32 %v342, 1e-05
    %v347 = vrsqrt.pop %v343
    %v348 = vrsqrt.pop %v344
    %v349 = vrsqrt.pop %v345
    %v350 = vrsqrt.pop %v346
    %v351 = vmul.f32 %v323, %v347
    %v352 = vmul.f32 %v324, %v348
    %v353 = vmul.f32 %v325, %v349
    %v354 = vmul.f32 %v326, %v350
    %v356 = vlaneseq
    %v357 = vshrl.u32 %v356, 7
    %v358 = vsub.s32 0, %v357
    %v359 = vrot.slane %v309, %v358
    %v361 = vmul.f32 %v351, %v359
    %v362 = vmul.f32 %v352, %v359
    %v363 = vmul.f32 %v353, %v359
    %v364 = vmul.f32 %v354, %v359
    %v365 = vpack.c.bf16 %v362, %v361
    %v366 = vpack.c.bf16 %v364, %v363
    %v367 = vld [vmem:[#allocation11] sm:$0xff]
    %v368 = vld [vmem:[#allocation11 + $0x8] sm:$0xf]
    %v369 = vld [vmem:[#allocation11 + $0xc] sm:$0xff]
    %v370 = vld [vmem:[#allocation11 + $0x14] sm:$0xf]
    %v371 = vld [vmem:[#allocation11 + $0x18] sm:$0xff]
    %v372 = vld [vmem:[#allocation11 + $0x20] sm:$0xf]
    %v373 = vld [vmem:[#allocation11 + $0x24] sm:$0xff]
    %v374 = vld [vmem:[#allocation11 + $0x2c] sm:$0xf]
    %v375 = vld [vmem:[#allocation11 + $0x30] sm:$0xff]
    %v376 = vld [vmem:[#allocation11 + $0x38] sm:$0xf]
    %v377 = vld [vmem:[#allocation11 + $0x3c] sm:$0xff]
    %v378 = vld [vmem:[#allocation11 + $0x44] sm:$0xf]
    %v379 = vld [vmem:[#allocation11 + $0x48] sm:$0xff]
    %v380 = vld [vmem:[#allocation11 + $0x50] sm:$0xf]
    %v381 = vld [vmem:[#allocation11 + $0x54] sm:$0xff]
    %v382 = vld [vmem:[#allocation11 + $0x5c] sm:$0xf]
    %v383 = vld [vmem:[#allocation11 + $0x60] sm:$0xff]
    %v384 = vld [vmem:[#allocation11 + $0x68] sm:$0xf]
    %v385 = vld [vmem:[#allocation11 + $0x6c] sm:$0xff]
    %v386 = vld [vmem:[#allocation11 + $0x74] sm:$0xf]
    %v387 = vld [vmem:[#allocation11 + $0x78] sm:$0xff]
    %v388 = vld [vmem:[#allocation11 + $0x80] sm:$0xf]
    %v389 = vld [vmem:[#allocation11 + $0x84] sm:$0xff]
    %v390 = vld [vmem:[#allocation11 + $0x8c] sm:$0xf]
    %v391 = vld [vmem:[#allocation11 + $0x90] sm:$0xff]
    %v392 = vld [vmem:[#allocation11 + $0x98] sm:$0xf]
    %v393 = vld [vmem:[#allocation11 + $0x9c] sm:$0xff]
    %v394 = vld [vmem:[#allocation11 + $0xa4] sm:$0xf]
    %v395 = vld [vmem:[#allocation11 + $0xa8] sm:$0xff]
    %v396 = vld [vmem:[#allocation11 + $0xb0] sm:$0xf]
    %v397 = vld [vmem:[#allocation11 + $0xb4] sm:$0xff]
    %v398 = vld [vmem:[#allocation11 + $0xbc] sm:$0xf]
    %v431 = vunpack.c.l.b16 %v367
    %v432 = vunpack.c.h.b16 %v367
    %v433 = vunpack.c.l.b16 %v368
    %v434 = vunpack.c.l.b16 %v369
    %v435 = vunpack.c.h.b16 %v369
    %v436 = vunpack.c.l.b16 %v370
    %v437 = vunpack.c.l.b16 %v371
    %v438 = vunpack.c.h.b16 %v371
    %v439 = vunpack.c.l.b16 %v372
    %v440 = vunpack.c.l.b16 %v373
    %v441 = vunpack.c.h.b16 %v373
    %v442 = vunpack.c.l.b16 %v374
    %v443 = vunpack.c.l.b16 %v375
    %v444 = vunpack.c.h.b16 %v375
    %v445 = vunpack.c.l.b16 %v376
    %v446 = vunpack.c.l.b16 %v377
    %v447 = vunpack.c.h.b16 %v377
    %v448 = vunpack.c.l.b16 %v378
    %v449 = vunpack.c.l.b16 %v379
    %v450 = vunpack.c.h.b16 %v379
    %v451 = vunpack.c.l.b16 %v380
    %v452 = vunpack.c.l.b16 %v381
    %v453 = vunpack.c.h.b16 %v381
    %v454 = vunpack.c.l.b16 %v382
    %v455 = vunpack.c.l.b16 %v383
    %v456 = vunpack.c.h.b16 %v383
    %v457 = vunpack.c.l.b16 %v384
    %v458 = vunpack.c.l.b16 %v385
    %v459 = vunpack.c.h.b16 %v385
    %v460 = vunpack.c.l.b16 %v386
    %v461 = vunpack.c.l.b16 %v387
    %v462 = vunpack.c.h.b16 %v387
    %v463 = vunpack.c.l.b16 %v388
    %v464 = vunpack.c.l.b16 %v389
    %v465 = vunpack.c.h.b16 %v389
    %v466 = vunpack.c.l.b16 %v390
    %v467 = vunpack.c.l.b16 %v391
    %v468 = vunpack.c.h.b16 %v391
    %v469 = vunpack.c.l.b16 %v392
    %v470 = vunpack.c.l.b16 %v393
    %v471 = vunpack.c.h.b16 %v393
    %v472 = vunpack.c.l.b16 %v394
    %v473 = vunpack.c.l.b16 %v395
    %v474 = vunpack.c.h.b16 %v395
    %v475 = vunpack.c.l.b16 %v396
    %v476 = vunpack.c.l.b16 %v397
    %v477 = vunpack.c.h.b16 %v397
    %v478 = vunpack.c.l.b16 %v398
    %v479 = vpack.c.b16 %v434, %v431
    %v480 = vpack.c.b16 %v435, %v432
    %v481 = vpack.c.b16 %v436, %v433
    %v482 = vpack.c.b16 %v440, %v437
    %v483 = vpack.c.b16 %v441, %v438
    %v484 = vpack.c.b16 %v442, %v439
    %v485 = vpack.c.b16 %v446, %v443
    %v486 = vpack.c.b16 %v447, %v444
    %v487 = vpack.c.b16 %v448, %v445
    %v488 = vpack.c.b16 %v452, %v449
    %v489 = vpack.c.b16 %v453, %v450
    %v490 = vpack.c.b16 %v454, %v451
    %v491 = vpack.c.b16 %v458, %v455
    %v492 = vpack.c.b16 %v459, %v456
    %v493 = vpack.c.b16 %v460, %v457
    %v494 = vpack.c.b16 %v464, %v461
    %v495 = vpack.c.b16 %v465, %v462
    %v496 = vpack.c.b16 %v466, %v463
    %v497 = vpack.c.b16 %v470, %v467
    %v498 = vpack.c.b16 %v471, %v468
    %v499 = vpack.c.b16 %v472, %v469
    %v500 = vpack.c.b16 %v476, %v473
    %v501 = vpack.c.b16 %v477, %v474
    %v502 = vpack.c.b16 %v478, %v475
    %527 = vmatprep.subr.bf16.mxu0 %v501
    %528 = vmatpush1.bf16.msra.mxu0 %v500
    %529 = vmatprep.subr.bf16.mxu0 %v498
    %530 = vmatpush1.bf16.msra.mxu0 %v497
    %531 = vmatprep.subr.bf16.mxu0 %v495
    %532 = vmatpush1.bf16.msra.mxu0 %v494
    %533 = vmatprep.subr.bf16.mxu0 %v492
    %534 = vmatpush1.bf16.msra.mxu0 %v491
    %535 = vmatprep.subr.bf16.mxu0 %v489
    %536 = vmatpush1.bf16.msra.mxu0 %v488
    %537 = vmatprep.subr.bf16.mxu0 %v486
    %538 = vmatpush1.bf16.msra.mxu0 %v485
    %539 = vmatprep.subr.bf16.mxu0 %v483
    %540 = vmatpush1.bf16.msra.mxu0 %v482
    %541 = vmatprep.subr.bf16.mxu0 %v480
    %542 = vmatpush1.bf16.msra.mxu0 %v479
    %543 = vmatprep.subr.bf16.mxu0 0
    %544 = vmatpush2.bf16.msra.mxu0 0
    %545 = vmatprep.subr.bf16.mxu0 0
    %546 = vmatpush2.bf16.msra.mxu0 0
    %547 = vmatprep.subr.bf16.mxu0 0
    %548 = vmatpush2.bf16.msra.mxu0 0
    %549 = vmatprep.subr.bf16.mxu0 0
    %550 = vmatpush2.bf16.msra.mxu0 0
    %551 = vmatprep.subr.bf16.mxu0 0
    %552 = vmatpush2.bf16.msra.mxu0 0
    %553 = vmatprep.subr.bf16.mxu0 0
    %554 = vmatpush2.bf16.msra.mxu0 0
    %555 = vmatprep.subr.bf16.mxu0 0
    %556 = vmatpush2.bf16.msra.mxu0 0
    %557 = vmatprep.subr.bf16.mxu0 0
    %558 = vmatpush2.bf16.msra.mxu0 0
    %559 = vmatprep.mubr.bf16.mxu0 0
    %560 = vmatmul.mubr.bf16.gmra.mxu0 %v365
    %v561 = vpop.f32.mrf.mxu0
    %v562 = vadd.f32 0.0, %v561
    %v563 = vpop.f32.mrf.mxu0
    %v564 = vadd.f32 0.0, %v563
    %v565 = vpop.f32.mrf.mxu0
    %v566 = vadd.f32 0.0, %v565
    %v567 = vpop.f32.mrf.mxu0
    %v568 = vadd.f32 0.0, %v567
    %569 = vmatprep.mubr.bf16.mxu0 0
    %570 = vmatmul.mubr.bf16.gmra.mxu0 %v366
    %v571 = vpop.f32.mrf.mxu0
    %v572 = vadd.f32 0.0, %v571
    %v573 = vpop.f32.mrf.mxu0
    %v574 = vadd.f32 0.0, %v573
    %v575 = vpop.f32.mrf.mxu0
    %v576 = vadd.f32 0.0, %v575
    %v577 = vpop.f32.mrf.mxu0
    %v578 = vadd.f32 0.0, %v577
    %579 = vdwg.mxu0
    %580 = vmatprep.subr.bf16.mxu0 0
    %581 = vmatpush1.bf16.msra.mxu0 %v502
    %582 = vmatprep.subr.bf16.mxu0 0
    %583 = vmatpush1.bf16.msra.mxu0 %v499
    %584 = vmatprep.subr.bf16.mxu0 0
    %585 = vmatpush1.bf16.msra.mxu0 %v496
    %586 = vmatprep.subr.bf16.mxu0 0
    %587 = vmatpush1.bf16.msra.mxu0 %v493
    %588 = vmatprep.subr.bf16.mxu0 0
    %589 = vmatpush1.bf16.msra.mxu0 %v490
    %590 = vmatprep.subr.bf16.mxu0 0
    %591 = vmatpush1.bf16.msra.mxu0 %v487
    %592 = vmatprep.subr.bf16.mxu0 0
    %593 = vmatpush1.bf16.msra.mxu0 %v484
    %594 = vmatprep.subr.bf16.mxu0 0
    %595 = vmatpush1.bf16.msra.mxu0 %v481
    %596 = vmatprep.subr.bf16.mxu0 0
    %597 = vmatpush2.bf16.msra.mxu0 0
    %598 = vmatprep.subr.bf16.mxu0 0
    %599 = vmatpush2.bf16.msra.mxu0 0
    %600 = vmatprep.subr.bf16.mxu0 0
    %601 = vmatpush2.bf16.msra.mxu0 0
    %602 = vmatprep.subr.bf16.mxu0 0
    %603 = vmatpush2.bf16.msra.mxu0 0
    %604 = vmatprep.subr.bf16.mxu0 0
    %605 = vmatpush2.bf16.msra.mxu0 0
    %606 = vmatprep.subr.bf16.mxu0 0
    %607 = vmatpush2.bf16.msra.mxu0 0
    %608 = vmatprep.subr.bf16.mxu0 0
    %609 = vmatpush2.bf16.msra.mxu0 0
    %610 = vmatprep.subr.bf16.mxu0 0
    %611 = vmatpush2.bf16.msra.mxu0 0
    %612 = vmatprep.mubr.bf16.mxu0 0
    %613 = vmatmul.mubr.bf16.gmra.mxu0 %v365
    %v614 = vpop.f32.mrf.mxu0
    %v615 = vadd.f32 0.0, %v614
    %v616 = vpop.f32.mrf.mxu0
    %v617 = vpop.f32.mrf.mxu0
    %v618 = vadd.f32 0.0, %v617
    %v619 = vpop.f32.mrf.mxu0
    %620 = vmatprep.mubr.bf16.mxu0 0
    %621 = vmatmul.mubr.bf16.gmra.mxu0 %v366
    %v622 = vpop.f32.mrf.mxu0
    %v623 = vadd.f32 0.0, %v622
    %v624 = vpop.f32.mrf.mxu0
    %v625 = vpop.f32.mrf.mxu0
    %v626 = vadd.f32 0.0, %v625
    %v627 = vpop.f32.mrf.mxu0
    %628 = vdwg.mxu0
    %629 = vrot.lane.b32.xlu0 %v562, 64
    %v630 = vpop.permute.xlu0 %629
    %631 = vrot.lane.b32.xlu0 %v566, 64
    %v632 = vpop.permute.xlu0 %631
    %633 = vrot.lane.b32.xlu0 %v572, 64
    %v634 = vpop.permute.xlu0 %633
    %635 = vrot.lane.b32.xlu0 %v576, 64
    %v636 = vpop.permute.xlu0 %635
    %637 = vrot.lane.b32.xlu0 %v564, 64
    %v638 = vpop.permute.xlu0 %637
    %639 = vrot.lane.b32.xlu0 %v568, 64
    %v640 = vpop.permute.xlu0 %639
    %641 = vrot.lane.b32.xlu0 %v574, 64
    %v642 = vpop.permute.xlu0 %641
    %643 = vrot.lane.b32.xlu0 %v578, 64
    %v644 = vpop.permute.xlu0 %643
    %v645 = vmul.f32 %v564, %v297
    %v646 = vmul.f32 %v568, %v298
    %v647 = vmul.f32 %v574, %v299
    %v648 = vmul.f32 %v578, %v300
    %v649 = vmul.f32 %v638, %v301
    %v650 = vmul.f32 %v640, %v302
    %v651 = vmul.f32 %v642, %v303
    %v652 = vmul.f32 %v644, %v304
    %v653 = vadd.f32 %v645, %v649
    %v654 = vadd.f32 %v646, %v650
    %v655 = vadd.f32 %v647, %v651
    %v656 = vadd.f32 %v648, %v652
    %v657 = vmul.f32 %v562, %v279
    %v658 = vmul.f32 %v566, %v280
    %v659 = vmul.f32 %v572, %v281
    %v660 = vmul.f32 %v576, %v282
    %v661 = vmul.f32 %v630, %v288
    %v662 = vmul.f32 %v632, %v289
    %v663 = vmul.f32 %v634, %v290
    %v664 = vmul.f32 %v636, %v291
    %v665 = vadd.f32 %v657, %v661
    %v666 = vadd.f32 %v658, %v662
    %v667 = vadd.f32 %v659, %v663
    %v668 = vadd.f32 %v660, %v664
    %669 = vmatprep.subr.mxu0 0.0
    %670 = vmatpush1.xpose.msra.mxu0 0.0
    %671 = vmatprep.subr.mxu0 0.0
    %672 = vmatpush1.xpose.msra.mxu0 0.0
    %673 = vmatprep.subr.mxu0 0.0
    %674 = vmatpush1.xpose.msra.mxu0 0.0
    %675 = vmatprep.subr.mxu0 0.0
    %676 = vmatpush1.xpose.msra.mxu0 0.0
    %677 = vmatprep.subr.mxu0 0.0
    %678 = vmatpush1.xpose.msra.mxu0 0.0
    %679 = vmatprep.subr.mxu0 0.0
    %680 = vmatpush1.xpose.msra.mxu0 0.0
    %681 = vmatprep.subr.mxu0 0.0
    %682 = vmatpush1.xpose.msra.mxu0 0.0
    %683 = vmatprep.subr.mxu0 0.0
    %684 = vmatpush1.xpose.msra.mxu0 0.0
    %685 = vmatprep.subr.mxu0 0.0
    %686 = vmatpush1.xpose.msra.mxu0 0.0
    %687 = vmatprep.subr.mxu0 0.0
    %688 = vmatpush1.xpose.msra.mxu0 0.0
    %689 = vmatprep.subr.mxu0 0.0
    %690 = vmatpush1.xpose.msra.mxu0 0.0
    %691 = vmatprep.subr.mxu0 0.0
    %692 = vmatpush1.xpose.msra.mxu0 0.0
    %693 = vmatprep.subr.mxu0 0.0
    %694 = vmatpush1.xpose.msra.mxu0 %v656
    %695 = vmatprep.subr.mxu0 0.0
    %696 = vmatpush1.xpose.msra.mxu0 %v655
    %697 = vmatprep.subr.mxu0 0.0
    %698 = vmatpush1.xpose.msra.mxu0 %v654
    %699 = vmatprep.subr.mxu0 0.0
    %700 = vmatpush1.xpose.msra.mxu0 %v653
    %701 = vmatprep.subr.mxu0 0.0
    %702 = vmatpush2.xpose.msra.mxu0 0.0
    %703 = vmatprep.subr.mxu0 0.0
    %704 = vmatpush2.xpose.msra.mxu0 0.0
    %705 = vmatprep.subr.mxu0 0.0
    %706 = vmatpush2.xpose.msra.mxu0 0.0
    %707 = vmatprep.subr.mxu0 0.0
    %708 = vmatpush2.xpose.msra.mxu0 0.0
    %709 = vmatprep.subr.mxu0 0.0
    %710 = vmatpush2.xpose.msra.mxu0 0.0
    %711 = vmatprep.subr.mxu0 0.0
    %712 = vmatpush2.xpose.msra.mxu0 0.0
    %713 = vmatprep.subr.mxu0 0.0
    %714 = vmatpush2.xpose.msra.mxu0 0.0
    %715 = vmatprep.subr.mxu0 0.0
    %716 = vmatpush2.xpose.msra.mxu0 0.0
    %717 = vmatprep.subr.mxu0 0.0
    %718 = vmatpush2.xpose.msra.mxu0 0.0
    %719 = vmatprep.subr.mxu0 0.0
    %720 = vmatpush2.xpose.msra.mxu0 0.0
    %721 = vmatprep.subr.mxu0 0.0
    %722 = vmatpush2.xpose.msra.mxu0 0.0
    %723 = vmatprep.subr.mxu0 0.0
    %724 = vmatpush2.xpose.msra.mxu0 0.0
    %725 = vmatprep.subr.mxu0 0.0
    %726 = vmatpush2.xpose.msra.mxu0 0.0
    %727 = vmatprep.subr.mxu0 0.0
    %728 = vmatpush2.xpose.msra.mxu0 0.0
    %729 = vmatprep.subr.mxu0 0.0
    %730 = vmatpush2.xpose.msra.mxu0 0.0
    %731 = vmatprep.subr.mxu0 0.0
    %732 = vmatpush2.xpose.msra.mxu0 0.0
    %733 = vmatprep.mubr.f32.mxu0 0.0
    %734 = vmatmul.mubr.f32.gmra.mxu0 %v665
    %v735 = vpop.f32.mrf.mxu0
    %v736 = vadd.f32 %v305, %v735
    %v737 = vpop.f32.mrf.mxu0
    %738 = vmatprep.mubr.f32.mxu0 0.0
    %739 = vmatmul.mubr.f32.gmra.mxu0 %v666
    %v740 = vpop.f32.mrf.mxu0
    %v741 = vadd.f32 %v306, %v740
    %v742 = vpop.f32.mrf.mxu0
    %743 = vmatprep.mubr.f32.mxu0 0.0
    %744 = vmatmul.mubr.f32.gmra.mxu0 %v667
    %v745 = vpop.f32.mrf.mxu0
    %v746 = vadd.f32 %v307, %v745
    %v747 = vpop.f32.mrf.mxu0
    %748 = vmatprep.mubr.f32.mxu0 0.0
    %749 = vmatmul.mubr.f32.gmra.mxu0 %v668
    %v750 = vpop.f32.mrf.mxu0
    %v751 = vadd.f32 %v308, %v750
    %v752 = vpop.f32.mrf.mxu0
    %753 = vdwg.mxu0
    %v754 = vsel %vm223, %v736, -inf
    %755 = vmax.xlane.f32.xlu0 %v754
    %v756 = vpop.xlane.xlu0 %755
    %v757 = vsel %vm223, %v741, -inf
    %758 = vmax.xlane.f32.xlu0 %v757
    %v759 = vpop.xlane.xlu0 %758
    %v760 = vsel %vm223, %v746, -inf
    %761 = vmax.xlane.f32.xlu0 %v760
    %v762 = vpop.xlane.xlu0 %761
    %v763 = vsel %vm223, %v751, -inf
    %764 = vmax.xlane.f32.xlu0 %v763
    %v765 = vpop.xlane.xlu0 %764
    %v766 = vsub.f32 %v736, %v756
    %v767 = vsub.f32 %v741, %v759
    %v768 = vsub.f32 %v746, %v762
    %v769 = vsub.f32 %v751, %v765
    %v770 = vmul.f32 %v766, 1.442695
    %v771 = vpow.pop %v770
    %v772 = vmul.f32 %v767, 1.442695
    %v773 = vpow.pop %v772
    %v774 = vmul.f32 %v768, 1.442695
    %v775 = vpow.pop %v774
    %v776 = vmul.f32 %v769, 1.442695
    %v777 = vpow.pop %v776
    %v778 = vsel %vm223, %v771, 0.0
    %779 = vadd.xlane.f32.xlu0 %v778
    %v780 = vpop.xlane.xlu0 %779
    %v781 = vsel %vm223, %v773, 0.0
    %782 = vadd.xlane.f32.xlu0 %v781
    %v783 = vpop.xlane.xlu0 %782
    %v784 = vsel %vm223, %v775, 0.0
    %785 = vadd.xlane.f32.xlu0 %v784
    %v786 = vpop.xlane.xlu0 %785
    %v787 = vsel %vm223, %v777, 0.0
    %788 = vadd.xlane.f32.xlu0 %v787
    %v789 = vpop.xlane.xlu0 %788
    %v790 = vrcp.pop %v780
    %v791 = vrcp.pop %v783
    %v792 = vrcp.pop %v786
    %v793 = vrcp.pop %v789
    %v794 = vmul.f32 %v771, %v790
    %v795 = vmul.f32 %v773, %v791
    %v796 = vmul.f32 %v775, %v792
    %v797 = vmul.f32 %v777, %v793
    %v799 = vsel %vm223, %v794, 0
    %v802 = vsel %vm223, %v795, 0
    %v805 = vsel %vm223, %v796, 0
    %v808 = vsel %vm223, %v797, 0
    %810 = vmatprep.subr.mxu0 0.0
    %811 = vmatpush1.msra.mxu0 0.0
    %812 = vmatprep.subr.mxu0 0.0
    %813 = vmatpush1.msra.mxu0 0.0
    %814 = vmatprep.subr.mxu0 0.0
    %815 = vmatpush1.msra.mxu0 0.0
    %816 = vmatprep.subr.mxu0 0.0
    %817 = vmatpush1.msra.mxu0 0.0
    %818 = vmatprep.subr.mxu0 0.0
    %819 = vmatpush1.msra.mxu0 0.0
    %820 = vmatprep.subr.mxu0 0.0
    %821 = vmatpush1.msra.mxu0 0.0
    %822 = vmatprep.subr.mxu0 0.0
    %823 = vmatpush1.msra.mxu0 0.0
    %824 = vmatprep.subr.mxu0 0.0
    %825 = vmatpush1.msra.mxu0 0.0
    %826 = vmatprep.subr.mxu0 0.0
    %827 = vmatpush1.msra.mxu0 0.0
    %828 = vmatprep.subr.mxu0 0.0
    %829 = vmatpush1.msra.mxu0 0.0
    %830 = vmatprep.subr.mxu0 0.0
    %831 = vmatpush1.msra.mxu0 0.0
    %832 = vmatprep.subr.mxu0 0.0
    %833 = vmatpush1.msra.mxu0 0.0
    %834 = vmatprep.subr.mxu0 0.0
    %835 = vmatpush1.msra.mxu0 %v626
    %836 = vmatprep.subr.mxu0 0.0
    %837 = vmatpush1.msra.mxu0 %v623
    %838 = vmatprep.subr.mxu0 0.0
    %839 = vmatpush1.msra.mxu0 %v618
    %840 = vmatprep.subr.mxu0 0.0
    %841 = vmatpush1.msra.mxu0 %v615
    %842 = vmatprep.subr.mxu0 0.0
    %843 = vmatpush2.msra.mxu0 0.0
    %844 = vmatprep.subr.mxu0 0.0
    %845 = vmatpush2.msra.mxu0 0.0
    %846 = vmatprep.subr.mxu0 0.0
    %847 = vmatpush2.msra.mxu0 0.0
    %848 = vmatprep.subr.mxu0 0.0
    %849 = vmatpush2.msra.mxu0 0.0
    %850 = vmatprep.subr.mxu0 0.0
    %851 = vmatpush2.msra.mxu0 0.0
    %852 = vmatprep.subr.mxu0 0.0
    %853 = vmatpush2.msra.mxu0 0.0
    %854 = vmatprep.subr.mxu0 0.0
    %855 = vmatpush2.msra.mxu0 0.0
    %856 = vmatprep.subr.mxu0 0.0
    %857 = vmatpush2.msra.mxu0 0.0
    %858 = vmatprep.subr.mxu0 0.0
    %859 = vmatpush2.msra.mxu0 0.0
    %860 = vmatprep.subr.mxu0 0.0
    %861 = vmatpush2.msra.mxu0 0.0
    %862 = vmatprep.subr.mxu0 0.0
    %863 = vmatpush2.msra.mxu0 0.0
    %864 = vmatprep.subr.mxu0 0.0
    %865 = vmatpush2.msra.mxu0 0.0
    %866 = vmatprep.subr.mxu0 0.0
    %867 = vmatpush2.msra.mxu0 0.0
    %868 = vmatprep.subr.mxu0 0.0
    %869 = vmatpush2.msra.mxu0 0.0
    %870 = vmatprep.subr.mxu0 0.0
    %871 = vmatpush2.msra.mxu0 0.0
    %872 = vmatprep.subr.mxu0 0.0
    %873 = vmatpush2.msra.mxu0 0.0
    %874 = vmatprep.mubr.f32.mxu0 0.0
    %875 = vmatmul.mubr.f32.gmra.mxu0 %v799
    %v876 = vpop.f32.mrf.mxu0
    %v877 = vadd.f32 0.0, %v876
    %v878 = vpop.f32.mrf.mxu0
    %879 = vmatprep.mubr.f32.mxu0 0.0
    %880 = vmatmul.mubr.f32.gmra.mxu0 %v802
    %v881 = vpop.f32.mrf.mxu0
    %v882 = vadd.f32 0.0, %v881
    %v883 = vpop.f32.mrf.mxu0
    %884 = vmatprep.mubr.f32.mxu0 0.0
    %885 = vmatmul.mubr.f32.gmra.mxu0 %v805
    %v886 = vpop.f32.mrf.mxu0
    %v887 = vadd.f32 0.0, %v886
    %v888 = vpop.f32.mrf.mxu0
    %889 = vmatprep.mubr.f32.mxu0 0.0
    %890 = vmatmul.mubr.f32.gmra.mxu0 %v808
    %v891 = vpop.f32.mrf.mxu0
    %v892 = vadd.f32 0.0, %v891
    %v893 = vpop.f32.mrf.mxu0
    %894 = vdwg.mxu0
    %v895 = vld [vmem:[%s4] sm:$0x1]
    %v897 = vlaneseq
    %v898 = vshrl.u32 %v897, 7
    %v899 = vsub.s32 0, %v898
    %v900 = vrot.slane %v895, %v899
    %v902 = vmul.f32 %v877, %v900
    %v903 = vmul.f32 %v882, %v900
    %v904 = vmul.f32 %v887, %v900
    %v905 = vmul.f32 %v892, %v900
    %v906 = vmul.f32 %v562, %v284
    %v907 = vmul.f32 %v566, %v285
    %v908 = vmul.f32 %v572, %v286
    %v909 = vmul.f32 %v576, %v287
    %v910 = vmul.f32 %v630, %v293
    %v911 = vmul.f32 %v632, %v294
    %v912 = vmul.f32 %v634, %v295
    %v913 = vmul.f32 %v636, %v296
    %v914 = vadd.f32 %v906, %v910
    %v915 = vadd.f32 %v907, %v911
    %v916 = vadd.f32 %v908, %v912
    %v917 = vadd.f32 %v909, %v913
    %918 = vmatprep.subr.mxu0 0.0
    %919 = vmatpush1.xpose.msra.mxu0 0.0
    %920 = vmatprep.subr.mxu0 0.0
    %921 = vmatpush1.xpose.msra.mxu0 0.0
    %922 = vmatprep.subr.mxu0 0.0
    %923 = vmatpush1.xpose.msra.mxu0 0.0
    %924 = vmatprep.subr.mxu0 0.0
    %925 = vmatpush1.xpose.msra.mxu0 0.0
    %926 = vmatprep.subr.mxu0 0.0
    %927 = vmatpush1.xpose.msra.mxu0 0.0
    %928 = vmatprep.subr.mxu0 0.0
    %929 = vmatpush1.xpose.msra.mxu0 0.0
    %930 = vmatprep.subr.mxu0 0.0
    %931 = vmatpush1.xpose.msra.mxu0 0.0
    %932 = vmatprep.subr.mxu0 0.0
    %933 = vmatpush1.xpose.msra.mxu0 0.0
    %934 = vmatprep.subr.mxu0 0.0
    %935 = vmatpush1.xpose.msra.mxu0 0.0
    %936 = vmatprep.subr.mxu0 0.0
    %937 = vmatpush1.xpose.msra.mxu0 0.0
    %938 = vmatprep.subr.mxu0 0.0
    %939 = vmatpush1.xpose.msra.mxu0 0.0
    %940 = vmatprep.subr.mxu0 0.0
    %941 = vmatpush1.xpose.msra.mxu0 0.0
    %942 = vmatprep.subr.mxu0 0.0
    %943 = vmatpush1.xpose.msra.mxu0 %v656
    %944 = vmatprep.subr.mxu0 0.0
    %945 = vmatpush1.xpose.msra.mxu0 %v655
    %946 = vmatprep.subr.mxu0 0.0
    %947 = vmatpush1.xpose.msra.mxu0 %v654
    %948 = vmatprep.subr.mxu0 0.0
    %949 = vmatpush1.xpose.msra.mxu0 %v653
    %950 = vmatprep.subr.mxu0 0.0
    %951 = vmatpush2.xpose.msra.mxu0 0.0
    %952 = vmatprep.subr.mxu0 0.0
    %953 = vmatpush2.xpose.msra.mxu0 0.0
    %954 = vmatprep.subr.mxu0 0.0
    %955 = vmatpush2.xpose.msra.mxu0 0.0
    %956 = vmatprep.subr.mxu0 0.0
    %957 = vmatpush2.xpose.msra.mxu0 0.0
    %958 = vmatprep.subr.mxu0 0.0
    %959 = vmatpush2.xpose.msra.mxu0 0.0
    %960 = vmatprep.subr.mxu0 0.0
    %961 = vmatpush2.xpose.msra.mxu0 0.0
    %962 = vmatprep.subr.mxu0 0.0
    %963 = vmatpush2.xpose.msra.mxu0 0.0
    %964 = vmatprep.subr.mxu0 0.0
    %965 = vmatpush2.xpose.msra.mxu0 0.0
    %966 = vmatprep.subr.mxu0 0.0
    %967 = vmatpush2.xpose.msra.mxu0 0.0
    %968 = vmatprep.subr.mxu0 0.0
    %969 = vmatpush2.xpose.msra.mxu0 0.0
    %970 = vmatprep.subr.mxu0 0.0
    %971 = vmatpush2.xpose.msra.mxu0 0.0
    %972 = vmatprep.subr.mxu0 0.0
    %973 = vmatpush2.xpose.msra.mxu0 0.0
    %974 = vmatprep.subr.mxu0 0.0
    %975 = vmatpush2.xpose.msra.mxu0 0.0
    %976 = vmatprep.subr.mxu0 0.0
    %977 = vmatpush2.xpose.msra.mxu0 0.0
    %978 = vmatprep.subr.mxu0 0.0
    %979 = vmatpush2.xpose.msra.mxu0 0.0
    %980 = vmatprep.subr.mxu0 0.0
    %981 = vmatpush2.xpose.msra.mxu0 0.0
    %982 = vmatprep.mubr.f32.mxu0 0.0
    %983 = vmatmul.mubr.f32.gmra.mxu0 %v914
    %v984 = vpop.f32.mrf.mxu0
    %v985 = vadd.f32 %v305, %v984
    %v986 = vpop.f32.mrf.mxu0
    %987 = vmatprep.mubr.f32.mxu0 0.0
    %988 = vmatmul.mubr.f32.gmra.mxu0 %v915
    %v989 = vpop.f32.mrf.mxu0
    %v990 = vadd.f32 %v306, %v989
    %v991 = vpop.f32.mrf.mxu0
    %992 = vmatprep.mubr.f32.mxu0 0.0
    %993 = vmatmul.mubr.f32.gmra.mxu0 %v916
    %v994 = vpop.f32.mrf.mxu0
    %v995 = vadd.f32 %v307, %v994
    %v996 = vpop.f32.mrf.mxu0
    %997 = vmatprep.mubr.f32.mxu0 0.0
    %998 = vmatmul.mubr.f32.gmra.mxu0 %v917
    %v999 = vpop.f32.mrf.mxu0
    %v1000 = vadd.f32 %v308, %v999
    %v1001 = vpop.f32.mrf.mxu0
    %1002 = vdwg.mxu0
    %v1003 = vsel %vm223, %v985, -inf
    %1004 = vmax.xlane.f32.xlu0 %v1003
    %v1005 = vpop.xlane.xlu0 %1004
    %v1006 = vsel %vm223, %v990, -inf
    %1007 = vmax.xlane.f32.xlu0 %v1006
    %v1008 = vpop.xlane.xlu0 %1007
    %v1009 = vsel %vm223, %v995, -inf
    %1010 = vmax.xlane.f32.xlu0 %v1009
    %v1011 = vpop.xlane.xlu0 %1010
    %v1012 = vsel %vm223, %v1000, -inf
    %1013 = vmax.xlane.f32.xlu0 %v1012
    %v1014 = vpop.xlane.xlu0 %1013
    %v1015 = vsub.f32 %v985, %v1005
    %v1016 = vsub.f32 %v990, %v1008
    %v1017 = vsub.f32 %v995, %v1011
    %v1018 = vsub.f32 %v1000, %v1014
    %v1019 = vmul.f32 %v1015, 1.442695
    %v1020 = vpow.pop %v1019
    %v1021 = vmul.f32 %v1016, 1.442695
    %v1022 = vpow.pop %v1021
    %v1023 = vmul.f32 %v1017, 1.442695
    %v1024 = vpow.pop %v1023
    %v1025 = vmul.f32 %v1018, 1.442695
    %v1026 = vpow.pop %v1025
    %v1027 = vsel %vm223, %v1020, 0.0
    %1028 = vadd.xlane.f32.xlu0 %v1027
    %v1029 = vpop.xlane.xlu0 %1028
    %v1030 = vsel %vm223, %v1022, 0.0
    %1031 = vadd.xlane.f32.xlu0 %v1030
    %v1032 = vpop.xlane.xlu0 %1031
    %v1033 = vsel %vm223, %v1024, 0.0
    %1034 = vadd.xlane.f32.xlu0 %v1033
    %v1035 = vpop.xlane.xlu0 %1034
    %v1036 = vsel %vm223, %v1026, 0.0
    %1037 = vadd.xlane.f32.xlu0 %v1036
    %v1038 = vpop.xlane.xlu0 %1037
    %v1039 = vrcp.pop %v1029
    %v1040 = vrcp.pop %v1032
    %v1041 = vrcp.pop %v1035
    %v1042 = vrcp.pop %v1038
    %v1043 = vmul.f32 %v1020, %v1039
    %v1044 = vmul.f32 %v1022, %v1040
    %v1045 = vmul.f32 %v1024, %v1041
    %v1046 = vmul.f32 %v1026, %v1042
    %v1048 = vsel %vm223, %v1043, 0
    %v1051 = vsel %vm223, %v1044, 0
    %v1054 = vsel %vm223, %v1045, 0
    %v1057 = vsel %vm223, %v1046, 0
    %1059 = vmatprep.subr.mxu0 0.0
    %1060 = vmatpush1.msra.mxu0 0.0
    %1061 = vmatprep.subr.mxu0 0.0
    %1062 = vmatpush1.msra.mxu0 0.0
    %1063 = vmatprep.subr.mxu0 0.0
    %1064 = vmatpush1.msra.mxu0 0.0
    %1065 = vmatprep.subr.mxu0 0.0
    %1066 = vmatpush1.msra.mxu0 0.0
    %1067 = vmatprep.subr.mxu0 0.0
    %1068 = vmatpush1.msra.mxu0 0.0
    %1069 = vmatprep.subr.mxu0 0.0
    %1070 = vmatpush1.msra.mxu0 0.0
    %1071 = vmatprep.subr.mxu0 0.0
    %1072 = vmatpush1.msra.mxu0 0.0
    %1073 = vmatprep.subr.mxu0 0.0
    %1074 = vmatpush1.msra.mxu0 0.0
    %1075 = vmatprep.subr.mxu0 0.0
    %1076 = vmatpush1.msra.mxu0 0.0
    %1077 = vmatprep.subr.mxu0 0.0
    %1078 = vmatpush1.msra.mxu0 0.0
    %1079 = vmatprep.subr.mxu0 0.0
    %1080 = vmatpush1.msra.mxu0 0.0
    %1081 = vmatprep.subr.mxu0 0.0
    %1082 = vmatpush1.msra.mxu0 0.0
    %1083 = vmatprep.subr.mxu0 0.0
    %1084 = vmatpush1.msra.mxu0 %v626
    %1085 = vmatprep.subr.mxu0 0.0
    %1086 = vmatpush1.msra.mxu0 %v623
    %1087 = vmatprep.subr.mxu0 0.0
    %1088 = vmatpush1.msra.mxu0 %v618
    %1089 = vmatprep.subr.mxu0 0.0
    %1090 = vmatpush1.msra.mxu0 %v615
    %1091 = vmatprep.subr.mxu0 0.0
    %1092 = vmatpush2.msra.mxu0 0.0
    %1093 = vmatprep.subr.mxu0 0.0
    %1094 = vmatpush2.msra.mxu0 0.0
    %1095 = vmatprep.subr.mxu0 0.0
    %1096 = vmatpush2.msra.mxu0 0.0
    %1097 = vmatprep.subr.mxu0 0.0
    %1098 = vmatpush2.msra.mxu0 0.0
    %1099 = vmatprep.subr.mxu0 0.0
    %1100 = vmatpush2.msra.mxu0 0.0
    %1101 = vmatprep.subr.mxu0 0.0
    %1102 = vmatpush2.msra.mxu0 0.0
    %1103 = vmatprep.subr.mxu0 0.0
    %1104 = vmatpush2.msra.mxu0 0.0
    %1105 = vmatprep.subr.mxu0 0.0
    %1106 = vmatpush2.msra.mxu0 0.0
    %1107 = vmatprep.subr.mxu0 0.0
    %1108 = vmatpush2.msra.mxu0 0.0
    %1109 = vmatprep.subr.mxu0 0.0
    %1110 = vmatpush2.msra.mxu0 0.0
    %1111 = vmatprep.subr.mxu0 0.0
    %1112 = vmatpush2.msra.mxu0 0.0
    %1113 = vmatprep.subr.mxu0 0.0
    %1114 = vmatpush2.msra.mxu0 0.0
    %1115 = vmatprep.subr.mxu0 0.0
    %1116 = vmatpush2.msra.mxu0 0.0
    %1117 = vmatprep.subr.mxu0 0.0
    %1118 = vmatpush2.msra.mxu0 0.0
    %1119 = vmatprep.subr.mxu0 0.0
    %1120 = vmatpush2.msra.mxu0 0.0
    %1121 = vmatprep.subr.mxu0 0.0
    %1122 = vmatpush2.msra.mxu0 0.0
    %1123 = vmatprep.mubr.f32.mxu0 0.0
    %1124 = vmatmul.mubr.f32.gmra.mxu0 %v1048
    %v1125 = vpop.f32.mrf.mxu0
    %v1126 = vadd.f32 0.0, %v1125
    %v1127 = vpop.f32.mrf.mxu0
    %1128 = vmatprep.mubr.f32.mxu0 0.0
    %1129 = vmatmul.mubr.f32.gmra.mxu0 %v1051
    %v1130 = vpop.f32.mrf.mxu0
    %v1131 = vadd.f32 0.0, %v1130
    %v1132 = vpop.f32.mrf.mxu0
    %1133 = vmatprep.mubr.f32.mxu0 0.0
    %1134 = vmatmul.mubr.f32.gmra.mxu0 %v1054
    %v1135 = vpop.f32.mrf.mxu0
    %v1136 = vadd.f32 0.0, %v1135
    %v1137 = vpop.f32.mrf.mxu0
    %1138 = vmatprep.mubr.f32.mxu0 0.0
    %1139 = vmatmul.mubr.f32.gmra.mxu0 %v1057
    %v1140 = vpop.f32.mrf.mxu0
    %v1141 = vadd.f32 0.0, %v1140
    %v1142 = vpop.f32.mrf.mxu0
    %1143 = vdwg.mxu0
    %s1144 = scalar_lea.vmem %s4, 1
    %v1145 = vld [vmem:[%s1144] sm:$0x1]
    %v1147 = vlaneseq
    %v1148 = vshrl.u32 %v1147, 7
    %v1149 = vsub.s32 0, %v1148
    %v1150 = vrot.slane %v1145, %v1149
    %v1152 = vmul.f32 %v1126, %v1150
    %v1153 = vmul.f32 %v1131, %v1150
    %v1154 = vmul.f32 %v1136, %v1150
    %v1155 = vmul.f32 %v1141, %v1150
    %v1156 = vadd.f32 %v902, %v1152
    %v1157 = vadd.f32 %v903, %v1153
    %v1158 = vadd.f32 %v904, %v1154
    %v1159 = vadd.f32 %v905, %v1155
    %v1160 = vpack.c.bf16 %v1157, %v1156
    %v1161 = vpack.c.bf16 %v1159, %v1158
    %v1162 = vld [vmem:[#allocation13] sm:$0xf]
    %v1163 = vld [vmem:[#allocation13 + $0x4] sm:$0xf]
    %v1164 = vld [vmem:[#allocation13 + $0x8] sm:$0xf]
    %v1165 = vld [vmem:[#allocation13 + $0xc] sm:$0xf]
    %v1166 = vld [vmem:[#allocation13 + $0x10] sm:$0xf]
    %v1167 = vld [vmem:[#allocation13 + $0x14] sm:$0xf]
    %v1168 = vld [vmem:[#allocation13 + $0x18] sm:$0xf]
    %v1169 = vld [vmem:[#allocation13 + $0x1c] sm:$0xf]
    %v1170 = vld [vmem:[#allocation13 + $0x20] sm:$0xf]
    %v1171 = vld [vmem:[#allocation13 + $0x24] sm:$0xf]
    %v1172 = vld [vmem:[#allocation13 + $0x28] sm:$0xf]
    %v1173 = vld [vmem:[#allocation13 + $0x2c] sm:$0xf]
    %v1174 = vld [vmem:[#allocation13 + $0x30] sm:$0xf]
    %v1175 = vld [vmem:[#allocation13 + $0x34] sm:$0xf]
    %v1176 = vld [vmem:[#allocation13 + $0x38] sm:$0xf]
    %v1177 = vld [vmem:[#allocation13 + $0x3c] sm:$0xf]
    %v1194 = vunpack.c.l.b16 %v1162
    %v1195 = vunpack.c.l.b16 %v1163
    %v1196 = vunpack.c.l.b16 %v1164
    %v1197 = vunpack.c.l.b16 %v1165
    %v1198 = vunpack.c.l.b16 %v1166
    %v1199 = vunpack.c.l.b16 %v1167
    %v1200 = vunpack.c.l.b16 %v1168
    %v1201 = vunpack.c.l.b16 %v1169
    %v1202 = vunpack.c.l.b16 %v1170
    %v1203 = vunpack.c.l.b16 %v1171
    %v1204 = vunpack.c.l.b16 %v1172
    %v1205 = vunpack.c.l.b16 %v1173
    %v1206 = vunpack.c.l.b16 %v1174
    %v1207 = vunpack.c.l.b16 %v1175
    %v1208 = vunpack.c.l.b16 %v1176
    %v1209 = vunpack.c.l.b16 %v1177
    %v1210 = vpack.c.b16 %v1195, %v1194
    %v1211 = vpack.c.b16 %v1197, %v1196
    %v1212 = vpack.c.b16 %v1199, %v1198
    %v1213 = vpack.c.b16 %v1201, %v1200
    %v1214 = vpack.c.b16 %v1203, %v1202
    %v1215 = vpack.c.b16 %v1205, %v1204
    %v1216 = vpack.c.b16 %v1207, %v1206
    %v1217 = vpack.c.b16 %v1209, %v1208
    %1226 = vmatprep.subr.bf16.mxu0 0
    %1227 = vmatpush1.bf16.msra.mxu0 %v1217
    %1228 = vmatprep.subr.bf16.mxu0 0
    %1229 = vmatpush1.bf16.msra.mxu0 %v1216
    %1230 = vmatprep.subr.bf16.mxu0 0
    %1231 = vmatpush1.bf16.msra.mxu0 %v1215
    %1232 = vmatprep.subr.bf16.mxu0 0
    %1233 = vmatpush1.bf16.msra.mxu0 %v1214
    %1234 = vmatprep.subr.bf16.mxu0 0
    %1235 = vmatpush1.bf16.msra.mxu0 %v1213
    %1236 = vmatprep.subr.bf16.mxu0 0
    %1237 = vmatpush1.bf16.msra.mxu0 %v1212
    %1238 = vmatprep.subr.bf16.mxu0 0
    %1239 = vmatpush1.bf16.msra.mxu0 %v1211
    %1240 = vmatprep.subr.bf16.mxu0 0
    %1241 = vmatpush1.bf16.msra.mxu0 %v1210
    %1242 = vmatprep.subr.bf16.mxu0 0
    %1243 = vmatpush2.bf16.msra.mxu0 0
    %1244 = vmatprep.subr.bf16.mxu0 0
    %1245 = vmatpush2.bf16.msra.mxu0 0
    %1246 = vmatprep.subr.bf16.mxu0 0
    %1247 = vmatpush2.bf16.msra.mxu0 0
    %1248 = vmatprep.subr.bf16.mxu0 0
    %1249 = vmatpush2.bf16.msra.mxu0 0
    %1250 = vmatprep.subr.bf16.mxu0 0
    %1251 = vmatpush2.bf16.msra.mxu0 0
    %1252 = vmatprep.subr.bf16.mxu0 0
    %1253 = vmatpush2.bf16.msra.mxu0 0
    %1254 = vmatprep.subr.bf16.mxu0 0
    %1255 = vmatpush2.bf16.msra.mxu0 0
    %1256 = vmatprep.subr.bf16.mxu0 0
    %1257 = vmatpush2.bf16.msra.mxu0 0
    %1258 = vmatprep.mubr.bf16.mxu0 0
    %1259 = vmatmul.mubr.bf16.gmra.mxu0 %v1160
    %v1260 = vpop.f32.mrf.mxu0
    %v1261 = vadd.f32 %v265, %v1260
    %v1262 = vpop.f32.mrf.mxu0
    %v1263 = vpop.f32.mrf.mxu0
    %v1264 = vadd.f32 %v268, %v1263
    %v1265 = vpop.f32.mrf.mxu0
    %1266 = vmatprep.mubr.bf16.mxu0 0
    %1267 = vmatmul.mubr.bf16.gmra.mxu0 %v1161
    %v1268 = vpop.f32.mrf.mxu0
    %v1269 = vadd.f32 %v273, %v1268
    %v1270 = vpop.f32.mrf.mxu0
    %v1271 = vpop.f32.mrf.mxu0
    %v1272 = vadd.f32 %v276, %v1271
    %v1273 = vpop.f32.mrf.mxu0
    %1274 = vdwg.mxu0
    %v1275 = vld [vmem:[%s10] sm:$0x1]
    %1276 = vadd.xlane.f32.xlu0 %v1261
    %v1277 = vpop.xlane.xlu0 %1276
    %1278 = vadd.xlane.f32.xlu0 %v1264
    %v1279 = vpop.xlane.xlu0 %1278
    %1280 = vadd.xlane.f32.xlu0 %v1269
    %v1281 = vpop.xlane.xlu0 %1280
    %1282 = vadd.xlane.f32.xlu0 %v1272
    %v1283 = vpop.xlane.xlu0 %1282
    %v1284 = vmul.f32 %v1277, %v318
    %v1285 = vmul.f32 %v1279, %v318
    %v1286 = vmul.f32 %v1281, %v318
    %v1287 = vmul.f32 %v1283, %v318
    %v1288 = vsub.f32 %v1261, %v1284
    %v1289 = vsub.f32 %v1264, %v1285
    %v1290 = vsub.f32 %v1269, %v1286
    %v1291 = vsub.f32 %v1272, %v1287
    %v1292 = vmul.f32 %v1288, %v1288
    %v1293 = vmul.f32 %v1289, %v1289
    %v1294 = vmul.f32 %v1290, %v1290
    %v1295 = vmul.f32 %v1291, %v1291
    %1296 = vadd.xlane.f32.xlu0 %v1292
    %v1297 = vpop.xlane.xlu0 %1296
    %1298 = vadd.xlane.f32.xlu0 %v1293
    %v1299 = vpop.xlane.xlu0 %1298
    %1300 = vadd.xlane.f32.xlu0 %v1294
    %v1301 = vpop.xlane.xlu0 %1300
    %1302 = vadd.xlane.f32.xlu0 %v1295
    %v1303 = vpop.xlane.xlu0 %1302
    %v1304 = vmul.f32 %v1297, %v318
    %v1305 = vmul.f32 %v1299, %v318
    %v1306 = vmul.f32 %v1301, %v318
    %v1307 = vmul.f32 %v1303, %v318
    %v1308 = vadd.f32 %v1304, 1e-05
    %v1309 = vadd.f32 %v1305, 1e-05
    %v1310 = vadd.f32 %v1306, 1e-05
    %v1311 = vadd.f32 %v1307, 1e-05
    %v1312 = vrsqrt.pop %v1308
    %v1313 = vrsqrt.pop %v1309
    %v1314 = vrsqrt.pop %v1310
    %v1315 = vrsqrt.pop %v1311
    %v1316 = vmul.f32 %v1288, %v1312
    %v1317 = vmul.f32 %v1289, %v1313
    %v1318 = vmul.f32 %v1290, %v1314
    %v1319 = vmul.f32 %v1291, %v1315
    %v1321 = vlaneseq
    %v1322 = vshrl.u32 %v1321, 7
    %v1323 = vsub.s32 0, %v1322
    %v1324 = vrot.slane %v1275, %v1323
    %v1326 = vmul.f32 %v1316, %v1324
    %v1327 = vmul.f32 %v1317, %v1324
    %v1328 = vmul.f32 %v1318, %v1324
    %v1329 = vmul.f32 %v1319, %v1324
    %v1330 = vpack.c.bf16 %v1327, %v1326
    %v1331 = vpack.c.bf16 %v1329, %v1328
    %v1332 = vld [vmem:[#allocation14] sm:$0xff]
    %v1333 = vld [vmem:[#allocation14 + $0x8] sm:$0xff]
    %v1334 = vld [vmem:[#allocation14 + $0x10] sm:$0xff]
    %v1335 = vld [vmem:[#allocation14 + $0x18] sm:$0xff]
    %v1336 = vld [vmem:[#allocation14 + $0x20] sm:$0xff]
    %v1337 = vld [vmem:[#allocation14 + $0x28] sm:$0xff]
    %v1338 = vld [vmem:[#allocation14 + $0x30] sm:$0xff]
    %v1339 = vld [vmem:[#allocation14 + $0x38] sm:$0xff]
    %v1340 = vld [vmem:[#allocation14 + $0x40] sm:$0xff]
    %v1341 = vld [vmem:[#allocation14 + $0x48] sm:$0xff]
    %v1342 = vld [vmem:[#allocation14 + $0x50] sm:$0xff]
    %v1343 = vld [vmem:[#allocation14 + $0x58] sm:$0xff]
    %v1344 = vld [vmem:[#allocation14 + $0x60] sm:$0xff]
    %v1345 = vld [vmem:[#allocation14 + $0x68] sm:$0xff]
    %v1346 = vld [vmem:[#allocation14 + $0x70] sm:$0xff]
    %v1347 = vld [vmem:[#allocation14 + $0x78] sm:$0xff]
    %v1348 = vld [vmem:[#allocation14 + $0x80] sm:$0xff]
    %v1349 = vld [vmem:[#allocation14 + $0x88] sm:$0xff]
    %v1350 = vld [vmem:[#allocation14 + $0x90] sm:$0xff]
    %v1351 = vld [vmem:[#allocation14 + $0x98] sm:$0xff]
    %v1352 = vld [vmem:[#allocation14 + $0xa0] sm:$0xff]
    %v1353 = vld [vmem:[#allocation14 + $0xa8] sm:$0xff]
    %v1354 = vld [vmem:[#allocation14 + $0xb0] sm:$0xff]
    %v1355 = vld [vmem:[#allocation14 + $0xb8] sm:$0xff]
    %v1356 = vld [vmem:[#allocation14 + $0xc0] sm:$0xff]
    %v1357 = vld [vmem:[#allocation14 + $0xc8] sm:$0xff]
    %v1358 = vld [vmem:[#allocation14 + $0xd0] sm:$0xff]
    %v1359 = vld [vmem:[#allocation14 + $0xd8] sm:$0xff]
    %v1360 = vld [vmem:[#allocation14 + $0xe0] sm:$0xff]
    %v1361 = vld [vmem:[#allocation14 + $0xe8] sm:$0xff]
    %v1362 = vld [vmem:[#allocation14 + $0xf0] sm:$0xff]
    %v1363 = vld [vmem:[#allocation14 + $0xf8] sm:$0xff]
    %v1364 = vld [vmem:[#allocation16] sm:$0xf]
    %v1366 = vlaneseq
    %v1367 = vshrl.u32 %v1366, 7
    %v1368 = vsub.s32 0, %v1367
    %v1369 = vrot.slane %v1364, %v1368
    %v1370 = vlaneseq
    %v1371 = vshrl.u32 %v1370, 7
    %v1372 = vsub.s32 1, %v1371
    %v1373 = vrot.slane %v1364, %v1372
    %v1374 = vlaneseq
    %v1375 = vshrl.u32 %v1374, 7
    %v1376 = vsub.s32 2, %v1375
    %v1377 = vrot.slane %v1364, %v1376
    %v1378 = vlaneseq
    %v1379 = vshrl.u32 %v1378, 7
    %v1380 = vsub.s32 3, %v1379
    %v1381 = vrot.slane %v1364, %v1380
    %v1418 = vunpack.c.l.b16 %v1332
    %v1419 = vunpack.c.h.b16 %v1332
    %v1420 = vunpack.c.l.b16 %v1333
    %v1421 = vunpack.c.h.b16 %v1333
    %v1422 = vunpack.c.l.b16 %v1334
    %v1423 = vunpack.c.h.b16 %v1334
    %v1424 = vunpack.c.l.b16 %v1335
    %v1425 = vunpack.c.h.b16 %v1335
    %v1426 = vunpack.c.l.b16 %v1336
    %v1427 = vunpack.c.h.b16 %v1336
    %v1428 = vunpack.c.l.b16 %v1337
    %v1429 = vunpack.c.h.b16 %v1337
    %v1430 = vunpack.c.l.b16 %v1338
    %v1431 = vunpack.c.h.b16 %v1338
    %v1432 = vunpack.c.l.b16 %v1339
    %v1433 = vunpack.c.h.b16 %v1339
    %v1434 = vunpack.c.l.b16 %v1340
    %v1435 = vunpack.c.h.b16 %v1340
    %v1436 = vunpack.c.l.b16 %v1341
    %v1437 = vunpack.c.h.b16 %v1341
    %v1438 = vunpack.c.l.b16 %v1342
    %v1439 = vunpack.c.h.b16 %v1342
    %v1440 = vunpack.c.l.b16 %v1343
    %v1441 = vunpack.c.h.b16 %v1343
    %v1442 = vunpack.c.l.b16 %v1344
    %v1443 = vunpack.c.h.b16 %v1344
    %v1444 = vunpack.c.l.b16 %v1345
    %v1445 = vunpack.c.h.b16 %v1345
    %v1446 = vunpack.c.l.b16 %v1346
    %v1447 = vunpack.c.h.b16 %v1346
    %v1448 = vunpack.c.l.b16 %v1347
    %v1449 = vunpack.c.h.b16 %v1347
    %v1450 = vunpack.c.l.b16 %v1348
    %v1451 = vunpack.c.h.b16 %v1348
    %v1452 = vunpack.c.l.b16 %v1349
    %v1453 = vunpack.c.h.b16 %v1349
    %v1454 = vunpack.c.l.b16 %v1350
    %v1455 = vunpack.c.h.b16 %v1350
    %v1456 = vunpack.c.l.b16 %v1351
    %v1457 = vunpack.c.h.b16 %v1351
    %v1458 = vunpack.c.l.b16 %v1352
    %v1459 = vunpack.c.h.b16 %v1352
    %v1460 = vunpack.c.l.b16 %v1353
    %v1461 = vunpack.c.h.b16 %v1353
    %v1462 = vunpack.c.l.b16 %v1354
    %v1463 = vunpack.c.h.b16 %v1354
    %v1464 = vunpack.c.l.b16 %v1355
    %v1465 = vunpack.c.h.b16 %v1355
    %v1466 = vunpack.c.l.b16 %v1356
    %v1467 = vunpack.c.h.b16 %v1356
    %v1468 = vunpack.c.l.b16 %v1357
    %v1469 = vunpack.c.h.b16 %v1357
    %v1470 = vunpack.c.l.b16 %v1358
    %v1471 = vunpack.c.h.b16 %v1358
    %v1472 = vunpack.c.l.b16 %v1359
    %v1473 = vunpack.c.h.b16 %v1359
    %v1474 = vunpack.c.l.b16 %v1360
    %v1475 = vunpack.c.h.b16 %v1360
    %v1476 = vunpack.c.l.b16 %v1361
    %v1477 = vunpack.c.h.b16 %v1361
    %v1478 = vunpack.c.l.b16 %v1362
    %v1479 = vunpack.c.h.b16 %v1362
    %v1480 = vunpack.c.l.b16 %v1363
    %v1481 = vunpack.c.h.b16 %v1363
    %v1482 = vpack.c.b16 %v1422, %v1418
    %v1483 = vpack.c.b16 %v1423, %v1419
    %v1484 = vpack.c.b16 %v1424, %v1420
    %v1485 = vpack.c.b16 %v1425, %v1421
    %v1486 = vpack.c.b16 %v1430, %v1426
    %v1487 = vpack.c.b16 %v1431, %v1427
    %v1488 = vpack.c.b16 %v1432, %v1428
    %v1489 = vpack.c.b16 %v1433, %v1429
    %v1490 = vpack.c.b16 %v1438, %v1434
    %v1491 = vpack.c.b16 %v1439, %v1435
    %v1492 = vpack.c.b16 %v1440, %v1436
    %v1493 = vpack.c.b16 %v1441, %v1437
    %v1494 = vpack.c.b16 %v1446, %v1442
    %v1495 = vpack.c.b16 %v1447, %v1443
    %v1496 = vpack.c.b16 %v1448, %v1444
    %v1497 = vpack.c.b16 %v1449, %v1445
    %v1498 = vpack.c.b16 %v1454, %v1450
    %v1499 = vpack.c.b16 %v1455, %v1451
    %v1500 = vpack.c.b16 %v1456, %v1452
    %v1501 = vpack.c.b16 %v1457, %v1453
    %v1502 = vpack.c.b16 %v1462, %v1458
    %v1503 = vpack.c.b16 %v1463, %v1459
    %v1504 = vpack.c.b16 %v1464, %v1460
    %v1505 = vpack.c.b16 %v1465, %v1461
    %v1506 = vpack.c.b16 %v1470, %v1466
    %v1507 = vpack.c.b16 %v1471, %v1467
    %v1508 = vpack.c.b16 %v1472, %v1468
    %v1509 = vpack.c.b16 %v1473, %v1469
    %v1510 = vpack.c.b16 %v1478, %v1474
    %v1511 = vpack.c.b16 %v1479, %v1475
    %v1512 = vpack.c.b16 %v1480, %v1476
    %v1513 = vpack.c.b16 %v1481, %v1477
    %1546 = vmatprep.subr.bf16.mxu0 %v1511
    %1547 = vmatpush1.bf16.msra.mxu0 %v1510
    %1548 = vmatprep.subr.bf16.mxu0 %v1507
    %1549 = vmatpush1.bf16.msra.mxu0 %v1506
    %1550 = vmatprep.subr.bf16.mxu0 %v1503
    %1551 = vmatpush1.bf16.msra.mxu0 %v1502
    %1552 = vmatprep.subr.bf16.mxu0 %v1499
    %1553 = vmatpush1.bf16.msra.mxu0 %v1498
    %1554 = vmatprep.subr.bf16.mxu0 %v1495
    %1555 = vmatpush1.bf16.msra.mxu0 %v1494
    %1556 = vmatprep.subr.bf16.mxu0 %v1491
    %1557 = vmatpush1.bf16.msra.mxu0 %v1490
    %1558 = vmatprep.subr.bf16.mxu0 %v1487
    %1559 = vmatpush1.bf16.msra.mxu0 %v1486
    %1560 = vmatprep.subr.bf16.mxu0 %v1483
    %1561 = vmatpush1.bf16.msra.mxu0 %v1482
    %1562 = vmatprep.subr.bf16.mxu0 0
    %1563 = vmatpush2.bf16.msra.mxu0 0
    %1564 = vmatprep.subr.bf16.mxu0 0
    %1565 = vmatpush2.bf16.msra.mxu0 0
    %1566 = vmatprep.subr.bf16.mxu0 0
    %1567 = vmatpush2.bf16.msra.mxu0 0
    %1568 = vmatprep.subr.bf16.mxu0 0
    %1569 = vmatpush2.bf16.msra.mxu0 0
    %1570 = vmatprep.subr.bf16.mxu0 0
    %1571 = vmatpush2.bf16.msra.mxu0 0
    %1572 = vmatprep.subr.bf16.mxu0 0
    %1573 = vmatpush2.bf16.msra.mxu0 0
    %1574 = vmatprep.subr.bf16.mxu0 0
    %1575 = vmatpush2.bf16.msra.mxu0 0
    %1576 = vmatprep.subr.bf16.mxu0 0
    %1577 = vmatpush2.bf16.msra.mxu0 0
    %1578 = vmatprep.mubr.bf16.mxu0 0
    %1579 = vmatmul.mubr.bf16.gmra.mxu0 %v1330
    %v1580 = vpop.f32.mrf.mxu0
    %v1581 = vadd.f32 %v1369, %v1580
    %v1582 = vpop.f32.mrf.mxu0
    %v1583 = vadd.f32 %v1373, %v1582
    %v1584 = vpop.f32.mrf.mxu0
    %v1585 = vadd.f32 %v1369, %v1584
    %v1586 = vpop.f32.mrf.mxu0
    %v1587 = vadd.f32 %v1373, %v1586
    %1588 = vmatprep.mubr.bf16.mxu0 0
    %1589 = vmatmul.mubr.bf16.gmra.mxu0 %v1331
    %v1590 = vpop.f32.mrf.mxu0
    %v1591 = vadd.f32 %v1369, %v1590
    %v1592 = vpop.f32.mrf.mxu0
    %v1593 = vadd.f32 %v1373, %v1592
    %v1594 = vpop.f32.mrf.mxu0
    %v1595 = vadd.f32 %v1369, %v1594
    %v1596 = vpop.f32.mrf.mxu0
    %v1597 = vadd.f32 %v1373, %v1596
    %1598 = vdwg.mxu0
    %1599 = vmatprep.subr.bf16.mxu0 %v1513
    %1600 = vmatpush1.bf16.msra.mxu0 %v1512
    %1601 = vmatprep.subr.bf16.mxu0 %v1509
    %1602 = vmatpush1.bf16.msra.mxu0 %v1508
    %1603 = vmatprep.subr.bf16.mxu0 %v1505
    %1604 = vmatpush1.bf16.msra.mxu0 %v1504
    %1605 = vmatprep.subr.bf16.mxu0 %v1501
    %1606 = vmatpush1.bf16.msra.mxu0 %v1500
    %1607 = vmatprep.subr.bf16.mxu0 %v1497
    %1608 = vmatpush1.bf16.msra.mxu0 %v1496
    %1609 = vmatprep.subr.bf16.mxu0 %v1493
    %1610 = vmatpush1.bf16.msra.mxu0 %v1492
    %1611 = vmatprep.subr.bf16.mxu0 %v1489
    %1612 = vmatpush1.bf16.msra.mxu0 %v1488
    %1613 = vmatprep.subr.bf16.mxu0 %v1485
    %1614 = vmatpush1.bf16.msra.mxu0 %v1484
    %1615 = vmatprep.subr.bf16.mxu0 0
    %1616 = vmatpush2.bf16.msra.mxu0 0
    %1617 = vmatprep.subr.bf16.mxu0 0
    %1618 = vmatpush2.bf16.msra.mxu0 0
    %1619 = vmatprep.subr.bf16.mxu0 0
    %1620 = vmatpush2.bf16.msra.mxu0 0
    %1621 = vmatprep.subr.bf16.mxu0 0
    %1622 = vmatpush2.bf16.msra.mxu0 0
    %1623 = vmatprep.subr.bf16.mxu0 0
    %1624 = vmatpush2.bf16.msra.mxu0 0
    %1625 = vmatprep.subr.bf16.mxu0 0
    %1626 = vmatpush2.bf16.msra.mxu0 0
    %1627 = vmatprep.subr.bf16.mxu0 0
    %1628 = vmatpush2.bf16.msra.mxu0 0
    %1629 = vmatprep.subr.bf16.mxu0 0
    %1630 = vmatpush2.bf16.msra.mxu0 0
    %1631 = vmatprep.mubr.bf16.mxu0 0
    %1632 = vmatmul.mubr.bf16.gmra.mxu0 %v1330
    %v1633 = vpop.f32.mrf.mxu0
    %v1634 = vadd.f32 %v1377, %v1633
    %v1635 = vpop.f32.mrf.mxu0
    %v1636 = vadd.f32 %v1381, %v1635
    %v1637 = vpop.f32.mrf.mxu0
    %v1638 = vadd.f32 %v1377, %v1637
    %v1639 = vpop.f32.mrf.mxu0
    %v1640 = vadd.f32 %v1381, %v1639
    %1641 = vmatprep.mubr.bf16.mxu0 0
    %1642 = vmatmul.mubr.bf16.gmra.mxu0 %v1331
    %v1643 = vpop.f32.mrf.mxu0
    %v1644 = vadd.f32 %v1377, %v1643
    %v1645 = vpop.f32.mrf.mxu0
    %v1646 = vadd.f32 %v1381, %v1645
    %v1647 = vpop.f32.mrf.mxu0
    %v1648 = vadd.f32 %v1377, %v1647
    %v1649 = vpop.f32.mrf.mxu0
    %v1650 = vadd.f32 %v1381, %v1649
    %1651 = vdwg.mxu0
    %v1652 = vxor.u32 %v1634, 2147483648
    %v1653 = vxor.u32 %v1636, 2147483648
    %v1654 = vxor.u32 %v1638, 2147483648
    %v1655 = vxor.u32 %v1640, 2147483648
    %v1656 = vxor.u32 %v1644, 2147483648
    %v1657 = vxor.u32 %v1646, 2147483648
    %v1658 = vxor.u32 %v1648, 2147483648
    %v1659 = vxor.u32 %v1650, 2147483648
    %v1660 = vmul.f32 %v1652, 1.442695
    %v1661 = vpow.pop %v1660
    %v1662 = vmul.f32 %v1653, 1.442695
    %v1663 = vpow.pop %v1662
    %v1664 = vmul.f32 %v1654, 1.442695
    %v1665 = vpow.pop %v1664
    %v1666 = vmul.f32 %v1655, 1.442695
    %v1667 = vpow.pop %v1666
    %v1668 = vmul.f32 %v1656, 1.442695
    %v1669 = vpow.pop %v1668
    %v1670 = vmul.f32 %v1657, 1.442695
    %v1671 = vpow.pop %v1670
    %v1672 = vmul.f32 %v1658, 1.442695
    %v1673 = vpow.pop %v1672
    %v1674 = vmul.f32 %v1659, 1.442695
    %v1675 = vpow.pop %v1674
    %v1676 = vadd.f32 %v1661, 1.0
    %v1677 = vadd.f32 %v1663, 1.0
    %v1678 = vadd.f32 %v1665, 1.0
    %v1679 = vadd.f32 %v1667, 1.0
    %v1680 = vadd.f32 %v1669, 1.0
    %v1681 = vadd.f32 %v1671, 1.0
    %v1682 = vadd.f32 %v1673, 1.0
    %v1683 = vadd.f32 %v1675, 1.0
    %v1684 = vrcp.pop %v1676
    %v1685 = vmul.f32 1.0, %v1684
    %v1686 = vrcp.pop %v1677
    %v1687 = vmul.f32 1.0, %v1686
    %v1688 = vrcp.pop %v1678
    %v1689 = vmul.f32 1.0, %v1688
    %v1690 = vrcp.pop %v1679
    %v1691 = vmul.f32 1.0, %v1690
    %v1692 = vrcp.pop %v1680
    %v1693 = vmul.f32 1.0, %v1692
    %v1694 = vrcp.pop %v1681
    %v1695 = vmul.f32 1.0, %v1694
    %v1696 = vrcp.pop %v1682
    %v1697 = vmul.f32 1.0, %v1696
    %v1698 = vrcp.pop %v1683
    %v1699 = vmul.f32 1.0, %v1698
    %v1700 = vmul.f32 %v1634, %v1685
    %v1701 = vmul.f32 %v1636, %v1687
    %v1702 = vmul.f32 %v1638, %v1689
    %v1703 = vmul.f32 %v1640, %v1691
    %v1704 = vmul.f32 %v1644, %v1693
    %v1705 = vmul.f32 %v1646, %v1695
    %v1706 = vmul.f32 %v1648, %v1697
    %v1707 = vmul.f32 %v1650, %v1699
    %v1708 = vmul.f32 %v1581, %v1700
    %v1709 = vmul.f32 %v1583, %v1701
    %v1710 = vmul.f32 %v1585, %v1702
    %v1711 = vmul.f32 %v1587, %v1703
    %v1712 = vmul.f32 %v1591, %v1704
    %v1713 = vmul.f32 %v1593, %v1705
    %v1714 = vmul.f32 %v1595, %v1706
    %v1715 = vmul.f32 %v1597, %v1707
    %v1716 = vpack.c.bf16 %v1710, %v1708
    %v1717 = vpack.c.bf16 %v1711, %v1709
    %v1718 = vpack.c.bf16 %v1714, %v1712
    %v1719 = vpack.c.bf16 %v1715, %v1713
    %v1720 = vld [vmem:[#allocation17] sm:$0xf]
    %v1721 = vld [vmem:[#allocation17 + $0x4] sm:$0xf]
    %v1722 = vld [vmem:[#allocation17 + $0x8] sm:$0xf]
    %v1723 = vld [vmem:[#allocation17 + $0xc] sm:$0xf]
    %v1724 = vld [vmem:[#allocation17 + $0x10] sm:$0xf]
    %v1725 = vld [vmem:[#allocation17 + $0x14] sm:$0xf]
    %v1726 = vld [vmem:[#allocation17 + $0x18] sm:$0xf]
    %v1727 = vld [vmem:[#allocation17 + $0x1c] sm:$0xf]
    %v1728 = vld [vmem:[#allocation17 + $0x20] sm:$0xf]
    %v1729 = vld [vmem:[#allocation17 + $0x24] sm:$0xf]
    %v1730 = vld [vmem:[#allocation17 + $0x28] sm:$0xf]
    %v1731 = vld [vmem:[#allocation17 + $0x2c] sm:$0xf]
    %v1732 = vld [vmem:[#allocation17 + $0x30] sm:$0xf]
    %v1733 = vld [vmem:[#allocation17 + $0x34] sm:$0xf]
    %v1734 = vld [vmem:[#allocation17 + $0x38] sm:$0xf]
    %v1735 = vld [vmem:[#allocation17 + $0x3c] sm:$0xf]
    %v1736 = vld [vmem:[#allocation17 + $0x40] sm:$0xf]
    %v1737 = vld [vmem:[#allocation17 + $0x44] sm:$0xf]
    %v1738 = vld [vmem:[#allocation17 + $0x48] sm:$0xf]
    %v1739 = vld [vmem:[#allocation17 + $0x4c] sm:$0xf]
    %v1740 = vld [vmem:[#allocation17 + $0x50] sm:$0xf]
    %v1741 = vld [vmem:[#allocation17 + $0x54] sm:$0xf]
    %v1742 = vld [vmem:[#allocation17 + $0x58] sm:$0xf]
    %v1743 = vld [vmem:[#allocation17 + $0x5c] sm:$0xf]
    %v1744 = vld [vmem:[#allocation17 + $0x60] sm:$0xf]
    %v1745 = vld [vmem:[#allocation17 + $0x64] sm:$0xf]
    %v1746 = vld [vmem:[#allocation17 + $0x68] sm:$0xf]
    %v1747 = vld [vmem:[#allocation17 + $0x6c] sm:$0xf]
    %v1748 = vld [vmem:[#allocation17 + $0x70] sm:$0xf]
    %v1749 = vld [vmem:[#allocation17 + $0x74] sm:$0xf]
    %v1750 = vld [vmem:[#allocation17 + $0x78] sm:$0xf]
    %v1751 = vld [vmem:[#allocation17 + $0x7c] sm:$0xf]
    %v1784 = vunpack.c.l.b16 %v1720
    %v1785 = vunpack.c.l.b16 %v1721
    %v1786 = vunpack.c.l.b16 %v1722
    %v1787 = vunpack.c.l.b16 %v1723
    %v1788 = vunpack.c.l.b16 %v1724
    %v1789 = vunpack.c.l.b16 %v1725
    %v1790 = vunpack.c.l.b16 %v1726
    %v1791 = vunpack.c.l.b16 %v1727
    %v1792 = vunpack.c.l.b16 %v1728
    %v1793 = vunpack.c.l.b16 %v1729
    %v1794 = vunpack.c.l.b16 %v1730
    %v1795 = vunpack.c.l.b16 %v1731
    %v1796 = vunpack.c.l.b16 %v1732
    %v1797 = vunpack.c.l.b16 %v1733
    %v1798 = vunpack.c.l.b16 %v1734
    %v1799 = vunpack.c.l.b16 %v1735
    %v1800 = vunpack.c.l.b16 %v1736
    %v1801 = vunpack.c.l.b16 %v1737
    %v1802 = vunpack.c.l.b16 %v1738
    %v1803 = vunpack.c.l.b16 %v1739
    %v1804 = vunpack.c.l.b16 %v1740
    %v1805 = vunpack.c.l.b16 %v1741
    %v1806 = vunpack.c.l.b16 %v1742
    %v1807 = vunpack.c.l.b16 %v1743
    %v1808 = vunpack.c.l.b16 %v1744
    %v1809 = vunpack.c.l.b16 %v1745
    %v1810 = vunpack.c.l.b16 %v1746
    %v1811 = vunpack.c.l.b16 %v1747
    %v1812 = vunpack.c.l.b16 %v1748
    %v1813 = vunpack.c.l.b16 %v1749
    %v1814 = vunpack.c.l.b16 %v1750
    %v1815 = vunpack.c.l.b16 %v1751
    %v1816 = vpack.c.b16 %v1785, %v1784
    %v1817 = vpack.c.b16 %v1787, %v1786
    %v1818 = vpack.c.b16 %v1789, %v1788
    %v1819 = vpack.c.b16 %v1791, %v1790
    %v1820 = vpack.c.b16 %v1793, %v1792
    %v1821 = vpack.c.b16 %v1795, %v1794
    %v1822 = vpack.c.b16 %v1797, %v1796
    %v1823 = vpack.c.b16 %v1799, %v1798
    %v1824 = vpack.c.b16 %v1801, %v1800
    %v1825 = vpack.c.b16 %v1803, %v1802
    %v1826 = vpack.c.b16 %v1805, %v1804
    %v1827 = vpack.c.b16 %v1807, %v1806
    %v1828 = vpack.c.b16 %v1809, %v1808
    %v1829 = vpack.c.b16 %v1811, %v1810
    %v1830 = vpack.c.b16 %v1813, %v1812
    %v1831 = vpack.c.b16 %v1815, %v1814
    %1848 = vmatprep.subr.bf16.mxu0 0
    %1849 = vmatpush1.bf16.msra.mxu0 %v1823
    %1850 = vmatprep.subr.bf16.mxu0 0
    %1851 = vmatpush1.bf16.msra.mxu0 %v1822
    %1852 = vmatprep.subr.bf16.mxu0 0
    %1853 = vmatpush1.bf16.msra.mxu0 %v1821
    %1854 = vmatprep.subr.bf16.mxu0 0
    %1855 = vmatpush1.bf16.msra.mxu0 %v1820
    %1856 = vmatprep.subr.bf16.mxu0 0
    %1857 = vmatpush1.bf16.msra.mxu0 %v1819
    %1858 = vmatprep.subr.bf16.mxu0 0
    %1859 = vmatpush1.bf16.msra.mxu0 %v1818
    %1860 = vmatprep.subr.bf16.mxu0 0
    %1861 = vmatpush1.bf16.msra.mxu0 %v1817
    %1862 = vmatprep.subr.bf16.mxu0 0
    %1863 = vmatpush1.bf16.msra.mxu0 %v1816
    %1864 = vmatprep.subr.bf16.mxu0 0
    %1865 = vmatpush2.bf16.msra.mxu0 %v1831
    %1866 = vmatprep.subr.bf16.mxu0 0
    %1867 = vmatpush2.bf16.msra.mxu0 %v1830
    %1868 = vmatprep.subr.bf16.mxu0 0
    %1869 = vmatpush2.bf16.msra.mxu0 %v1829
    %1870 = vmatprep.subr.bf16.mxu0 0
    %1871 = vmatpush2.bf16.msra.mxu0 %v1828
    %1872 = vmatprep.subr.bf16.mxu0 0
    %1873 = vmatpush2.bf16.msra.mxu0 %v1827
    %1874 = vmatprep.subr.bf16.mxu0 0
    %1875 = vmatpush2.bf16.msra.mxu0 %v1826
    %1876 = vmatprep.subr.bf16.mxu0 0
    %1877 = vmatpush2.bf16.msra.mxu0 %v1825
    %1878 = vmatprep.subr.bf16.mxu0 0
    %1879 = vmatpush2.bf16.msra.mxu0 %v1824
    %1880 = vmatprep.mubr.bf16.mxu0 %v1717
    %1881 = vmatmul.mubr.bf16.gmra.mxu0 %v1716
    %v1882 = vpop.f32.mrf.mxu0
    %v1883 = vadd.f32 %v1261, %v1882
    %v1884 = vpop.f32.mrf.mxu0
    %v1885 = vpop.f32.mrf.mxu0
    %v1886 = vadd.f32 %v1264, %v1885
    %v1887 = vpop.f32.mrf.mxu0
    %1888 = vmatprep.mubr.bf16.mxu0 %v1719
    %1889 = vmatmul.mubr.bf16.gmra.mxu0 %v1718
    %v1890 = vpop.f32.mrf.mxu0
    %v1891 = vadd.f32 %v1269, %v1890
    %v1892 = vpop.f32.mrf.mxu0
    %v1893 = vpop.f32.mrf.mxu0
    %v1894 = vadd.f32 %v1272, %v1893
    %v1895 = vpop.f32.mrf.mxu0
    %1896 = vdwg.mxu0
    %s1897 = scalar_lea.vmem %s7, 1
    %v1898 = vld [vmem:[%s1897] sm:$0x1]
    %1899 = vadd.xlane.f32.xlu0 %v1883
    %v1900 = vpop.xlane.xlu0 %1899
    %1901 = vadd.xlane.f32.xlu0 %v1886
    %v1902 = vpop.xlane.xlu0 %1901
    %1903 = vadd.xlane.f32.xlu0 %v1891
    %v1904 = vpop.xlane.xlu0 %1903
    %1905 = vadd.xlane.f32.xlu0 %v1894
    %v1906 = vpop.xlane.xlu0 %1905
    %v1907 = vmul.f32 %v1900, %v318
    %v1908 = vmul.f32 %v1902, %v318
    %v1909 = vmul.f32 %v1904, %v318
    %v1910 = vmul.f32 %v1906, %v318
    %v1911 = vsub.f32 %v1883, %v1907
    %v1912 = vsub.f32 %v1886, %v1908
    %v1913 = vsub.f32 %v1891, %v1909
    %v1914 = vsub.f32 %v1894, %v1910
    %v1915 = vmul.f32 %v1911, %v1911
    %v1916 = vmul.f32 %v1912, %v1912
    %v1917 = vmul.f32 %v1913, %v1913
    %v1918 = vmul.f32 %v1914, %v1914
    %1919 = vadd.xlane.f32.xlu0 %v1915
    %v1920 = vpop.xlane.xlu0 %1919
    %1921 = vadd.xlane.f32.xlu0 %v1916
    %v1922 = vpop.xlane.xlu0 %1921
    %1923 = vadd.xlane.f32.xlu0 %v1917
    %v1924 = vpop.xlane.xlu0 %1923
    %1925 = vadd.xlane.f32.xlu0 %v1918
    %v1926 = vpop.xlane.xlu0 %1925
    %v1927 = vmul.f32 %v1920, %v318
    %v1928 = vmul.f32 %v1922, %v318
    %v1929 = vmul.f32 %v1924, %v318
    %v1930 = vmul.f32 %v1926, %v318
    %v1931 = vadd.f32 %v1927, 1e-05
    %v1932 = vadd.f32 %v1928, 1e-05
    %v1933 = vadd.f32 %v1929, 1e-05
    %v1934 = vadd.f32 %v1930, 1e-05
    %v1935 = vrsqrt.pop %v1931
    %v1936 = vrsqrt.pop %v1932
    %v1937 = vrsqrt.pop %v1933
    %v1938 = vrsqrt.pop %v1934
    %v1939 = vmul.f32 %v1911, %v1935
    %v1940 = vmul.f32 %v1912, %v1936
    %v1941 = vmul.f32 %v1913, %v1937
    %v1942 = vmul.f32 %v1914, %v1938
    %v1944 = vlaneseq
    %v1945 = vshrl.u32 %v1944, 7
    %v1946 = vsub.s32 0, %v1945
    %v1947 = vrot.slane %v1898, %v1946
    %v1949 = vmul.f32 %v1939, %v1947
    %v1950 = vmul.f32 %v1940, %v1947
    %v1951 = vmul.f32 %v1941, %v1947
    %v1952 = vmul.f32 %v1942, %v1947
    %v1953 = vpack.c.bf16 %v1950, %v1949
    %v1954 = vpack.c.bf16 %v1952, %v1951
    %s1955 = scalar_lea.vmem [#allocation11], 192
    %v1956 = vld [vmem:[%s1955] sm:$0xff]
    %v1957 = vld [vmem:[%s1955 + $0x8] sm:$0xf]
    %v1958 = vld [vmem:[%s1955 + $0xc] sm:$0xff]
    %v1959 = vld [vmem:[%s1955 + $0x14] sm:$0xf]
    %v1960 = vld [vmem:[%s1955 + $0x18] sm:$0xff]
    %v1961 = vld [vmem:[%s1955 + $0x20] sm:$0xf]
    %v1962 = vld [vmem:[%s1955 + $0x24] sm:$0xff]
    %v1963 = vld [vmem:[%s1955 + $0x2c] sm:$0xf]
    %v1964 = vld [vmem:[%s1955 + $0x30] sm:$0xff]
    %v1965 = vld [vmem:[%s1955 + $0x38] sm:$0xf]
    %v1966 = vld [vmem:[%s1955 + $0x3c] sm:$0xff]
    %v1967 = vld [vmem:[%s1955 + $0x44] sm:$0xf]
    %v1968 = vld [vmem:[%s1955 + $0x48] sm:$0xff]
    %v1969 = vld [vmem:[%s1955 + $0x50] sm:$0xf]
    %v1970 = vld [vmem:[%s1955 + $0x54] sm:$0xff]
    %v1971 = vld [vmem:[%s1955 + $0x5c] sm:$0xf]
    %v1972 = vld [vmem:[%s1955 + $0x60] sm:$0xff]
    %v1973 = vld [vmem:[%s1955 + $0x68] sm:$0xf]
    %v1974 = vld [vmem:[%s1955 + $0x6c] sm:$0xff]
    %v1975 = vld [vmem:[%s1955 + $0x74] sm:$0xf]
    %v1976 = vld [vmem:[%s1955 + $0x78] sm:$0xff]
    %v1977 = vld [vmem:[%s1955 + $0x80] sm:$0xf]
    %v1978 = vld [vmem:[%s1955 + $0x84] sm:$0xff]
    %v1979 = vld [vmem:[%s1955 + $0x8c] sm:$0xf]
    %v1980 = vld [vmem:[%s1955 + $0x90] sm:$0xff]
    %v1981 = vld [vmem:[%s1955 + $0x98] sm:$0xf]
    %v1982 = vld [vmem:[%s1955 + $0x9c] sm:$0xff]
    %v1983 = vld [vmem:[%s1955 + $0xa4] sm:$0xf]
    %v1984 = vld [vmem:[%s1955 + $0xa8] sm:$0xff]
    %v1985 = vld [vmem:[%s1955 + $0xb0] sm:$0xf]
    %v1986 = vld [vmem:[%s1955 + $0xb4] sm:$0xff]
    %v1987 = vld [vmem:[%s1955 + $0xbc] sm:$0xf]
    %v2020 = vunpack.c.l.b16 %v1956
    %v2021 = vunpack.c.h.b16 %v1956
    %v2022 = vunpack.c.l.b16 %v1957
    %v2023 = vunpack.c.l.b16 %v1958
    %v2024 = vunpack.c.h.b16 %v1958
    %v2025 = vunpack.c.l.b16 %v1959
    %v2026 = vunpack.c.l.b16 %v1960
    %v2027 = vunpack.c.h.b16 %v1960
    %v2028 = vunpack.c.l.b16 %v1961
    %v2029 = vunpack.c.l.b16 %v1962
    %v2030 = vunpack.c.h.b16 %v1962
    %v2031 = vunpack.c.l.b16 %v1963
    %v2032 = vunpack.c.l.b16 %v1964
    %v2033 = vunpack.c.h.b16 %v1964
    %v2034 = vunpack.c.l.b16 %v1965
    %v2035 = vunpack.c.l.b16 %v1966
    %v2036 = vunpack.c.h.b16 %v1966
    %v2037 = vunpack.c.l.b16 %v1967
    %v2038 = vunpack.c.l.b16 %v1968
    %v2039 = vunpack.c.h.b16 %v1968
    %v2040 = vunpack.c.l.b16 %v1969
    %v2041 = vunpack.c.l.b16 %v1970
    %v2042 = vunpack.c.h.b16 %v1970
    %v2043 = vunpack.c.l.b16 %v1971
    %v2044 = vunpack.c.l.b16 %v1972
    %v2045 = vunpack.c.h.b16 %v1972
    %v2046 = vunpack.c.l.b16 %v1973
    %v2047 = vunpack.c.l.b16 %v1974
    %v2048 = vunpack.c.h.b16 %v1974
    %v2049 = vunpack.c.l.b16 %v1975
    %v2050 = vunpack.c.l.b16 %v1976
    %v2051 = vunpack.c.h.b16 %v1976
    %v2052 = vunpack.c.l.b16 %v1977
    %v2053 = vunpack.c.l.b16 %v1978
    %v2054 = vunpack.c.h.b16 %v1978
    %v2055 = vunpack.c.l.b16 %v1979
    %v2056 = vunpack.c.l.b16 %v1980
    %v2057 = vunpack.c.h.b16 %v1980
    %v2058 = vunpack.c.l.b16 %v1981
    %v2059 = vunpack.c.l.b16 %v1982
    %v2060 = vunpack.c.h.b16 %v1982
    %v2061 = vunpack.c.l.b16 %v1983
    %v2062 = vunpack.c.l.b16 %v1984
    %v2063 = vunpack.c.h.b16 %v1984
    %v2064 = vunpack.c.l.b16 %v1985
    %v2065 = vunpack.c.l.b16 %v1986
    %v2066 = vunpack.c.h.b16 %v1986
    %v2067 = vunpack.c.l.b16 %v1987
    %v2068 = vpack.c.b16 %v2023, %v2020
    %v2069 = vpack.c.b16 %v2024, %v2021
    %v2070 = vpack.c.b16 %v2025, %v2022
    %v2071 = vpack.c.b16 %v2029, %v2026
    %v2072 = vpack.c.b16 %v2030, %v2027
    %v2073 = vpack.c.b16 %v2031, %v2028
    %v2074 = vpack.c.b16 %v2035, %v2032
    %v2075 = vpack.c.b16 %v2036, %v2033
    %v2076 = vpack.c.b16 %v2037, %v2034
    %v2077 = vpack.c.b16 %v2041, %v2038
    %v2078 = vpack.c.b16 %v2042, %v2039
    %v2079 = vpack.c.b16 %v2043, %v2040
    %v2080 = vpack.c.b16 %v2047, %v2044
    %v2081 = vpack.c.b16 %v2048, %v2045
    %v2082 = vpack.c.b16 %v2049, %v2046
    %v2083 = vpack.c.b16 %v2053, %v2050
    %v2084 = vpack.c.b16 %v2054, %v2051
    %v2085 = vpack.c.b16 %v2055, %v2052
    %v2086 = vpack.c.b16 %v2059, %v2056
    %v2087 = vpack.c.b16 %v2060, %v2057
    %v2088 = vpack.c.b16 %v2061, %v2058
    %v2089 = vpack.c.b16 %v2065, %v2062
    %v2090 = vpack.c.b16 %v2066, %v2063
    %v2091 = vpack.c.b16 %v2067, %v2064
    %2116 = vmatprep.subr.bf16.mxu0 %v2090
    %2117 = vmatpush1.bf16.msra.mxu0 %v2089
    %2118 = vmatprep.subr.bf16.mxu0 %v2087
    %2119 = vmatpush1.bf16.msra.mxu0 %v2086
    %2120 = vmatprep.subr.bf16.mxu0 %v2084
    %2121 = vmatpush1.bf16.msra.mxu0 %v2083
    %2122 = vmatprep.subr.bf16.mxu0 %v2081
    %2123 = vmatpush1.bf16.msra.mxu0 %v2080
    %2124 = vmatprep.subr.bf16.mxu0 %v2078
    %2125 = vmatpush1.bf16.msra.mxu0 %v2077
    %2126 = vmatprep.subr.bf16.mxu0 %v2075
    %2127 = vmatpush1.bf16.msra.mxu0 %v2074
    %2128 = vmatprep.subr.bf16.mxu0 %v2072
    %2129 = vmatpush1.bf16.msra.mxu0 %v2071
    %2130 = vmatprep.subr.bf16.mxu0 %v2069
    %2131 = vmatpush1.bf16.msra.mxu0 %v2068
    %2132 = vmatprep.subr.bf16.mxu0 0
    %2133 = vmatpush2.bf16.msra.mxu0 0
    %2134 = vmatprep.subr.bf16.mxu0 0
    %2135 = vmatpush2.bf16.msra.mxu0 0
    %2136 = vmatprep.subr.bf16.mxu0 0
    %2137 = vmatpush2.bf16.msra.mxu0 0
    %2138 = vmatprep.subr.bf16.mxu0 0
    %2139 = vmatpush2.bf16.msra.mxu0 0
    %2140 = vmatprep.subr.bf16.mxu0 0
    %2141 = vmatpush2.bf16.msra.mxu0 0
    %2142 = vmatprep.subr.bf16.mxu0 0
    %2143 = vmatpush2.bf16.msra.mxu0 0
    %2144 = vmatprep.subr.bf16.mxu0 0
    %2145 = vmatpush2.bf16.msra.mxu0 0
    %2146 = vmatprep.subr.bf16.mxu0 0
    %2147 = vmatpush2.bf16.msra.mxu0 0
    %2148 = vmatprep.mubr.bf16.mxu0 0
    %2149 = vmatmul.mubr.bf16.gmra.mxu0 %v1953
    %v2150 = vpop.f32.mrf.mxu0
    %v2151 = vadd.f32 0.0, %v2150
    %v2152 = vpop.f32.mrf.mxu0
    %v2153 = vadd.f32 0.0, %v2152
    %v2154 = vpop.f32.mrf.mxu0
    %v2155 = vadd.f32 0.0, %v2154
    %v2156 = vpop.f32.mrf.mxu0
    %v2157 = vadd.f32 0.0, %v2156
    %2158 = vmatprep.mubr.bf16.mxu0 0
    %2159 = vmatmul.mubr.bf16.gmra.mxu0 %v1954
    %v2160 = vpop.f32.mrf.mxu0
    %v2161 = vadd.f32 0.0, %v2160
    %v2162 = vpop.f32.mrf.mxu0
    %v2163 = vadd.f32 0.0, %v2162
    %v2164 = vpop.f32.mrf.mxu0
    %v2165 = vadd.f32 0.0, %v2164
    %v2166 = vpop.f32.mrf.mxu0
    %v2167 = vadd.f32 0.0, %v2166
    %2168 = vdwg.mxu0
    %2169 = vmatprep.subr.bf16.mxu0 0
    %2170 = vmatpush1.bf16.msra.mxu0 %v2091
    %2171 = vmatprep.subr.bf16.mxu0 0
    %2172 = vmatpush1.bf16.msra.mxu0 %v2088
    %2173 = vmatprep.subr.bf16.mxu0 0
    %2174 = vmatpush1.bf16.msra.mxu0 %v2085
    %2175 = vmatprep.subr.bf16.mxu0 0
    %2176 = vmatpush1.bf16.msra.mxu0 %v2082
    %2177 = vmatprep.subr.bf16.mxu0 0
    %2178 = vmatpush1.bf16.msra.mxu0 %v2079
    %2179 = vmatprep.subr.bf16.mxu0 0
    %2180 = vmatpush1.bf16.msra.mxu0 %v2076
    %2181 = vmatprep.subr.bf16.mxu0 0
    %2182 = vmatpush1.bf16.msra.mxu0 %v2073
    %2183 = vmatprep.subr.bf16.mxu0 0
    %2184 = vmatpush1.bf16.msra.mxu0 %v2070
    %2185 = vmatprep.subr.bf16.mxu0 0
    %2186 = vmatpush2.bf16.msra.mxu0 0
    %2187 = vmatprep.subr.bf16.mxu0 0
    %2188 = vmatpush2.bf16.msra.mxu0 0
    %2189 = vmatprep.subr.bf16.mxu0 0
    %2190 = vmatpush2.bf16.msra.mxu0 0
    %2191 = vmatprep.subr.bf16.mxu0 0
    %2192 = vmatpush2.bf16.msra.mxu0 0
    %2193 = vmatprep.subr.bf16.mxu0 0
    %2194 = vmatpush2.bf16.msra.mxu0 0
    %2195 = vmatprep.subr.bf16.mxu0 0
    %2196 = vmatpush2.bf16.msra.mxu0 0
    %2197 = vmatprep.subr.bf16.mxu0 0
    %2198 = vmatpush2.bf16.msra.mxu0 0
    %2199 = vmatprep.subr.bf16.mxu0 0
    %2200 = vmatpush2.bf16.msra.mxu0 0
    %2201 = vmatprep.mubr.bf16.mxu0 0
    %2202 = vmatmul.mubr.bf16.gmra.mxu0 %v1953
    %v2203 = vpop.f32.mrf.mxu0
    %v2204 = vadd.f32 0.0, %v2203
    %v2205 = vpop.f32.mrf.mxu0
    %v2206 = vpop.f32.mrf.mxu0
    %v2207 = vadd.f32 0.0, %v2206
    %v2208 = vpop.f32.mrf.mxu0
    %2209 = vmatprep.mubr.bf16.mxu0 0
    %2210 = vmatmul.mubr.bf16.gmra.mxu0 %v1954
    %v2211 = vpop.f32.mrf.mxu0
    %v2212 = vadd.f32 0.0, %v2211
    %v2213 = vpop.f32.mrf.mxu0
    %v2214 = vpop.f32.mrf.mxu0
    %v2215 = vadd.f32 0.0, %v2214
    %v2216 = vpop.f32.mrf.mxu0
    %2217 = vdwg.mxu0
    %2218 = vrot.lane.b32.xlu0 %v2151, 64
    %v2219 = vpop.permute.xlu0 %2218
    %2220 = vrot.lane.b32.xlu0 %v2155, 64
    %v2221 = vpop.permute.xlu0 %2220
    %2222 = vrot.lane.b32.xlu0 %v2161, 64
    %v2223 = vpop.permute.xlu0 %2222
    %2224 = vrot.lane.b32.xlu0 %v2165, 64
    %v2225 = vpop.permute.xlu0 %2224
    %2226 = vrot.lane.b32.xlu0 %v2153, 64
    %v2227 = vpop.permute.xlu0 %2226
    %2228 = vrot.lane.b32.xlu0 %v2157, 64
    %v2229 = vpop.permute.xlu0 %2228
    %2230 = vrot.lane.b32.xlu0 %v2163, 64
    %v2231 = vpop.permute.xlu0 %2230
    %2232 = vrot.lane.b32.xlu0 %v2167, 64
    %v2233 = vpop.permute.xlu0 %2232
    %v2234 = vmul.f32 %v2153, %v297
    %v2235 = vmul.f32 %v2157, %v298
    %v2236 = vmul.f32 %v2163, %v299
    %v2237 = vmul.f32 %v2167, %v300
    %v2238 = vmul.f32 %v2227, %v301
    %v2239 = vmul.f32 %v2229, %v302
    %v2240 = vmul.f32 %v2231, %v303
    %v2241 = vmul.f32 %v2233, %v304
    %v2242 = vadd.f32 %v2234, %v2238
    %v2243 = vadd.f32 %v2235, %v2239
    %v2244 = vadd.f32 %v2236, %v2240
    %v2245 = vadd.f32 %v2237, %v2241
    %v2246 = vmul.f32 %v2151, %v279
    %v2247 = vmul.f32 %v2155, %v280
    %v2248 = vmul.f32 %v2161, %v281
    %v2249 = vmul.f32 %v2165, %v282
    %v2250 = vmul.f32 %v2219, %v288
    %v2251 = vmul.f32 %v2221, %v289
    %v2252 = vmul.f32 %v2223, %v290
    %v2253 = vmul.f32 %v2225, %v291
    %v2254 = vadd.f32 %v2246, %v2250
    %v2255 = vadd.f32 %v2247, %v2251
    %v2256 = vadd.f32 %v2248, %v2252
    %v2257 = vadd.f32 %v2249, %v2253
    %2258 = vmatprep.subr.mxu0 0.0
    %2259 = vmatpush1.xpose.msra.mxu0 0.0
    %2260 = vmatprep.subr.mxu0 0.0
    %2261 = vmatpush1.xpose.msra.mxu0 0.0
    %2262 = vmatprep.subr.mxu0 0.0
    %2263 = vmatpush1.xpose.msra.mxu0 0.0
    %2264 = vmatprep.subr.mxu0 0.0
    %2265 = vmatpush1.xpose.msra.mxu0 0.0
    %2266 = vmatprep.subr.mxu0 0.0
    %2267 = vmatpush1.xpose.msra.mxu0 0.0
    %2268 = vmatprep.subr.mxu0 0.0
    %2269 = vmatpush1.xpose.msra.mxu0 0.0
    %2270 = vmatprep.subr.mxu0 0.0
    %2271 = vmatpush1.xpose.msra.mxu0 0.0
    %2272 = vmatprep.subr.mxu0 0.0
    %2273 = vmatpush1.xpose.msra.mxu0 0.0
    %2274 = vmatprep.subr.mxu0 0.0
    %2275 = vmatpush1.xpose.msra.mxu0 0.0
    %2276 = vmatprep.subr.mxu0 0.0
    %2277 = vmatpush1.xpose.msra.mxu0 0.0
    %2278 = vmatprep.subr.mxu0 0.0
    %2279 = vmatpush1.xpose.msra.mxu0 0.0
    %2280 = vmatprep.subr.mxu0 0.0
    %2281 = vmatpush1.xpose.msra.mxu0 0.0
    %2282 = vmatprep.subr.mxu0 0.0
    %2283 = vmatpush1.xpose.msra.mxu0 %v2245
    %2284 = vmatprep.subr.mxu0 0.0
    %2285 = vmatpush1.xpose.msra.mxu0 %v2244
    %2286 = vmatprep.subr.mxu0 0.0
    %2287 = vmatpush1.xpose.msra.mxu0 %v2243
    %2288 = vmatprep.subr.mxu0 0.0
    %2289 = vmatpush1.xpose.msra.mxu0 %v2242
    %2290 = vmatprep.subr.mxu0 0.0
    %2291 = vmatpush2.xpose.msra.mxu0 0.0
    %2292 = vmatprep.subr.mxu0 0.0
    %2293 = vmatpush2.xpose.msra.mxu0 0.0
    %2294 = vmatprep.subr.mxu0 0.0
    %2295 = vmatpush2.xpose.msra.mxu0 0.0
    %2296 = vmatprep.subr.mxu0 0.0
    %2297 = vmatpush2.xpose.msra.mxu0 0.0
    %2298 = vmatprep.subr.mxu0 0.0
    %2299 = vmatpush2.xpose.msra.mxu0 0.0
    %2300 = vmatprep.subr.mxu0 0.0
    %2301 = vmatpush2.xpose.msra.mxu0 0.0
    %2302 = vmatprep.subr.mxu0 0.0
    %2303 = vmatpush2.xpose.msra.mxu0 0.0
    %2304 = vmatprep.subr.mxu0 0.0
    %2305 = vmatpush2.xpose.msra.mxu0 0.0
    %2306 = vmatprep.subr.mxu0 0.0
    %2307 = vmatpush2.xpose.msra.mxu0 0.0
    %2308 = vmatprep.subr.mxu0 0.0
    %2309 = vmatpush2.xpose.msra.mxu0 0.0
    %2310 = vmatprep.subr.mxu0 0.0
    %2311 = vmatpush2.xpose.msra.mxu0 0.0
    %2312 = vmatprep.subr.mxu0 0.0
    %2313 = vmatpush2.xpose.msra.mxu0 0.0
    %2314 = vmatprep.subr.mxu0 0.0
    %2315 = vmatpush2.xpose.msra.mxu0 0.0
    %2316 = vmatprep.subr.mxu0 0.0
    %2317 = vmatpush2.xpose.msra.mxu0 0.0
    %2318 = vmatprep.subr.mxu0 0.0
    %2319 = vmatpush2.xpose.msra.mxu0 0.0
    %2320 = vmatprep.subr.mxu0 0.0
    %2321 = vmatpush2.xpose.msra.mxu0 0.0
    %2322 = vmatprep.mubr.f32.mxu0 0.0
    %2323 = vmatmul.mubr.f32.gmra.mxu0 %v2254
    %v2324 = vpop.f32.mrf.mxu0
    %v2325 = vadd.f32 %v305, %v2324
    %v2326 = vpop.f32.mrf.mxu0
    %2327 = vmatprep.mubr.f32.mxu0 0.0
    %2328 = vmatmul.mubr.f32.gmra.mxu0 %v2255
    %v2329 = vpop.f32.mrf.mxu0
    %v2330 = vadd.f32 %v306, %v2329
    %v2331 = vpop.f32.mrf.mxu0
    %2332 = vmatprep.mubr.f32.mxu0 0.0
    %2333 = vmatmul.mubr.f32.gmra.mxu0 %v2256
    %v2334 = vpop.f32.mrf.mxu0
    %v2335 = vadd.f32 %v307, %v2334
    %v2336 = vpop.f32.mrf.mxu0
    %2337 = vmatprep.mubr.f32.mxu0 0.0
    %2338 = vmatmul.mubr.f32.gmra.mxu0 %v2257
    %v2339 = vpop.f32.mrf.mxu0
    %v2340 = vadd.f32 %v308, %v2339
    %v2341 = vpop.f32.mrf.mxu0
    %2342 = vdwg.mxu0
    %v2343 = vsel %vm223, %v2325, -inf
    %2344 = vmax.xlane.f32.xlu0 %v2343
    %v2345 = vpop.xlane.xlu0 %2344
    %v2346 = vsel %vm223, %v2330, -inf
    %2347 = vmax.xlane.f32.xlu0 %v2346
    %v2348 = vpop.xlane.xlu0 %2347
    %v2349 = vsel %vm223, %v2335, -inf
    %2350 = vmax.xlane.f32.xlu0 %v2349
    %v2351 = vpop.xlane.xlu0 %2350
    %v2352 = vsel %vm223, %v2340, -inf
    %2353 = vmax.xlane.f32.xlu0 %v2352
    %v2354 = vpop.xlane.xlu0 %2353
    %v2355 = vsub.f32 %v2325, %v2345
    %v2356 = vsub.f32 %v2330, %v2348
    %v2357 = vsub.f32 %v2335, %v2351
    %v2358 = vsub.f32 %v2340, %v2354
    %v2359 = vmul.f32 %v2355, 1.442695
    %v2360 = vpow.pop %v2359
    %v2361 = vmul.f32 %v2356, 1.442695
    %v2362 = vpow.pop %v2361
    %v2363 = vmul.f32 %v2357, 1.442695
    %v2364 = vpow.pop %v2363
    %v2365 = vmul.f32 %v2358, 1.442695
    %v2366 = vpow.pop %v2365
    %v2367 = vsel %vm223, %v2360, 0.0
    %2368 = vadd.xlane.f32.xlu0 %v2367
    %v2369 = vpop.xlane.xlu0 %2368
    %v2370 = vsel %vm223, %v2362, 0.0
    %2371 = vadd.xlane.f32.xlu0 %v2370
    %v2372 = vpop.xlane.xlu0 %2371
    %v2373 = vsel %vm223, %v2364, 0.0
    %2374 = vadd.xlane.f32.xlu0 %v2373
    %v2375 = vpop.xlane.xlu0 %2374
    %v2376 = vsel %vm223, %v2366, 0.0
    %2377 = vadd.xlane.f32.xlu0 %v2376
    %v2378 = vpop.xlane.xlu0 %2377
    %v2379 = vrcp.pop %v2369
    %v2380 = vrcp.pop %v2372
    %v2381 = vrcp.pop %v2375
    %v2382 = vrcp.pop %v2378
    %v2383 = vmul.f32 %v2360, %v2379
    %v2384 = vmul.f32 %v2362, %v2380
    %v2385 = vmul.f32 %v2364, %v2381
    %v2386 = vmul.f32 %v2366, %v2382
    %v2388 = vsel %vm223, %v2383, 0
    %v2391 = vsel %vm223, %v2384, 0
    %v2394 = vsel %vm223, %v2385, 0
    %v2397 = vsel %vm223, %v2386, 0
    %2399 = vmatprep.subr.mxu0 0.0
    %2400 = vmatpush1.msra.mxu0 0.0
    %2401 = vmatprep.subr.mxu0 0.0
    %2402 = vmatpush1.msra.mxu0 0.0
    %2403 = vmatprep.subr.mxu0 0.0
    %2404 = vmatpush1.msra.mxu0 0.0
    %2405 = vmatprep.subr.mxu0 0.0
    %2406 = vmatpush1.msra.mxu0 0.0
    %2407 = vmatprep.subr.mxu0 0.0
    %2408 = vmatpush1.msra.mxu0 0.0
    %2409 = vmatprep.subr.mxu0 0.0
    %2410 = vmatpush1.msra.mxu0 0.0
    %2411 = vmatprep.subr.mxu0 0.0
    %2412 = vmatpush1.msra.mxu0 0.0
    %2413 = vmatprep.subr.mxu0 0.0
    %2414 = vmatpush1.msra.mxu0 0.0
    %2415 = vmatprep.subr.mxu0 0.0
    %2416 = vmatpush1.msra.mxu0 0.0
    %2417 = vmatprep.subr.mxu0 0.0
    %2418 = vmatpush1.msra.mxu0 0.0
    %2419 = vmatprep.subr.mxu0 0.0
    %2420 = vmatpush1.msra.mxu0 0.0
    %2421 = vmatprep.subr.mxu0 0.0
    %2422 = vmatpush1.msra.mxu0 0.0
    %2423 = vmatprep.subr.mxu0 0.0
    %2424 = vmatpush1.msra.mxu0 %v2215
    %2425 = vmatprep.subr.mxu0 0.0
    %2426 = vmatpush1.msra.mxu0 %v2212
    %2427 = vmatprep.subr.mxu0 0.0
    %2428 = vmatpush1.msra.mxu0 %v2207
    %2429 = vmatprep.subr.mxu0 0.0
    %2430 = vmatpush1.msra.mxu0 %v2204
    %2431 = vmatprep.subr.mxu0 0.0
    %2432 = vmatpush2.msra.mxu0 0.0
    %2433 = vmatprep.subr.mxu0 0.0
    %2434 = vmatpush2.msra.mxu0 0.0
    %2435 = vmatprep.subr.mxu0 0.0
    %2436 = vmatpush2.msra.mxu0 0.0
    %2437 = vmatprep.subr.mxu0 0.0
    %2438 = vmatpush2.msra.mxu0 0.0
    %2439 = vmatprep.subr.mxu0 0.0
    %2440 = vmatpush2.msra.mxu0 0.0
    %2441 = vmatprep.subr.mxu0 0.0
    %2442 = vmatpush2.msra.mxu0 0.0
    %2443 = vmatprep.subr.mxu0 0.0
    %2444 = vmatpush2.msra.mxu0 0.0
    %2445 = vmatprep.subr.mxu0 0.0
    %2446 = vmatpush2.msra.mxu0 0.0
    %2447 = vmatprep.subr.mxu0 0.0
    %2448 = vmatpush2.msra.mxu0 0.0
    %2449 = vmatprep.subr.mxu0 0.0
    %2450 = vmatpush2.msra.mxu0 0.0
    %2451 = vmatprep.subr.mxu0 0.0
    %2452 = vmatpush2.msra.mxu0 0.0
    %2453 = vmatprep.subr.mxu0 0.0
    %2454 = vmatpush2.msra.mxu0 0.0
    %2455 = vmatprep.subr.mxu0 0.0
    %2456 = vmatpush2.msra.mxu0 0.0
    %2457 = vmatprep.subr.mxu0 0.0
    %2458 = vmatpush2.msra.mxu0 0.0
    %2459 = vmatprep.subr.mxu0 0.0
    %2460 = vmatpush2.msra.mxu0 0.0
    %2461 = vmatprep.subr.mxu0 0.0
    %2462 = vmatpush2.msra.mxu0 0.0
    %2463 = vmatprep.mubr.f32.mxu0 0.0
    %2464 = vmatmul.mubr.f32.gmra.mxu0 %v2388
    %v2465 = vpop.f32.mrf.mxu0
    %v2466 = vadd.f32 0.0, %v2465
    %v2467 = vpop.f32.mrf.mxu0
    %2468 = vmatprep.mubr.f32.mxu0 0.0
    %2469 = vmatmul.mubr.f32.gmra.mxu0 %v2391
    %v2470 = vpop.f32.mrf.mxu0
    %v2471 = vadd.f32 0.0, %v2470
    %v2472 = vpop.f32.mrf.mxu0
    %2473 = vmatprep.mubr.f32.mxu0 0.0
    %2474 = vmatmul.mubr.f32.gmra.mxu0 %v2394
    %v2475 = vpop.f32.mrf.mxu0
    %v2476 = vadd.f32 0.0, %v2475
    %v2477 = vpop.f32.mrf.mxu0
    %2478 = vmatprep.mubr.f32.mxu0 0.0
    %2479 = vmatmul.mubr.f32.gmra.mxu0 %v2397
    %v2480 = vpop.f32.mrf.mxu0
    %v2481 = vadd.f32 0.0, %v2480
    %v2482 = vpop.f32.mrf.mxu0
    %2483 = vdwg.mxu0
    %v2484 = vmul.f32 %v2466, %v900
    %v2485 = vmul.f32 %v2471, %v900
    %v2486 = vmul.f32 %v2476, %v900
    %v2487 = vmul.f32 %v2481, %v900
    %v2488 = vmul.f32 %v2151, %v284
    %v2489 = vmul.f32 %v2155, %v285
    %v2490 = vmul.f32 %v2161, %v286
    %v2491 = vmul.f32 %v2165, %v287
    %v2492 = vmul.f32 %v2219, %v293
    %v2493 = vmul.f32 %v2221, %v294
    %v2494 = vmul.f32 %v2223, %v295
    %v2495 = vmul.f32 %v2225, %v296
    %v2496 = vadd.f32 %v2488, %v2492
    %v2497 = vadd.f32 %v2489, %v2493
    %v2498 = vadd.f32 %v2490, %v2494
    %v2499 = vadd.f32 %v2491, %v2495
    %2500 = vmatprep.subr.mxu0 0.0
    %2501 = vmatpush1.xpose.msra.mxu0 0.0
    %2502 = vmatprep.subr.mxu0 0.0
    %2503 = vmatpush1.xpose.msra.mxu0 0.0
    %2504 = vmatprep.subr.mxu0 0.0
    %2505 = vmatpush1.xpose.msra.mxu0 0.0
    %2506 = vmatprep.subr.mxu0 0.0
    %2507 = vmatpush1.xpose.msra.mxu0 0.0
    %2508 = vmatprep.subr.mxu0 0.0
    %2509 = vmatpush1.xpose.msra.mxu0 0.0
    %2510 = vmatprep.subr.mxu0 0.0
    %2511 = vmatpush1.xpose.msra.mxu0 0.0
    %2512 = vmatprep.subr.mxu0 0.0
    %2513 = vmatpush1.xpose.msra.mxu0 0.0
    %2514 = vmatprep.subr.mxu0 0.0
    %2515 = vmatpush1.xpose.msra.mxu0 0.0
    %2516 = vmatprep.subr.mxu0 0.0
    %2517 = vmatpush1.xpose.msra.mxu0 0.0
    %2518 = vmatprep.subr.mxu0 0.0
    %2519 = vmatpush1.xpose.msra.mxu0 0.0
    %2520 = vmatprep.subr.mxu0 0.0
    %2521 = vmatpush1.xpose.msra.mxu0 0.0
    %2522 = vmatprep.subr.mxu0 0.0
    %2523 = vmatpush1.xpose.msra.mxu0 0.0
    %2524 = vmatprep.subr.mxu0 0.0
    %2525 = vmatpush1.xpose.msra.mxu0 %v2245
    %2526 = vmatprep.subr.mxu0 0.0
    %2527 = vmatpush1.xpose.msra.mxu0 %v2244
    %2528 = vmatprep.subr.mxu0 0.0
    %2529 = vmatpush1.xpose.msra.mxu0 %v2243
    %2530 = vmatprep.subr.mxu0 0.0
    %2531 = vmatpush1.xpose.msra.mxu0 %v2242
    %2532 = vmatprep.subr.mxu0 0.0
    %2533 = vmatpush2.xpose.msra.mxu0 0.0
    %2534 = vmatprep.subr.mxu0 0.0
    %2535 = vmatpush2.xpose.msra.mxu0 0.0
    %2536 = vmatprep.subr.mxu0 0.0
    %2537 = vmatpush2.xpose.msra.mxu0 0.0
    %2538 = vmatprep.subr.mxu0 0.0
    %2539 = vmatpush2.xpose.msra.mxu0 0.0
    %2540 = vmatprep.subr.mxu0 0.0
    %2541 = vmatpush2.xpose.msra.mxu0 0.0
    %2542 = vmatprep.subr.mxu0 0.0
    %2543 = vmatpush2.xpose.msra.mxu0 0.0
    %2544 = vmatprep.subr.mxu0 0.0
    %2545 = vmatpush2.xpose.msra.mxu0 0.0
    %2546 = vmatprep.subr.mxu0 0.0
    %2547 = vmatpush2.xpose.msra.mxu0 0.0
    %2548 = vmatprep.subr.mxu0 0.0
    %2549 = vmatpush2.xpose.msra.mxu0 0.0
    %2550 = vmatprep.subr.mxu0 0.0
    %2551 = vmatpush2.xpose.msra.mxu0 0.0
    %2552 = vmatprep.subr.mxu0 0.0
    %2553 = vmatpush2.xpose.msra.mxu0 0.0
    %2554 = vmatprep.subr.mxu0 0.0
    %2555 = vmatpush2.xpose.msra.mxu0 0.0
    %2556 = vmatprep.subr.mxu0 0.0
    %2557 = vmatpush2.xpose.msra.mxu0 0.0
    %2558 = vmatprep.subr.mxu0 0.0
    %2559 = vmatpush2.xpose.msra.mxu0 0.0
    %2560 = vmatprep.subr.mxu0 0.0
    %2561 = vmatpush2.xpose.msra.mxu0 0.0
    %2562 = vmatprep.subr.mxu0 0.0
    %2563 = vmatpush2.xpose.msra.mxu0 0.0
    %2564 = vmatprep.mubr.f32.mxu0 0.0
    %2565 = vmatmul.mubr.f32.gmra.mxu0 %v2496
    %v2566 = vpop.f32.mrf.mxu0
    %v2567 = vadd.f32 %v305, %v2566
    %v2568 = vpop.f32.mrf.mxu0
    %2569 = vmatprep.mubr.f32.mxu0 0.0
    %2570 = vmatmul.mubr.f32.gmra.mxu0 %v2497
    %v2571 = vpop.f32.mrf.mxu0
    %v2572 = vadd.f32 %v306, %v2571
    %v2573 = vpop.f32.mrf.mxu0
    %2574 = vmatprep.mubr.f32.mxu0 0.0
    %2575 = vmatmul.mubr.f32.gmra.mxu0 %v2498
    %v2576 = vpop.f32.mrf.mxu0
    %v2577 = vadd.f32 %v307, %v2576
    %v2578 = vpop.f32.mrf.mxu0
    %2579 = vmatprep.mubr.f32.mxu0 0.0
    %2580 = vmatmul.mubr.f32.gmra.mxu0 %v2499
    %v2581 = vpop.f32.mrf.mxu0
    %v2582 = vadd.f32 %v308, %v2581
    %v2583 = vpop.f32.mrf.mxu0
    %2584 = vdwg.mxu0
    %v2585 = vsel %vm223, %v2567, -inf
    %2586 = vmax.xlane.f32.xlu0 %v2585
    %v2587 = vpop.xlane.xlu0 %2586
    %v2588 = vsel %vm223, %v2572, -inf
    %2589 = vmax.xlane.f32.xlu0 %v2588
    %v2590 = vpop.xlane.xlu0 %2589
    %v2591 = vsel %vm223, %v2577, -inf
    %2592 = vmax.xlane.f32.xlu0 %v2591
    %v2593 = vpop.xlane.xlu0 %2592
    %v2594 = vsel %vm223, %v2582, -inf
    %2595 = vmax.xlane.f32.xlu0 %v2594
    %v2596 = vpop.xlane.xlu0 %2595
    %v2597 = vsub.f32 %v2567, %v2587
    %v2598 = vsub.f32 %v2572, %v2590
    %v2599 = vsub.f32 %v2577, %v2593
    %v2600 = vsub.f32 %v2582, %v2596
    %v2601 = vmul.f32 %v2597, 1.442695
    %v2602 = vpow.pop %v2601
    %v2603 = vmul.f32 %v2598, 1.442695
    %v2604 = vpow.pop %v2603
    %v2605 = vmul.f32 %v2599, 1.442695
    %v2606 = vpow.pop %v2605
    %v2607 = vmul.f32 %v2600, 1.442695
    %v2608 = vpow.pop %v2607
    %v2609 = vsel %vm223, %v2602, 0.0
    %2610 = vadd.xlane.f32.xlu0 %v2609
    %v2611 = vpop.xlane.xlu0 %2610
    %v2612 = vsel %vm223, %v2604, 0.0
    %2613 = vadd.xlane.f32.xlu0 %v2612
    %v2614 = vpop.xlane.xlu0 %2613
    %v2615 = vsel %vm223, %v2606, 0.0
    %2616 = vadd.xlane.f32.xlu0 %v2615
    %v2617 = vpop.xlane.xlu0 %2616
    %v2618 = vsel %vm223, %v2608, 0.0
    %2619 = vadd.xlane.f32.xlu0 %v2618
    %v2620 = vpop.xlane.xlu0 %2619
    %v2621 = vrcp.pop %v2611
    %v2622 = vrcp.pop %v2614
    %v2623 = vrcp.pop %v2617
    %v2624 = vrcp.pop %v2620
    %v2625 = vmul.f32 %v2602, %v2621
    %v2626 = vmul.f32 %v2604, %v2622
    %v2627 = vmul.f32 %v2606, %v2623
    %v2628 = vmul.f32 %v2608, %v2624
    %v2630 = vsel %vm223, %v2625, 0
    %v2633 = vsel %vm223, %v2626, 0
    %v2636 = vsel %vm223, %v2627, 0
    %v2639 = vsel %vm223, %v2628, 0
    %2641 = vmatprep.subr.mxu0 0.0
    %2642 = vmatpush1.msra.mxu0 0.0
    %2643 = vmatprep.subr.mxu0 0.0
    %2644 = vmatpush1.msra.mxu0 0.0
    %2645 = vmatprep.subr.mxu0 0.0
    %2646 = vmatpush1.msra.mxu0 0.0
    %2647 = vmatprep.subr.mxu0 0.0
    %2648 = vmatpush1.msra.mxu0 0.0
    %2649 = vmatprep.subr.mxu0 0.0
    %2650 = vmatpush1.msra.mxu0 0.0
    %2651 = vmatprep.subr.mxu0 0.0
    %2652 = vmatpush1.msra.mxu0 0.0
    %2653 = vmatprep.subr.mxu0 0.0
    %2654 = vmatpush1.msra.mxu0 0.0
    %2655 = vmatprep.subr.mxu0 0.0
    %2656 = vmatpush1.msra.mxu0 0.0
    %2657 = vmatprep.subr.mxu0 0.0
    %2658 = vmatpush1.msra.mxu0 0.0
    %2659 = vmatprep.subr.mxu0 0.0
    %2660 = vmatpush1.msra.mxu0 0.0
    %2661 = vmatprep.subr.mxu0 0.0
    %2662 = vmatpush1.msra.mxu0 0.0
    %2663 = vmatprep.subr.mxu0 0.0
    %2664 = vmatpush1.msra.mxu0 0.0
    %2665 = vmatprep.subr.mxu0 0.0
    %2666 = vmatpush1.msra.mxu0 %v2215
    %2667 = vmatprep.subr.mxu0 0.0
    %2668 = vmatpush1.msra.mxu0 %v2212
    %2669 = vmatprep.subr.mxu0 0.0
    %2670 = vmatpush1.msra.mxu0 %v2207
    %2671 = vmatprep.subr.mxu0 0.0
    %2672 = vmatpush1.msra.mxu0 %v2204
    %2673 = vmatprep.subr.mxu0 0.0
    %2674 = vmatpush2.msra.mxu0 0.0
    %2675 = vmatprep.subr.mxu0 0.0
    %2676 = vmatpush2.msra.mxu0 0.0
    %2677 = vmatprep.subr.mxu0 0.0
    %2678 = vmatpush2.msra.mxu0 0.0
    %2679 = vmatprep.subr.mxu0 0.0
    %2680 = vmatpush2.msra.mxu0 0.0
    %2681 = vmatprep.subr.mxu0 0.0
    %2682 = vmatpush2.msra.mxu0 0.0
    %2683 = vmatprep.subr.mxu0 0.0
    %2684 = vmatpush2.msra.mxu0 0.0
    %2685 = vmatprep.subr.mxu0 0.0
    %2686 = vmatpush2.msra.mxu0 0.0
    %2687 = vmatprep.subr.mxu0 0.0
    %2688 = vmatpush2.msra.mxu0 0.0
    %2689 = vmatprep.subr.mxu0 0.0
    %2690 = vmatpush2.msra.mxu0 0.0
    %2691 = vmatprep.subr.mxu0 0.0
    %2692 = vmatpush2.msra.mxu0 0.0
    %2693 = vmatprep.subr.mxu0 0.0
    %2694 = vmatpush2.msra.mxu0 0.0
    %2695 = vmatprep.subr.mxu0 0.0
    %2696 = vmatpush2.msra.mxu0 0.0
    %2697 = vmatprep.subr.mxu0 0.0
    %2698 = vmatpush2.msra.mxu0 0.0
    %2699 = vmatprep.subr.mxu0 0.0
    %2700 = vmatpush2.msra.mxu0 0.0
    %2701 = vmatprep.subr.mxu0 0.0
    %2702 = vmatpush2.msra.mxu0 0.0
    %2703 = vmatprep.subr.mxu0 0.0
    %2704 = vmatpush2.msra.mxu0 0.0
    %2705 = vmatprep.mubr.f32.mxu0 0.0
    %2706 = vmatmul.mubr.f32.gmra.mxu0 %v2630
    %v2707 = vpop.f32.mrf.mxu0
    %v2708 = vadd.f32 0.0, %v2707
    %v2709 = vpop.f32.mrf.mxu0
    %2710 = vmatprep.mubr.f32.mxu0 0.0
    %2711 = vmatmul.mubr.f32.gmra.mxu0 %v2633
    %v2712 = vpop.f32.mrf.mxu0
    %v2713 = vadd.f32 0.0, %v2712
    %v2714 = vpop.f32.mrf.mxu0
    %2715 = vmatprep.mubr.f32.mxu0 0.0
    %2716 = vmatmul.mubr.f32.gmra.mxu0 %v2636
    %v2717 = vpop.f32.mrf.mxu0
    %v2718 = vadd.f32 0.0, %v2717
    %v2719 = vpop.f32.mrf.mxu0
    %2720 = vmatprep.mubr.f32.mxu0 0.0
    %2721 = vmatmul.mubr.f32.gmra.mxu0 %v2639
    %v2722 = vpop.f32.mrf.mxu0
    %v2723 = vadd.f32 0.0, %v2722
    %v2724 = vpop.f32.mrf.mxu0
    %2725 = vdwg.mxu0
    %v2726 = vmul.f32 %v2708, %v1150
    %v2727 = vmul.f32 %v2713, %v1150
    %v2728 = vmul.f32 %v2718, %v1150
    %v2729 = vmul.f32 %v2723, %v1150
    %v2730 = vadd.f32 %v2484, %v2726
    %v2731 = vadd.f32 %v2485, %v2727
    %v2732 = vadd.f32 %v2486, %v2728
    %v2733 = vadd.f32 %v2487, %v2729
    %v2734 = vpack.c.bf16 %v2731, %v2730
    %v2735 = vpack.c.bf16 %v2733, %v2732
    %s2736 = scalar_lea.vmem [#allocation13], 64
    %v2737 = vld [vmem:[%s2736] sm:$0xf]
    %v2738 = vld [vmem:[%s2736 + $0x4] sm:$0xf]
    %v2739 = vld [vmem:[%s2736 + $0x8] sm:$0xf]
    %v2740 = vld [vmem:[%s2736 + $0xc] sm:$0xf]
    %v2741 = vld [vmem:[%s2736 + $0x10] sm:$0xf]
    %v2742 = vld [vmem:[%s2736 + $0x14] sm:$0xf]
    %v2743 = vld [vmem:[%s2736 + $0x18] sm:$0xf]
    %v2744 = vld [vmem:[%s2736 + $0x1c] sm:$0xf]
    %v2745 = vld [vmem:[%s2736 + $0x20] sm:$0xf]
    %v2746 = vld [vmem:[%s2736 + $0x24] sm:$0xf]
    %v2747 = vld [vmem:[%s2736 + $0x28] sm:$0xf]
    %v2748 = vld [vmem:[%s2736 + $0x2c] sm:$0xf]
    %v2749 = vld [vmem:[%s2736 + $0x30] sm:$0xf]
    %v2750 = vld [vmem:[%s2736 + $0x34] sm:$0xf]
    %v2751 = vld [vmem:[%s2736 + $0x38] sm:$0xf]
    %v2752 = vld [vmem:[%s2736 + $0x3c] sm:$0xf]
    %v2769 = vunpack.c.l.b16 %v2737
    %v2770 = vunpack.c.l.b16 %v2738
    %v2771 = vunpack.c.l.b16 %v2739
    %v2772 = vunpack.c.l.b16 %v2740
    %v2773 = vunpack.c.l.b16 %v2741
    %v2774 = vunpack.c.l.b16 %v2742
    %v2775 = vunpack.c.l.b16 %v2743
    %v2776 = vunpack.c.l.b16 %v2744
    %v2777 = vunpack.c.l.b16 %v2745
    %v2778 = vunpack.c.l.b16 %v2746
    %v2779 = vunpack.c.l.b16 %v2747
    %v2780 = vunpack.c.l.b16 %v2748
    %v2781 = vunpack.c.l.b16 %v2749
    %v2782 = vunpack.c.l.b16 %v2750
    %v2783 = vunpack.c.l.b16 %v2751
    %v2784 = vunpack.c.l.b16 %v2752
    %v2785 = vpack.c.b16 %v2770, %v2769
    %v2786 = vpack.c.b16 %v2772, %v2771
    %v2787 = vpack.c.b16 %v2774, %v2773
    %v2788 = vpack.c.b16 %v2776, %v2775
    %v2789 = vpack.c.b16 %v2778, %v2777
    %v2790 = vpack.c.b16 %v2780, %v2779
    %v2791 = vpack.c.b16 %v2782, %v2781
    %v2792 = vpack.c.b16 %v2784, %v2783
    %2801 = vmatprep.subr.bf16.mxu0 0
    %2802 = vmatpush1.bf16.msra.mxu0 %v2792
    %2803 = vmatprep.subr.bf16.mxu0 0
    %2804 = vmatpush1.bf16.msra.mxu0 %v2791
    %2805 = vmatprep.subr.bf16.mxu0 0
    %2806 = vmatpush1.bf16.msra.mxu0 %v2790
    %2807 = vmatprep.subr.bf16.mxu0 0
    %2808 = vmatpush1.bf16.msra.mxu0 %v2789
    %2809 = vmatprep.subr.bf16.mxu0 0
    %2810 = vmatpush1.bf16.msra.mxu0 %v2788
    %2811 = vmatprep.subr.bf16.mxu0 0
    %2812 = vmatpush1.bf16.msra.mxu0 %v2787
    %2813 = vmatprep.subr.bf16.mxu0 0
    %2814 = vmatpush1.bf16.msra.mxu0 %v2786
    %2815 = vmatprep.subr.bf16.mxu0 0
    %2816 = vmatpush1.bf16.msra.mxu0 %v2785
    %2817 = vmatprep.subr.bf16.mxu0 0
    %2818 = vmatpush2.bf16.msra.mxu0 0
    %2819 = vmatprep.subr.bf16.mxu0 0
    %2820 = vmatpush2.bf16.msra.mxu0 0
    %2821 = vmatprep.subr.bf16.mxu0 0
    %2822 = vmatpush2.bf16.msra.mxu0 0
    %2823 = vmatprep.subr.bf16.mxu0 0
    %2824 = vmatpush2.bf16.msra.mxu0 0
    %2825 = vmatprep.subr.bf16.mxu0 0
    %2826 = vmatpush2.bf16.msra.mxu0 0
    %2827 = vmatprep.subr.bf16.mxu0 0
    %2828 = vmatpush2.bf16.msra.mxu0 0
    %2829 = vmatprep.subr.bf16.mxu0 0
    %2830 = vmatpush2.bf16.msra.mxu0 0
    %2831 = vmatprep.subr.bf16.mxu0 0
    %2832 = vmatpush2.bf16.msra.mxu0 0
    %2833 = vmatprep.mubr.bf16.mxu0 0
    %2834 = vmatmul.mubr.bf16.gmra.mxu0 %v2734
    %v2835 = vpop.f32.mrf.mxu0
    %v2836 = vadd.f32 %v1883, %v2835
    %v2837 = vpop.f32.mrf.mxu0
    %v2838 = vpop.f32.mrf.mxu0
    %v2839 = vadd.f32 %v1886, %v2838
    %v2840 = vpop.f32.mrf.mxu0
    %2841 = vmatprep.mubr.bf16.mxu0 0
    %2842 = vmatmul.mubr.bf16.gmra.mxu0 %v2735
    %v2843 = vpop.f32.mrf.mxu0
    %v2844 = vadd.f32 %v1891, %v2843
    %v2845 = vpop.f32.mrf.mxu0
    %v2846 = vpop.f32.mrf.mxu0
    %v2847 = vadd.f32 %v1894, %v2846
    %v2848 = vpop.f32.mrf.mxu0
    %2849 = vdwg.mxu0
    %s2850 = scalar_lea.vmem %s10, 1
    %v2851 = vld [vmem:[%s2850] sm:$0x1]
    %2852 = vadd.xlane.f32.xlu0 %v2836
    %v2853 = vpop.xlane.xlu0 %2852
    %2854 = vadd.xlane.f32.xlu0 %v2839
    %v2855 = vpop.xlane.xlu0 %2854
    %2856 = vadd.xlane.f32.xlu0 %v2844
    %v2857 = vpop.xlane.xlu0 %2856
    %2858 = vadd.xlane.f32.xlu0 %v2847
    %v2859 = vpop.xlane.xlu0 %2858
    %v2860 = vmul.f32 %v2853, %v318
    %v2861 = vmul.f32 %v2855, %v318
    %v2862 = vmul.f32 %v2857, %v318
    %v2863 = vmul.f32 %v2859, %v318
    %v2864 = vsub.f32 %v2836, %v2860
    %v2865 = vsub.f32 %v2839, %v2861
    %v2866 = vsub.f32 %v2844, %v2862
    %v2867 = vsub.f32 %v2847, %v2863
    %v2868 = vmul.f32 %v2864, %v2864
    %v2869 = vmul.f32 %v2865, %v2865
    %v2870 = vmul.f32 %v2866, %v2866
    %v2871 = vmul.f32 %v2867, %v2867
    %2872 = vadd.xlane.f32.xlu0 %v2868
    %v2873 = vpop.xlane.xlu0 %2872
    %2874 = vadd.xlane.f32.xlu0 %v2869
    %v2875 = vpop.xlane.xlu0 %2874
    %2876 = vadd.xlane.f32.xlu0 %v2870
    %v2877 = vpop.xlane.xlu0 %2876
    %2878 = vadd.xlane.f32.xlu0 %v2871
    %v2879 = vpop.xlane.xlu0 %2878
    %v2880 = vmul.f32 %v2873, %v318
    %v2881 = vmul.f32 %v2875, %v318
    %v2882 = vmul.f32 %v2877, %v318
    %v2883 = vmul.f32 %v2879, %v318
    %v2884 = vadd.f32 %v2880, 1e-05
    %v2885 = vadd.f32 %v2881, 1e-05
    %v2886 = vadd.f32 %v2882, 1e-05
    %v2887 = vadd.f32 %v2883, 1e-05
    %v2888 = vrsqrt.pop %v2884
    %v2889 = vrsqrt.pop %v2885
    %v2890 = vrsqrt.pop %v2886
    %v2891 = vrsqrt.pop %v2887
    %v2892 = vmul.f32 %v2864, %v2888
    %v2893 = vmul.f32 %v2865, %v2889
    %v2894 = vmul.f32 %v2866, %v2890
    %v2895 = vmul.f32 %v2867, %v2891
    %v2897 = vlaneseq
    %v2898 = vshrl.u32 %v2897, 7
    %v2899 = vsub.s32 0, %v2898
    %v2900 = vrot.slane %v2851, %v2899
    %v2902 = vmul.f32 %v2892, %v2900
    %v2903 = vmul.f32 %v2893, %v2900
    %v2904 = vmul.f32 %v2894, %v2900
    %v2905 = vmul.f32 %v2895, %v2900
    %v2906 = vpack.c.bf16 %v2903, %v2902
    %v2907 = vpack.c.bf16 %v2905, %v2904
    %s2908 = scalar_lea.vmem [#allocation14], 256
    %v2909 = vld [vmem:[%s2908] sm:$0xff]
    %v2910 = vld [vmem:[%s2908 + $0x8] sm:$0xff]
    %v2911 = vld [vmem:[%s2908 + $0x10] sm:$0xff]
    %v2912 = vld [vmem:[%s2908 + $0x18] sm:$0xff]
    %v2913 = vld [vmem:[%s2908 + $0x20] sm:$0xff]
    %v2914 = vld [vmem:[%s2908 + $0x28] sm:$0xff]
    %v2915 = vld [vmem:[%s2908 + $0x30] sm:$0xff]
    %v2916 = vld [vmem:[%s2908 + $0x38] sm:$0xff]
    %v2917 = vld [vmem:[%s2908 + $0x40] sm:$0xff]
    %v2918 = vld [vmem:[%s2908 + $0x48] sm:$0xff]
    %v2919 = vld [vmem:[%s2908 + $0x50] sm:$0xff]
    %v2920 = vld [vmem:[%s2908 + $0x58] sm:$0xff]
    %v2921 = vld [vmem:[%s2908 + $0x60] sm:$0xff]
    %v2922 = vld [vmem:[%s2908 + $0x68] sm:$0xff]
    %v2923 = vld [vmem:[%s2908 + $0x70] sm:$0xff]
    %v2924 = vld [vmem:[%s2908 + $0x78] sm:$0xff]
    %v2925 = vld [vmem:[%s2908 + $0x80] sm:$0xff]
    %v2926 = vld [vmem:[%s2908 + $0x88] sm:$0xff]
    %v2927 = vld [vmem:[%s2908 + $0x90] sm:$0xff]
    %v2928 = vld [vmem:[%s2908 + $0x98] sm:$0xff]
    %v2929 = vld [vmem:[%s2908 + $0xa0] sm:$0xff]
    %v2930 = vld [vmem:[%s2908 + $0xa8] sm:$0xff]
    %v2931 = vld [vmem:[%s2908 + $0xb0] sm:$0xff]
    %v2932 = vld [vmem:[%s2908 + $0xb8] sm:$0xff]
    %v2933 = vld [vmem:[%s2908 + $0xc0] sm:$0xff]
    %v2934 = vld [vmem:[%s2908 + $0xc8] sm:$0xff]
    %v2935 = vld [vmem:[%s2908 + $0xd0] sm:$0xff]
    %v2936 = vld [vmem:[%s2908 + $0xd8] sm:$0xff]
    %v2937 = vld [vmem:[%s2908 + $0xe0] sm:$0xff]
    %v2938 = vld [vmem:[%s2908 + $0xe8] sm:$0xff]
    %v2939 = vld [vmem:[%s2908 + $0xf0] sm:$0xff]
    %v2940 = vld [vmem:[%s2908 + $0xf8] sm:$0xff]
    %s2941 = scalar_lea.vmem [#allocation16], 4
    %v2942 = vld [vmem:[%s2941] sm:$0xf]
    %v2944 = vlaneseq
    %v2945 = vshrl.u32 %v2944, 7
    %v2946 = vsub.s32 0, %v2945
    %v2947 = vrot.slane %v2942, %v2946
    %v2948 = vlaneseq
    %v2949 = vshrl.u32 %v2948, 7
    %v2950 = vsub.s32 1, %v2949
    %v2951 = vrot.slane %v2942, %v2950
    %v2952 = vlaneseq
    %v2953 = vshrl.u32 %v2952, 7
    %v2954 = vsub.s32 2, %v2953
    %v2955 = vrot.slane %v2942, %v2954
    %v2956 = vlaneseq
    %v2957 = vshrl.u32 %v2956, 7
    %v2958 = vsub.s32 3, %v2957
    %v2959 = vrot.slane %v2942, %v2958
    %v2996 = vunpack.c.l.b16 %v2909
    %v2997 = vunpack.c.h.b16 %v2909
    %v2998 = vunpack.c.l.b16 %v2910
    %v2999 = vunpack.c.h.b16 %v2910
    %v3000 = vunpack.c.l.b16 %v2911
    %v3001 = vunpack.c.h.b16 %v2911
    %v3002 = vunpack.c.l.b16 %v2912
    %v3003 = vunpack.c.h.b16 %v2912
    %v3004 = vunpack.c.l.b16 %v2913
    %v3005 = vunpack.c.h.b16 %v2913
    %v3006 = vunpack.c.l.b16 %v2914
    %v3007 = vunpack.c.h.b16 %v2914
    %v3008 = vunpack.c.l.b16 %v2915
    %v3009 = vunpack.c.h.b16 %v2915
    %v3010 = vunpack.c.l.b16 %v2916
    %v3011 = vunpack.c.h.b16 %v2916
    %v3012 = vunpack.c.l.b16 %v2917
    %v3013 = vunpack.c.h.b16 %v2917
    %v3014 = vunpack.c.l.b16 %v2918
    %v3015 = vunpack.c.h.b16 %v2918
    %v3016 = vunpack.c.l.b16 %v2919
    %v3017 = vunpack.c.h.b16 %v2919
    %v3018 = vunpack.c.l.b16 %v2920
    %v3019 = vunpack.c.h.b16 %v2920
    %v3020 = vunpack.c.l.b16 %v2921
    %v3021 = vunpack.c.h.b16 %v2921
    %v3022 = vunpack.c.l.b16 %v2922
    %v3023 = vunpack.c.h.b16 %v2922
    %v3024 = vunpack.c.l.b16 %v2923
    %v3025 = vunpack.c.h.b16 %v2923
    %v3026 = vunpack.c.l.b16 %v2924
    %v3027 = vunpack.c.h.b16 %v2924
    %v3028 = vunpack.c.l.b16 %v2925
    %v3029 = vunpack.c.h.b16 %v2925
    %v3030 = vunpack.c.l.b16 %v2926
    %v3031 = vunpack.c.h.b16 %v2926
    %v3032 = vunpack.c.l.b16 %v2927
    %v3033 = vunpack.c.h.b16 %v2927
    %v3034 = vunpack.c.l.b16 %v2928
    %v3035 = vunpack.c.h.b16 %v2928
    %v3036 = vunpack.c.l.b16 %v2929
    %v3037 = vunpack.c.h.b16 %v2929
    %v3038 = vunpack.c.l.b16 %v2930
    %v3039 = vunpack.c.h.b16 %v2930
    %v3040 = vunpack.c.l.b16 %v2931
    %v3041 = vunpack.c.h.b16 %v2931
    %v3042 = vunpack.c.l.b16 %v2932
    %v3043 = vunpack.c.h.b16 %v2932
    %v3044 = vunpack.c.l.b16 %v2933
    %v3045 = vunpack.c.h.b16 %v2933
    %v3046 = vunpack.c.l.b16 %v2934
    %v3047 = vunpack.c.h.b16 %v2934
    %v3048 = vunpack.c.l.b16 %v2935
    %v3049 = vunpack.c.h.b16 %v2935
    %v3050 = vunpack.c.l.b16 %v2936
    %v3051 = vunpack.c.h.b16 %v2936
    %v3052 = vunpack.c.l.b16 %v2937
    %v3053 = vunpack.c.h.b16 %v2937
    %v3054 = vunpack.c.l.b16 %v2938
    %v3055 = vunpack.c.h.b16 %v2938
    %v3056 = vunpack.c.l.b16 %v2939
    %v3057 = vunpack.c.h.b16 %v2939
    %v3058 = vunpack.c.l.b16 %v2940
    %v3059 = vunpack.c.h.b16 %v2940
    %v3060 = vpack.c.b16 %v3000, %v2996
    %v3061 = vpack.c.b16 %v3001, %v2997
    %v3062 = vpack.c.b16 %v3002, %v2998
    %v3063 = vpack.c.b16 %v3003, %v2999
    %v3064 = vpack.c.b16 %v3008, %v3004
    %v3065 = vpack.c.b16 %v3009, %v3005
    %v3066 = vpack.c.b16 %v3010, %v3006
    %v3067 = vpack.c.b16 %v3011, %v3007
    %v3068 = vpack.c.b16 %v3016, %v3012
    %v3069 = vpack.c.b16 %v3017, %v3013
    %v3070 = vpack.c.b16 %v3018, %v3014
    %v3071 = vpack.c.b16 %v3019, %v3015
    %v3072 = vpack.c.b16 %v3024, %v3020
    %v3073 = vpack.c.b16 %v3025, %v3021
    %v3074 = vpack.c.b16 %v3026, %v3022
    %v3075 = vpack.c.b16 %v3027, %v3023
    %v3076 = vpack.c.b16 %v3032, %v3028
    %v3077 = vpack.c.b16 %v3033, %v3029
    %v3078 = vpack.c.b16 %v3034, %v3030
    %v3079 = vpack.c.b16 %v3035, %v3031
    %v3080 = vpack.c.b16 %v3040, %v3036
    %v3081 = vpack.c.b16 %v3041, %v3037
    %v3082 = vpack.c.b16 %v3042, %v3038
    %v3083 = vpack.c.b16 %v3043, %v3039
    %v3084 = vpack.c.b16 %v3048, %v3044
    %v3085 = vpack.c.b16 %v3049, %v3045
    %v3086 = vpack.c.b16 %v3050, %v3046
    %v3087 = vpack.c.b16 %v3051, %v3047
    %v3088 = vpack.c.b16 %v3056, %v3052
    %v3089 = vpack.c.b16 %v3057, %v3053
    %v3090 = vpack.c.b16 %v3058, %v3054
    %v3091 = vpack.c.b16 %v3059, %v3055
    %3124 = vmatprep.subr.bf16.mxu0 %v3089
    %3125 = vmatpush1.bf16.msra.mxu0 %v3088
    %3126 = vmatprep.subr.bf16.mxu0 %v3085
    %3127 = vmatpush1.bf16.msra.mxu0 %v3084
    %3128 = vmatprep.subr.bf16.mxu0 %v3081
    %3129 = vmatpush1.bf16.msra.mxu0 %v3080
    %3130 = vmatprep.subr.bf16.mxu0 %v3077
    %3131 = vmatpush1.bf16.msra.mxu0 %v3076
    %3132 = vmatprep.subr.bf16.mxu0 %v3073
    %3133 = vmatpush1.bf16.msra.mxu0 %v3072
    %3134 = vmatprep.subr.bf16.mxu0 %v3069
    %3135 = vmatpush1.bf16.msra.mxu0 %v3068
    %3136 = vmatprep.subr.bf16.mxu0 %v3065
    %3137 = vmatpush1.bf16.msra.mxu0 %v3064
    %3138 = vmatprep.subr.bf16.mxu0 %v3061
    %3139 = vmatpush1.bf16.msra.mxu0 %v3060
    %3140 = vmatprep.subr.bf16.mxu0 0
    %3141 = vmatpush2.bf16.msra.mxu0 0
    %3142 = vmatprep.subr.bf16.mxu0 0
    %3143 = vmatpush2.bf16.msra.mxu0 0
    %3144 = vmatprep.subr.bf16.mxu0 0
    %3145 = vmatpush2.bf16.msra.mxu0 0
    %3146 = vmatprep.subr.bf16.mxu0 0
    %3147 = vmatpush2.bf16.msra.mxu0 0
    %3148 = vmatprep.subr.bf16.mxu0 0
    %3149 = vmatpush2.bf16.msra.mxu0 0
    %3150 = vmatprep.subr.bf16.mxu0 0
    %3151 = vmatpush2.bf16.msra.mxu0 0
    %3152 = vmatprep.subr.bf16.mxu0 0
    %3153 = vmatpush2.bf16.msra.mxu0 0
    %3154 = vmatprep.subr.bf16.mxu0 0
    %3155 = vmatpush2.bf16.msra.mxu0 0
    %3156 = vmatprep.mubr.bf16.mxu0 0
    %3157 = vmatmul.mubr.bf16.gmra.mxu0 %v2906
    %v3158 = vpop.f32.mrf.mxu0
    %v3159 = vadd.f32 %v2947, %v3158
    %v3160 = vpop.f32.mrf.mxu0
    %v3161 = vadd.f32 %v2951, %v3160
    %v3162 = vpop.f32.mrf.mxu0
    %v3163 = vadd.f32 %v2947, %v3162
    %v3164 = vpop.f32.mrf.mxu0
    %v3165 = vadd.f32 %v2951, %v3164
    %3166 = vmatprep.mubr.bf16.mxu0 0
    %3167 = vmatmul.mubr.bf16.gmra.mxu0 %v2907
    %v3168 = vpop.f32.mrf.mxu0
    %v3169 = vadd.f32 %v2947, %v3168
    %v3170 = vpop.f32.mrf.mxu0
    %v3171 = vadd.f32 %v2951, %v3170
    %v3172 = vpop.f32.mrf.mxu0
    %v3173 = vadd.f32 %v2947, %v3172
    %v3174 = vpop.f32.mrf.mxu0
    %v3175 = vadd.f32 %v2951, %v3174
    %3176 = vdwg.mxu0
    %3177 = vmatprep.subr.bf16.mxu0 %v3091
    %3178 = vmatpush1.bf16.msra.mxu0 %v3090
    %3179 = vmatprep.subr.bf16.mxu0 %v3087
    %3180 = vmatpush1.bf16.msra.mxu0 %v3086
    %3181 = vmatprep.subr.bf16.mxu0 %v3083
    %3182 = vmatpush1.bf16.msra.mxu0 %v3082
    %3183 = vmatprep.subr.bf16.mxu0 %v3079
    %3184 = vmatpush1.bf16.msra.mxu0 %v3078
    %3185 = vmatprep.subr.bf16.mxu0 %v3075
    %3186 = vmatpush1.bf16.msra.mxu0 %v3074
    %3187 = vmatprep.subr.bf16.mxu0 %v3071
    %3188 = vmatpush1.bf16.msra.mxu0 %v3070
    %3189 = vmatprep.subr.bf16.mxu0 %v3067
    %3190 = vmatpush1.bf16.msra.mxu0 %v3066
    %3191 = vmatprep.subr.bf16.mxu0 %v3063
    %3192 = vmatpush1.bf16.msra.mxu0 %v3062
    %3193 = vmatprep.subr.bf16.mxu0 0
    %3194 = vmatpush2.bf16.msra.mxu0 0
    %3195 = vmatprep.subr.bf16.mxu0 0
    %3196 = vmatpush2.bf16.msra.mxu0 0
    %3197 = vmatprep.subr.bf16.mxu0 0
    %3198 = vmatpush2.bf16.msra.mxu0 0
    %3199 = vmatprep.subr.bf16.mxu0 0
    %3200 = vmatpush2.bf16.msra.mxu0 0
    %3201 = vmatprep.subr.bf16.mxu0 0
    %3202 = vmatpush2.bf16.msra.mxu0 0
    %3203 = vmatprep.subr.bf16.mxu0 0
    %3204 = vmatpush2.bf16.msra.mxu0 0
    %3205 = vmatprep.subr.bf16.mxu0 0
    %3206 = vmatpush2.bf16.msra.mxu0 0
    %3207 = vmatprep.subr.bf16.mxu0 0
    %3208 = vmatpush2.bf16.msra.mxu0 0
    %3209 = vmatprep.mubr.bf16.mxu0 0
    %3210 = vmatmul.mubr.bf16.gmra.mxu0 %v2906
    %v3211 = vpop.f32.mrf.mxu0
    %v3212 = vadd.f32 %v2955, %v3211
    %v3213 = vpop.f32.mrf.mxu0
    %v3214 = vadd.f32 %v2959, %v3213
    %v3215 = vpop.f32.mrf.mxu0
    %v3216 = vadd.f32 %v2955, %v3215
    %v3217 = vpop.f32.mrf.mxu0
    %v3218 = vadd.f32 %v2959, %v3217
    %3219 = vmatprep.mubr.bf16.mxu0 0
    %3220 = vmatmul.mubr.bf16.gmra.mxu0 %v2907
    %v3221 = vpop.f32.mrf.mxu0
    %v3222 = vadd.f32 %v2955, %v3221
    %v3223 = vpop.f32.mrf.mxu0
    %v3224 = vadd.f32 %v2959, %v3223
    %v3225 = vpop.f32.mrf.mxu0
    %v3226 = vadd.f32 %v2955, %v3225
    %v3227 = vpop.f32.mrf.mxu0
    %v3228 = vadd.f32 %v2959, %v3227
    %3229 = vdwg.mxu0
    %v3230 = vxor.u32 %v3212, 2147483648
    %v3231 = vxor.u32 %v3214, 2147483648
    %v3232 = vxor.u32 %v3216, 2147483648
    %v3233 = vxor.u32 %v3218, 2147483648
    %v3234 = vxor.u32 %v3222, 2147483648
    %v3235 = vxor.u32 %v3224, 2147483648
    %v3236 = vxor.u32 %v3226, 2147483648
    %v3237 = vxor.u32 %v3228, 2147483648
    %v3238 = vmul.f32 %v3230, 1.442695
    %v3239 = vpow.pop %v3238
    %v3240 = vmul.f32 %v3231, 1.442695
    %v3241 = vpow.pop %v3240
    %v3242 = vmul.f32 %v3232, 1.442695
    %v3243 = vpow.pop %v3242
    %v3244 = vmul.f32 %v3233, 1.442695
    %v3245 = vpow.pop %v3244
    %v3246 = vmul.f32 %v3234, 1.442695
    %v3247 = vpow.pop %v3246
    %v3248 = vmul.f32 %v3235, 1.442695
    %v3249 = vpow.pop %v3248
    %v3250 = vmul.f32 %v3236, 1.442695
    %v3251 = vpow.pop %v3250
    %v3252 = vmul.f32 %v3237, 1.442695
    %v3253 = vpow.pop %v3252
    %v3254 = vadd.f32 %v3239, 1.0
    %v3255 = vadd.f32 %v3241, 1.0
    %v3256 = vadd.f32 %v3243, 1.0
    %v3257 = vadd.f32 %v3245, 1.0
    %v3258 = vadd.f32 %v3247, 1.0
    %v3259 = vadd.f32 %v3249, 1.0
    %v3260 = vadd.f32 %v3251, 1.0
    %v3261 = vadd.f32 %v3253, 1.0
    %v3262 = vrcp.pop %v3254
    %v3263 = vmul.f32 1.0, %v3262
    %v3264 = vrcp.pop %v3255
    %v3265 = vmul.f32 1.0, %v3264
    %v3266 = vrcp.pop %v3256
    %v3267 = vmul.f32 1.0, %v3266
    %v3268 = vrcp.pop %v3257
    %v3269 = vmul.f32 1.0, %v3268
    %v3270 = vrcp.pop %v3258
    %v3271 = vmul.f32 1.0, %v3270
    %v3272 = vrcp.pop %v3259
    %v3273 = vmul.f32 1.0, %v3272
    %v3274 = vrcp.pop %v3260
    %v3275 = vmul.f32 1.0, %v3274
    %v3276 = vrcp.pop %v3261
    %v3277 = vmul.f32 1.0, %v3276
    %v3278 = vmul.f32 %v3212, %v3263
    %v3279 = vmul.f32 %v3214, %v3265
    %v3280 = vmul.f32 %v3216, %v3267
    %v3281 = vmul.f32 %v3218, %v3269
    %v3282 = vmul.f32 %v3222, %v3271
    %v3283 = vmul.f32 %v3224, %v3273
    %v3284 = vmul.f32 %v3226, %v3275
    %v3285 = vmul.f32 %v3228, %v3277
    %v3286 = vmul.f32 %v3159, %v3278
    %v3287 = vmul.f32 %v3161, %v3279
    %v3288 = vmul.f32 %v3163, %v3280
    %v3289 = vmul.f32 %v3165, %v3281
    %v3290 = vmul.f32 %v3169, %v3282
    %v3291 = vmul.f32 %v3171, %v3283
    %v3292 = vmul.f32 %v3173, %v3284
    %v3293 = vmul.f32 %v3175, %v3285
    %v3294 = vpack.c.bf16 %v3288, %v3286
    %v3295 = vpack.c.bf16 %v3289, %v3287
    %v3296 = vpack.c.bf16 %v3292, %v3290
    %v3297 = vpack.c.bf16 %v3293, %v3291
    %s3298 = scalar_lea.vmem [#allocation17], 128
    %v3299 = vld [vmem:[%s3298] sm:$0xf]
    %v3300 = vld [vmem:[%s3298 + $0x4] sm:$0xf]
    %v3301 = vld [vmem:[%s3298 + $0x8] sm:$0xf]
    %v3302 = vld [vmem:[%s3298 + $0xc] sm:$0xf]
    %v3303 = vld [vmem:[%s3298 + $0x10] sm:$0xf]
    %v3304 = vld [vmem:[%s3298 + $0x14] sm:$0xf]
    %v3305 = vld [vmem:[%s3298 + $0x18] sm:$0xf]
    %v3306 = vld [vmem:[%s3298 + $0x1c] sm:$0xf]
    %v3307 = vld [vmem:[%s3298 + $0x20] sm:$0xf]
    %v3308 = vld [vmem:[%s3298 + $0x24] sm:$0xf]
    %v3309 = vld [vmem:[%s3298 + $0x28] sm:$0xf]
    %v3310 = vld [vmem:[%s3298 + $0x2c] sm:$0xf]
    %v3311 = vld [vmem:[%s3298 + $0x30] sm:$0xf]
    %v3312 = vld [vmem:[%s3298 + $0x34] sm:$0xf]
    %v3313 = vld [vmem:[%s3298 + $0x38] sm:$0xf]
    %v3314 = vld [vmem:[%s3298 + $0x3c] sm:$0xf]
    %v3315 = vld [vmem:[%s3298 + $0x40] sm:$0xf]
    %v3316 = vld [vmem:[%s3298 + $0x44] sm:$0xf]
    %v3317 = vld [vmem:[%s3298 + $0x48] sm:$0xf]
    %v3318 = vld [vmem:[%s3298 + $0x4c] sm:$0xf]
    %v3319 = vld [vmem:[%s3298 + $0x50] sm:$0xf]
    %v3320 = vld [vmem:[%s3298 + $0x54] sm:$0xf]
    %v3321 = vld [vmem:[%s3298 + $0x58] sm:$0xf]
    %v3322 = vld [vmem:[%s3298 + $0x5c] sm:$0xf]
    %v3323 = vld [vmem:[%s3298 + $0x60] sm:$0xf]
    %v3324 = vld [vmem:[%s3298 + $0x64] sm:$0xf]
    %v3325 = vld [vmem:[%s3298 + $0x68] sm:$0xf]
    %v3326 = vld [vmem:[%s3298 + $0x6c] sm:$0xf]
    %v3327 = vld [vmem:[%s3298 + $0x70] sm:$0xf]
    %v3328 = vld [vmem:[%s3298 + $0x74] sm:$0xf]
    %v3329 = vld [vmem:[%s3298 + $0x78] sm:$0xf]
    %v3330 = vld [vmem:[%s3298 + $0x7c] sm:$0xf]
    %v3363 = vunpack.c.l.b16 %v3299
    %v3364 = vunpack.c.l.b16 %v3300
    %v3365 = vunpack.c.l.b16 %v3301
    %v3366 = vunpack.c.l.b16 %v3302
    %v3367 = vunpack.c.l.b16 %v3303
    %v3368 = vunpack.c.l.b16 %v3304
    %v3369 = vunpack.c.l.b16 %v3305
    %v3370 = vunpack.c.l.b16 %v3306
    %v3371 = vunpack.c.l.b16 %v3307
    %v3372 = vunpack.c.l.b16 %v3308
    %v3373 = vunpack.c.l.b16 %v3309
    %v3374 = vunpack.c.l.b16 %v3310
    %v3375 = vunpack.c.l.b16 %v3311
    %v3376 = vunpack.c.l.b16 %v3312
    %v3377 = vunpack.c.l.b16 %v3313
    %v3378 = vunpack.c.l.b16 %v3314
    %v3379 = vunpack.c.l.b16 %v3315
    %v3380 = vunpack.c.l.b16 %v3316
    %v3381 = vunpack.c.l.b16 %v3317
    %v3382 = vunpack.c.l.b16 %v3318
    %v3383 = vunpack.c.l.b16 %v3319
    %v3384 = vunpack.c.l.b16 %v3320
    %v3385 = vunpack.c.l.b16 %v3321
    %v3386 = vunpack.c.l.b16 %v3322
    %v3387 = vunpack.c.l.b16 %v3323
    %v3388 = vunpack.c.l.b16 %v3324
    %v3389 = vunpack.c.l.b16 %v3325
    %v3390 = vunpack.c.l.b16 %v3326
    %v3391 = vunpack.c.l.b16 %v3327
    %v3392 = vunpack.c.l.b16 %v3328
    %v3393 = vunpack.c.l.b16 %v3329
    %v3394 = vunpack.c.l.b16 %v3330
    %v3395 = vpack.c.b16 %v3364, %v3363
    %v3396 = vpack.c.b16 %v3366, %v3365
    %v3397 = vpack.c.b16 %v3368, %v3367
    %v3398 = vpack.c.b16 %v3370, %v3369
    %v3399 = vpack.c.b16 %v3372, %v3371
    %v3400 = vpack.c.b16 %v3374, %v3373
    %v3401 = vpack.c.b16 %v3376, %v3375
    %v3402 = vpack.c.b16 %v3378, %v3377
    %v3403 = vpack.c.b16 %v3380, %v3379
    %v3404 = vpack.c.b16 %v3382, %v3381
    %v3405 = vpack.c.b16 %v3384, %v3383
    %v3406 = vpack.c.b16 %v3386, %v3385
    %v3407 = vpack.c.b16 %v3388, %v3387
    %v3408 = vpack.c.b16 %v3390, %v3389
    %v3409 = vpack.c.b16 %v3392, %v3391
    %v3410 = vpack.c.b16 %v3394, %v3393
    %3427 = vmatprep.subr.bf16.mxu0 0
    %3428 = vmatpush1.bf16.msra.mxu0 %v3402
    %3429 = vmatprep.subr.bf16.mxu0 0
    %3430 = vmatpush1.bf16.msra.mxu0 %v3401
    %3431 = vmatprep.subr.bf16.mxu0 0
    %3432 = vmatpush1.bf16.msra.mxu0 %v3400
    %3433 = vmatprep.subr.bf16.mxu0 0
    %3434 = vmatpush1.bf16.msra.mxu0 %v3399
    %3435 = vmatprep.subr.bf16.mxu0 0
    %3436 = vmatpush1.bf16.msra.mxu0 %v3398
    %3437 = vmatprep.subr.bf16.mxu0 0
    %3438 = vmatpush1.bf16.msra.mxu0 %v3397
    %3439 = vmatprep.subr.bf16.mxu0 0
    %3440 = vmatpush1.bf16.msra.mxu0 %v3396
    %3441 = vmatprep.subr.bf16.mxu0 0
    %3442 = vmatpush1.bf16.msra.mxu0 %v3395
    %3443 = vmatprep.subr.bf16.mxu0 0
    %3444 = vmatpush2.bf16.msra.mxu0 %v3410
    %3445 = vmatprep.subr.bf16.mxu0 0
    %3446 = vmatpush2.bf16.msra.mxu0 %v3409
    %3447 = vmatprep.subr.bf16.mxu0 0
    %3448 = vmatpush2.bf16.msra.mxu0 %v3408
    %3449 = vmatprep.subr.bf16.mxu0 0
    %3450 = vmatpush2.bf16.msra.mxu0 %v3407
    %3451 = vmatprep.subr.bf16.mxu0 0
    %3452 = vmatpush2.bf16.msra.mxu0 %v3406
    %3453 = vmatprep.subr.bf16.mxu0 0
    %3454 = vmatpush2.bf16.msra.mxu0 %v3405
    %3455 = vmatprep.subr.bf16.mxu0 0
    %3456 = vmatpush2.bf16.msra.mxu0 %v3404
    %3457 = vmatprep.subr.bf16.mxu0 0
    %3458 = vmatpush2.bf16.msra.mxu0 %v3403
    %3459 = vmatprep.mubr.bf16.mxu0 %v3295
    %3460 = vmatmul.mubr.bf16.gmra.mxu0 %v3294
    %v3461 = vpop.f32.mrf.mxu0
    %v3462 = vadd.f32 %v2836, %v3461
    %v3463 = vpop.f32.mrf.mxu0
    %v3464 = vpop.f32.mrf.mxu0
    %v3465 = vadd.f32 %v2839, %v3464
    %v3466 = vpop.f32.mrf.mxu0
    %3467 = vmatprep.mubr.bf16.mxu0 %v3297
    %3468 = vmatmul.mubr.bf16.gmra.mxu0 %v3296
    %v3469 = vpop.f32.mrf.mxu0
    %v3470 = vadd.f32 %v2844, %v3469
    %v3471 = vpop.f32.mrf.mxu0
    %v3472 = vpop.f32.mrf.mxu0
    %v3473 = vadd.f32 %v2847, %v3472
    %v3474 = vpop.f32.mrf.mxu0
    %3475 = vdwg.mxu0
    %v3476 = vld [vmem:[#allocation10] sm:$0xff]
    %v3477 = vld [vmem:[#allocation10 + $0x8] sm:$0xff]
    %v3479 = vsel %vm223, %v3476, 0
    %v3482 = vsel %vm223, %v3477, 0
    %3484 = vmatprep.subr.mxu0 0.0
    %3485 = vmatpush1.msra.mxu0 0.0
    %3486 = vmatprep.subr.mxu0 0.0
    %3487 = vmatpush1.msra.mxu0 0.0
    %3488 = vmatprep.subr.mxu0 0.0
    %3489 = vmatpush1.msra.mxu0 0.0
    %3490 = vmatprep.subr.mxu0 0.0
    %3491 = vmatpush1.msra.mxu0 0.0
    %3492 = vmatprep.subr.mxu0 0.0
    %3493 = vmatpush1.msra.mxu0 0.0
    %3494 = vmatprep.subr.mxu0 0.0
    %3495 = vmatpush1.msra.mxu0 0.0
    %3496 = vmatprep.subr.mxu0 0.0
    %3497 = vmatpush1.msra.mxu0 0.0
    %3498 = vmatprep.subr.mxu0 0.0
    %3499 = vmatpush1.msra.mxu0 0.0
    %3500 = vmatprep.subr.mxu0 0.0
    %3501 = vmatpush1.msra.mxu0 0.0
    %3502 = vmatprep.subr.mxu0 0.0
    %3503 = vmatpush1.msra.mxu0 0.0
    %3504 = vmatprep.subr.mxu0 0.0
    %3505 = vmatpush1.msra.mxu0 0.0
    %3506 = vmatprep.subr.mxu0 0.0
    %3507 = vmatpush1.msra.mxu0 0.0
    %3508 = vmatprep.subr.mxu0 0.0
    %3509 = vmatpush1.msra.mxu0 %v3473
    %3510 = vmatprep.subr.mxu0 0.0
    %3511 = vmatpush1.msra.mxu0 %v3470
    %3512 = vmatprep.subr.mxu0 0.0
    %3513 = vmatpush1.msra.mxu0 %v3465
    %3514 = vmatprep.subr.mxu0 0.0
    %3515 = vmatpush1.msra.mxu0 %v3462
    %3516 = vmatprep.subr.mxu0 0.0
    %3517 = vmatpush2.msra.mxu0 0.0
    %3518 = vmatprep.subr.mxu0 0.0
    %3519 = vmatpush2.msra.mxu0 0.0
    %3520 = vmatprep.subr.mxu0 0.0
    %3521 = vmatpush2.msra.mxu0 0.0
    %3522 = vmatprep.subr.mxu0 0.0
    %3523 = vmatpush2.msra.mxu0 0.0
    %3524 = vmatprep.subr.mxu0 0.0
    %3525 = vmatpush2.msra.mxu0 0.0
    %3526 = vmatprep.subr.mxu0 0.0
    %3527 = vmatpush2.msra.mxu0 0.0
    %3528 = vmatprep.subr.mxu0 0.0
    %3529 = vmatpush2.msra.mxu0 0.0
    %3530 = vmatprep.subr.mxu0 0.0
    %3531 = vmatpush2.msra.mxu0 0.0
    %3532 = vmatprep.subr.mxu0 0.0
    %3533 = vmatpush2.msra.mxu0 0.0
    %3534 = vmatprep.subr.mxu0 0.0
    %3535 = vmatpush2.msra.mxu0 0.0
    %3536 = vmatprep.subr.mxu0 0.0
    %3537 = vmatpush2.msra.mxu0 0.0
    %3538 = vmatprep.subr.mxu0 0.0
    %3539 = vmatpush2.msra.mxu0 0.0
    %3540 = vmatprep.subr.mxu0 0.0
    %3541 = vmatpush2.msra.mxu0 0.0
    %3542 = vmatprep.subr.mxu0 0.0
    %3543 = vmatpush2.msra.mxu0 0.0
    %3544 = vmatprep.subr.mxu0 0.0
    %3545 = vmatpush2.msra.mxu0 0.0
    %3546 = vmatprep.subr.mxu0 0.0
    %3547 = vmatpush2.msra.mxu0 0.0
    %3548 = vmatprep.mubr.f32.mxu0 0.0
    %3549 = vmatmul.mubr.f32.gmra.mxu0 %v3479
    %v3550 = vpop.f32.mrf.mxu0
    %v3551 = vadd.f32 0.0, %v3550
    %v3552 = vpop.f32.mrf.mxu0
    %3553 = vmatprep.mubr.f32.mxu0 0.0
    %3554 = vmatmul.mubr.f32.gmra.mxu0 %v3482
    %v3555 = vpop.f32.mrf.mxu0
    %v3556 = vadd.f32 0.0, %v3555
    %v3557 = vpop.f32.mrf.mxu0
    %3558 = vdwg.mxu0
    %v3559 = vpack.c.bf16 %v3556, %v3551
    %v3560 = vld [vmem:[#allocation19] sm:$0xf]
    %v3561 = vld [vmem:[#allocation19 + $0x4] sm:$0xf]
    %v3562 = vld [vmem:[#allocation19 + $0x8] sm:$0xf]
    %v3563 = vld [vmem:[#allocation19 + $0xc] sm:$0xf]
    %v3564 = vld [vmem:[#allocation19 + $0x10] sm:$0xf]
    %v3565 = vld [vmem:[#allocation19 + $0x14] sm:$0xf]
    %v3566 = vld [vmem:[#allocation19 + $0x18] sm:$0xf]
    %v3567 = vld [vmem:[#allocation19 + $0x1c] sm:$0xf]
    %v3568 = vld [vmem:[#allocation19 + $0x20] sm:$0xf]
    %v3569 = vld [vmem:[#allocation19 + $0x24] sm:$0xf]
    %v3570 = vld [vmem:[#allocation19 + $0x28] sm:$0xf]
    %v3571 = vld [vmem:[#allocation19 + $0x2c] sm:$0xf]
    %v3572 = vld [vmem:[#allocation19 + $0x30] sm:$0xf]
    %v3573 = vld [vmem:[#allocation19 + $0x34] sm:$0xf]
    %v3574 = vld [vmem:[#allocation19 + $0x38] sm:$0xf]
    %v3575 = vld [vmem:[#allocation19 + $0x3c] sm:$0xf]
    %s3576 = scalar_lea.vmem [#allocation10], 16
    %v3577 = vld [vmem:[%s3576] sm:$0xff]
    %v3578 = vld [vmem:[%s3576 + $0x8] sm:$0xff]
    %v3580 = vsel %vm223, %v3577, 0
    %v3583 = vsel %vm223, %v3578, 0
    %3585 = vmatprep.subr.mxu0 0.0
    %3586 = vmatpush1.msra.mxu0 0.0
    %3587 = vmatprep.subr.mxu0 0.0
    %3588 = vmatpush1.msra.mxu0 0.0
    %3589 = vmatprep.subr.mxu0 0.0
    %3590 = vmatpush1.msra.mxu0 0.0
    %3591 = vmatprep.subr.mxu0 0.0
    %3592 = vmatpush1.msra.mxu0 0.0
    %3593 = vmatprep.subr.mxu0 0.0
    %3594 = vmatpush1.msra.mxu0 0.0
    %3595 = vmatprep.subr.mxu0 0.0
    %3596 = vmatpush1.msra.mxu0 0.0
    %3597 = vmatprep.subr.mxu0 0.0
    %3598 = vmatpush1.msra.mxu0 0.0
    %3599 = vmatprep.subr.mxu0 0.0
    %3600 = vmatpush1.msra.mxu0 0.0
    %3601 = vmatprep.subr.mxu0 0.0
    %3602 = vmatpush1.msra.mxu0 0.0
    %3603 = vmatprep.subr.mxu0 0.0
    %3604 = vmatpush1.msra.mxu0 0.0
    %3605 = vmatprep.subr.mxu0 0.0
    %3606 = vmatpush1.msra.mxu0 0.0
    %3607 = vmatprep.subr.mxu0 0.0
    %3608 = vmatpush1.msra.mxu0 0.0
    %3609 = vmatprep.subr.mxu0 0.0
    %3610 = vmatpush1.msra.mxu0 %v3473
    %3611 = vmatprep.subr.mxu0 0.0
    %3612 = vmatpush1.msra.mxu0 %v3470
    %3613 = vmatprep.subr.mxu0 0.0
    %3614 = vmatpush1.msra.mxu0 %v3465
    %3615 = vmatprep.subr.mxu0 0.0
    %3616 = vmatpush1.msra.mxu0 %v3462
    %3617 = vmatprep.subr.mxu0 0.0
    %3618 = vmatpush2.msra.mxu0 0.0
    %3619 = vmatprep.subr.mxu0 0.0
    %3620 = vmatpush2.msra.mxu0 0.0
    %3621 = vmatprep.subr.mxu0 0.0
    %3622 = vmatpush2.msra.mxu0 0.0
    %3623 = vmatprep.subr.mxu0 0.0
    %3624 = vmatpush2.msra.mxu0 0.0
    %3625 = vmatprep.subr.mxu0 0.0
    %3626 = vmatpush2.msra.mxu0 0.0
    %3627 = vmatprep.subr.mxu0 0.0
    %3628 = vmatpush2.msra.mxu0 0.0
    %3629 = vmatprep.subr.mxu0 0.0
    %3630 = vmatpush2.msra.mxu0 0.0
    %3631 = vmatprep.subr.mxu0 0.0
    %3632 = vmatpush2.msra.mxu0 0.0
    %3633 = vmatprep.subr.mxu0 0.0
    %3634 = vmatpush2.msra.mxu0 0.0
    %3635 = vmatprep.subr.mxu0 0.0
    %3636 = vmatpush2.msra.mxu0 0.0
    %3637 = vmatprep.subr.mxu0 0.0
    %3638 = vmatpush2.msra.mxu0 0.0
    %3639 = vmatprep.subr.mxu0 0.0
    %3640 = vmatpush2.msra.mxu0 0.0
    %3641 = vmatprep.subr.mxu0 0.0
    %3642 = vmatpush2.msra.mxu0 0.0
    %3643 = vmatprep.subr.mxu0 0.0
    %3644 = vmatpush2.msra.mxu0 0.0
    %3645 = vmatprep.subr.mxu0 0.0
    %3646 = vmatpush2.msra.mxu0 0.0
    %3647 = vmatprep.subr.mxu0 0.0
    %3648 = vmatpush2.msra.mxu0 0.0
    %3649 = vmatprep.mubr.f32.mxu0 0.0
    %3650 = vmatmul.mubr.f32.gmra.mxu0 %v3580
    %v3651 = vpop.f32.mrf.mxu0
    %v3652 = vadd.f32 0.0, %v3651
    %v3653 = vpop.f32.mrf.mxu0
    %3654 = vmatprep.mubr.f32.mxu0 0.0
    %3655 = vmatmul.mubr.f32.gmra.mxu0 %v3583
    %v3656 = vpop.f32.mrf.mxu0
    %v3657 = vadd.f32 0.0, %v3656
    %v3658 = vpop.f32.mrf.mxu0
    %3659 = vdwg.mxu0
    %v3660 = vpack.c.bf16 %v3657, %v3652
    %s3661 = scalar_lea.vmem [#allocation19], 64
    %v3662 = vld [vmem:[%s3661] sm:$0xf]
    %v3663 = vld [vmem:[%s3661 + $0x4] sm:$0xf]
    %v3664 = vld [vmem:[%s3661 + $0x8] sm:$0xf]
    %v3665 = vld [vmem:[%s3661 + $0xc] sm:$0xf]
    %v3666 = vld [vmem:[%s3661 + $0x10] sm:$0xf]
    %v3667 = vld [vmem:[%s3661 + $0x14] sm:$0xf]
    %v3668 = vld [vmem:[%s3661 + $0x18] sm:$0xf]
    %v3669 = vld [vmem:[%s3661 + $0x1c] sm:$0xf]
    %v3670 = vld [vmem:[%s3661 + $0x20] sm:$0xf]
    %v3671 = vld [vmem:[%s3661 + $0x24] sm:$0xf]
    %v3672 = vld [vmem:[%s3661 + $0x28] sm:$0xf]
    %v3673 = vld [vmem:[%s3661 + $0x2c] sm:$0xf]
    %v3674 = vld [vmem:[%s3661 + $0x30] sm:$0xf]
    %v3675 = vld [vmem:[%s3661 + $0x34] sm:$0xf]
    %v3676 = vld [vmem:[%s3661 + $0x38] sm:$0xf]
    %v3677 = vld [vmem:[%s3661 + $0x3c] sm:$0xf]
    %v3694 = vunpack.c.l.b16 %v3662
    %v3695 = vunpack.c.l.b16 %v3663
    %v3696 = vunpack.c.l.b16 %v3664
    %v3697 = vunpack.c.l.b16 %v3665
    %v3698 = vunpack.c.l.b16 %v3666
    %v3699 = vunpack.c.l.b16 %v3667
    %v3700 = vunpack.c.l.b16 %v3668
    %v3701 = vunpack.c.l.b16 %v3669
    %v3702 = vunpack.c.l.b16 %v3670
    %v3703 = vunpack.c.l.b16 %v3671
    %v3704 = vunpack.c.l.b16 %v3672
    %v3705 = vunpack.c.l.b16 %v3673
    %v3706 = vunpack.c.l.b16 %v3674
    %v3707 = vunpack.c.l.b16 %v3675
    %v3708 = vunpack.c.l.b16 %v3676
    %v3709 = vunpack.c.l.b16 %v3677
    %v3710 = vpack.c.b16 %v3695, %v3694
    %v3711 = vpack.c.b16 %v3697, %v3696
    %v3712 = vpack.c.b16 %v3699, %v3698
    %v3713 = vpack.c.b16 %v3701, %v3700
    %v3714 = vpack.c.b16 %v3703, %v3702
    %v3715 = vpack.c.b16 %v3705, %v3704
    %v3716 = vpack.c.b16 %v3707, %v3706
    %v3717 = vpack.c.b16 %v3709, %v3708
    %3726 = vmatprep.subr.bf16.mxu0 0
    %3727 = vmatpush1.bf16.msra.mxu0 %v3717
    %3728 = vmatprep.subr.bf16.mxu0 0
    %3729 = vmatpush1.bf16.msra.mxu0 %v3716
    %3730 = vmatprep.subr.bf16.mxu0 0
    %3731 = vmatpush1.bf16.msra.mxu0 %v3715
    %3732 = vmatprep.subr.bf16.mxu0 0
    %3733 = vmatpush1.bf16.msra.mxu0 %v3714
    %3734 = vmatprep.subr.bf16.mxu0 0
    %3735 = vmatpush1.bf16.msra.mxu0 %v3713
    %3736 = vmatprep.subr.bf16.mxu0 0
    %3737 = vmatpush1.bf16.msra.mxu0 %v3712
    %3738 = vmatprep.subr.bf16.mxu0 0
    %3739 = vmatpush1.bf16.msra.mxu0 %v3711
    %3740 = vmatprep.subr.bf16.mxu0 0
    %3741 = vmatpush1.bf16.msra.mxu0 %v3710
    %3742 = vmatprep.subr.bf16.mxu0 0
    %3743 = vmatpush2.bf16.msra.mxu0 0
    %3744 = vmatprep.subr.bf16.mxu0 0
    %3745 = vmatpush2.bf16.msra.mxu0 0
    %3746 = vmatprep.subr.bf16.mxu0 0
    %3747 = vmatpush2.bf16.msra.mxu0 0
    %3748 = vmatprep.subr.bf16.mxu0 0
    %3749 = vmatpush2.bf16.msra.mxu0 0
    %3750 = vmatprep.subr.bf16.mxu0 0
    %3751 = vmatpush2.bf16.msra.mxu0 0
    %3752 = vmatprep.subr.bf16.mxu0 0
    %3753 = vmatpush2.bf16.msra.mxu0 0
    %3754 = vmatprep.subr.bf16.mxu0 0
    %3755 = vmatpush2.bf16.msra.mxu0 0
    %3756 = vmatprep.subr.bf16.mxu0 0
    %3757 = vmatpush2.bf16.msra.mxu0 0
    %3758 = vmatprep.mubr.bf16.mxu0 0
    %3759 = vmatmul.mubr.bf16.gmra.mxu0 %v3660
    %v3760 = vpop.f32.mrf.mxu0
    %v3761 = vadd.f32 0.0, %v3760
    %v3762 = vpop.f32.mrf.mxu0
    %v3763 = vpop.f32.mrf.mxu0
    %v3764 = vadd.f32 0.0, %v3763
    %v3765 = vpop.f32.mrf.mxu0
    %3766 = vdwg.mxu0
    %v3783 = vunpack.c.l.b16 %v3560
    %v3784 = vunpack.c.l.b16 %v3561
    %v3785 = vunpack.c.l.b16 %v3562
    %v3786 = vunpack.c.l.b16 %v3563
    %v3787 = vunpack.c.l.b16 %v3564
    %v3788 = vunpack.c.l.b16 %v3565
    %v3789 = vunpack.c.l.b16 %v3566
    %v3790 = vunpack.c.l.b16 %v3567
    %v3791 = vunpack.c.l.b16 %v3568
    %v3792 = vunpack.c.l.b16 %v3569
    %v3793 = vunpack.c.l.b16 %v3570
    %v3794 = vunpack.c.l.b16 %v3571
    %v3795 = vunpack.c.l.b16 %v3572
    %v3796 = vunpack.c.l.b16 %v3573
    %v3797 = vunpack.c.l.b16 %v3574
    %v3798 = vunpack.c.l.b16 %v3575
    %v3799 = vpack.c.b16 %v3784, %v3783
    %v3800 = vpack.c.b16 %v3786, %v3785
    %v3801 = vpack.c.b16 %v3788, %v3787
    %v3802 = vpack.c.b16 %v3790, %v3789
    %v3803 = vpack.c.b16 %v3792, %v3791
    %v3804 = vpack.c.b16 %v3794, %v3793
    %v3805 = vpack.c.b16 %v3796, %v3795
    %v3806 = vpack.c.b16 %v3798, %v3797
    %3815 = vmatprep.subr.bf16.mxu0 0
    %3816 = vmatpush1.bf16.msra.mxu0 %v3806
    %3817 = vmatprep.subr.bf16.mxu0 0
    %3818 = vmatpush1.bf16.msra.mxu0 %v3805
    %3819 = vmatprep.subr.bf16.mxu0 0
    %3820 = vmatpush1.bf16.msra.mxu0 %v3804
    %3821 = vmatprep.subr.bf16.mxu0 0
    %3822 = vmatpush1.bf16.msra.mxu0 %v3803
    %3823 = vmatprep.subr.bf16.mxu0 0
    %3824 = vmatpush1.bf16.msra.mxu0 %v3802
    %3825 = vmatprep.subr.bf16.mxu0 0
    %3826 = vmatpush1.bf16.msra.mxu0 %v3801
    %3827 = vmatprep.subr.bf16.mxu0 0
    %3828 = vmatpush1.bf16.msra.mxu0 %v3800
    %3829 = vmatprep.subr.bf16.mxu0 0
    %3830 = vmatpush1.bf16.msra.mxu0 %v3799
    %3831 = vmatprep.subr.bf16.mxu0 0
    %3832 = vmatpush2.bf16.msra.mxu0 0
    %3833 = vmatprep.subr.bf16.mxu0 0
    %3834 = vmatpush2.bf16.msra.mxu0 0
    %3835 = vmatprep.subr.bf16.mxu0 0
    %3836 = vmatpush2.bf16.msra.mxu0 0
    %3837 = vmatprep.subr.bf16.mxu0 0
    %3838 = vmatpush2.bf16.msra.mxu0 0
    %3839 = vmatprep.subr.bf16.mxu0 0
    %3840 = vmatpush2.bf16.msra.mxu0 0
    %3841 = vmatprep.subr.bf16.mxu0 0
    %3842 = vmatpush2.bf16.msra.mxu0 0
    %3843 = vmatprep.subr.bf16.mxu0 0
    %3844 = vmatpush2.bf16.msra.mxu0 0
    %3845 = vmatprep.subr.bf16.mxu0 0
    %3846 = vmatpush2.bf16.msra.mxu0 0
    %3847 = vmatprep.mubr.bf16.mxu0 0
    %3848 = vmatmul.mubr.bf16.gmra.mxu0 %v3559
    %v3849 = vpop.f32.mrf.mxu0
    %v3850 = vadd.f32 %v3761, %v3849
    %v3851 = vpop.f32.mrf.mxu0
    %v3852 = vpop.f32.mrf.mxu0
    %v3853 = vadd.f32 %v3764, %v3852
    %v3854 = vpop.f32.mrf.mxu0
    %3855 = vdwg.mxu0
    %3856 = vst [vmem:[#allocation20] sm:$0xff] %v3850
    %3857 = vst [vmem:[#allocation20 + $0x8] sm:$0xff] %v3853
    // Predicated region
    $region106: #{transformer_downsample_block_1d.1} parent=1 // pred_check
      _
    $region107: #{transformer_downsample_block_1d.1} parent=1 // pred_check_branch
      %3859 = sbr.rel (0) target = $region109
    $region108: #{transformer_downsample_block_1d.1} parent=1 // pred_region
      %s3861 = ssub.s32 256, 256
      %3862 = vsyncadd [#allocation4], %s3861
      %s3863 = sshll.u32 [#allocation20], 4
      %s3864 = int_to_ptr.vmem [resolvable:$true] %s3863
      %3869 = dma.vmem_to_hbm [thread:$0]  %s3864, 256, %s15, [#allocation4], 128, 128, 8
    $region109: #{transformer_downsample_block_1d.1} parent=1 // pred_fallthru
      _
    // Predicated region
    $region110: #{transformer_downsample_block_1d.1} parent=1 // pred_check
      _
    $region111: #{transformer_downsample_block_1d.1} parent=1 // pred_check_branch
      %3871 = sbr.rel (0) target = $region113
    $region112: #{transformer_downsample_block_1d.1} parent=1 // pred_region
      %3872 = dma.done [#allocation4], 256
    $region113: #{transformer_downsample_block_1d.1} parent=1 // pred_fallthru
      _
    %3873 = vsyncpa [#allocation3], 1
    %3874 = vsyncpa [#allocation6], 1
    %3875 = vsyncpa [#allocation9], 1
    %3876 = vsyncpa [#allocation12], 1
    %3877 = vsyncpa [#allocation15], 1
    %3878 = vsyncpa [#allocation18], 1
    %3879 = vsyncpa [#allocation4], 1

</llo_original>
